<compile_context>
chip_gen: v7x
topology: tpu7x:2x2x1
jax: 0.10.0
libtpu: 0.0.40
codegen_flags: <defaults>
</compile_context>

<pallas_src>
import functools

import jax
import jax.numpy as jnp
from jax.experimental import pallas as pl
from jax.experimental.pallas import tpu as pltpu

C1 = 32          # conv1 output channels
C2 = 64          # conv2 output channels
FC1_OUT = 100
FC_PAD = 128     # lane-dense padded width for both fc layers


# ----------------------------- fused kernel ---------------------------------
def fused_forward_kernel(xcol_ref, w1_ref, b1_ref, w2_ref, b2_ref,
                         wfc1_ref, bfc1_ref, wfc2_ref, bfc2_ref,
                         out_ref, pad_scr, col_scr, flat_scr, *, H, W):
    """One batch element per grid step; every intermediate stays in VMEM."""
    H1, W1 = H // 2, W // 2          # after pool1
    H2, W2 = H1 // 2, W1 // 2        # after pool2

    # ---- conv1: single im2col GEMM (K = 9*Cin) + bias + ReLU --------------
    h1 = jnp.dot(xcol_ref[0], w1_ref[...], preferred_element_type=jnp.float32)
    h1 = jnp.maximum(h1 + b1_ref[...], 0.0)                  # (H*W, C1)

    # ---- fused 2x2 max-pool #1 (VPU maxes, no extra launch) ---------------
    h1 = h1.reshape(H1, 2, W1, 2, C1)
    p1 = jnp.maximum(jnp.maximum(h1[:, 0, :, 0, :], h1[:, 0, :, 1, :]),
                     jnp.maximum(h1[:, 1, :, 0, :], h1[:, 1, :, 1, :]))

    # ---- 'same' zero padding for conv2, kept in a VMEM scratch ------------
    pad_scr[...] = jnp.zeros_like(pad_scr)
    pad_scr[1:H1 + 1, 1:W1 + 1, :] = p1                      # (H1+2, W1+2, C1)

    # ---- conv2: in-kernel im2col -> single GEMM with K = 9*C1 = 288 -------
    for kh in range(3):
        for kw in range(3):
            idx = kh * 3 + kw
            col_scr[:, idx * C1:(idx + 1) * C1] = (
                pad_scr[kh:kh + H1, kw:kw + W1, :].reshape(H1 * W1, C1))
    h2 = jnp.dot(col_scr[...], w2_ref[...], preferred_element_type=jnp.float32)
    h2 = jnp.maximum(h2 + b2_ref[...], 0.0)                  # (H1*W1, C2)

    # ---- fused 2x2 max-pool #2 --------------------------------------------
    h2 = h2.reshape(H2, 2, W2, 2, C2)
    p2 = jnp.maximum(jnp.maximum(h2[:, 0, :, 0, :], h2[:, 0, :, 1, :]),
                     jnp.maximum(h2[:, 1, :, 0, :], h2[:, 1, :, 1, :]))
    p2 = p2.reshape(H2 * W2, C2)                             # rows = (h, w)

    # ---- flatten (h, w, c) into lanes of a (1, H2*W2*C2) scratch ----------
    # fc1 weights were pre-permuted to this NHWC order at prep time, so the
    # PyTorch NCHW-flatten transpose is gone.  Static lane-slice stores avoid
    # any minor-dim-changing reshape in the kernel.
    for r in range(H2 * W2):
        flat_scr[0:1, r * C2:(r + 1) * C2] = p2[r:r + 1, :]

    # ---- fc1 (+ReLU) and fc2, both padded to 128 lanes --------------------
    h3 = jnp.dot(flat_scr[...], wfc1_ref[...],
                 preferred_element_type=jnp.float32)
    h3 = jnp.maximum(h3 + bfc1_ref[...], 0.0)                # (1, 128)
    logits = jnp.dot(h3, wfc2_ref[...],
                     preferred_element_type=jnp.float32) + bfc2_ref[...]
    out_ref[0] = logits                                      # (1, 128)


# ------------------------------ wrapper --------------------------------------
def naive_cnn_forward(prep, x, *, in_dims, in_channels, out_dims):
    B = x.shape[0]
    H, W = in_dims
    assert H % 4 == 0 and W % 4 == 0, "two 2x2 max-pools need dims % 4 == 0"

    # Mirror PyTorch's x.view(B, C, H, W); then NHWC + im2col so the kernel
    # sees one lane-friendly (H*W, 9*Cin) GEMM operand per batch element.
    x = x.reshape(B, in_channels, H, W)
    x = jnp.transpose(x, (0, 2, 3, 1))
    xp = jnp.pad(x, ((0, 0), (1, 1), (1, 1), (0, 0)))
    cols = [xp[:, kh:kh + H, kw:kw + W, :]
            for kh in range(3) for kw in range(3)]
    x_col = jnp.concatenate(cols, axis=-1).reshape(B, H * W, 9 * in_channels)

    def _full(arr):   # whole-array block, resident across all grid steps
        return pl.BlockSpec(arr.shape, lambda b: (0, 0))

    kernel = functools.partial(fused_forward_kernel, H=H, W=W)
    out = pl.pallas_call(
        kernel,
        out_shape=jax.ShapeDtypeStruct((B, 1, FC_PAD), jnp.float32),
        grid_spec=pltpu.PrefetchScalarGridSpec(
            num_scalar_prefetch=0,
            grid=(B,),
            in_specs=[
                pl.BlockSpec((1, H * W, 9 * in_channels), lambda b: (b, 0, 0)),
                _full(prep["w1"]), _full(prep["b1"]),
                _full(prep["w2"]), _full(prep["b2"]),
                _full(prep["wfc1"]), _full(prep["bfc1"]),
                _full(prep["wfc2"]), _full(prep["bfc2"]),
            ],
            out_specs=pl.BlockSpec((1, 1, FC_PAD), lambda b: (b, 0, 0)),
            scratch_shapes=[
                pltpu.VMEM((H // 2 + 2, W // 2 + 2, C1), jnp.float32),  # pad_scr
                pltpu.VMEM((H * W // 4, 9 * C1), jnp.float32),          # col_scr
                pltpu.VMEM((1, C2 * H * W // 16), jnp.float32),         # flat_scr
            ],
        ),
        compiler_params=pltpu.CompilerParams(
            dimension_semantics=("parallel",)),   # both TensorCores on v7x
    )(x_col, prep["w1"], prep["b1"], prep["w2"], prep["b2"],
      prep["wfc1"], prep["bfc1"], prep["wfc2"], prep["bfc2"])
    return out[:, 0, :out_dims]


# --------------------------- params & prep -----------------------------------
def init_params(key, in_dims, in_channels, out_dims):
    H, W = in_dims
    ks = jax.random.split(key, 8)

    def u(k, shape, fan_in):
        bound = 1.0 / jnp.sqrt(jnp.float32(fan_in))
        return jax.random.uniform(k, shape, jnp.float32, -bound, bound)

    fc1_in = C2 * H * W // 16
    return {
        "conv1_w": u(ks[0], (3, 3, in_channels, C1), 9 * in_channels),  # HWIO
        "conv1_b": u(ks[1], (C1,), 9 * in_channels),
        "conv2_w": u(ks[2], (3, 3, C1, C2), 9 * C1),
        "conv2_b": u(ks[3], (C2,), 9 * C1),
        # fc1_w rows follow the PyTorch NCHW flatten order (c, h, w).
        "fc1_w": u(ks[4], (fc1_in, FC1_OUT), fc1_in),
        "fc1_b": u(ks[5], (FC1_OUT,), fc1_in),
        "fc2_w": u(ks[6], (FC1_OUT, out_dims), FC1_OUT),
        "fc2_b": u(ks[7], (out_dims,), FC1_OUT),
    }


def prepare_params(params, in_dims, out_dims):
    """One-time reshape/permute/pad into the kernel-ready layout."""
    H, W = in_dims
    H2, W2 = H // 4, W // 4
    cin = params["conv1_w"].shape[2]

    w1 = params["conv1_w"].reshape(9 * cin, C1)     # rows ordered (kh, kw, ci)
    w2 = params["conv2_w"].reshape(9 * C1, C2)
    b1 = params["conv1_b"].reshape(1, C1)
    b2 = params["conv2_b"].reshape(1, C2)

    # fc1 rows are in PyTorch NCHW-flatten order (c, h, w); permute to the
    # kernel's NHWC-flatten order (h, w, c), then zero-pad 100 -> 128 cols.
    wfc1 = params["fc1_w"].reshape(C2, H2, W2, FC1_OUT).transpose(1, 2, 0, 3)
    wfc1 = wfc1.reshape(H2 * W2 * C2, FC1_OUT)
    wfc1 = jnp.pad(wfc1, ((0, 0), (0, FC_PAD - FC1_OUT)))
    bfc1 = jnp.pad(params["fc1_b"], (0, FC_PAD - FC1_OUT)).reshape(1, FC_PAD)

    # fc2: zero-pad input rows 100 -> 128 and output cols out_dims -> 128.
    wfc2 = jnp.pad(params["fc2_w"],
                   ((0, FC_PAD - FC1_OUT), (0, FC_PAD - out_dims)))
    bfc2 = jnp.pad(params["fc2_b"], (0, FC_PAD - out_dims)).reshape(1, FC_PAD)

    return dict(w1=w1, b1=b1, w2=w2, b2=b2,
                wfc1=wfc1, bfc1=bfc1, wfc2=wfc2, bfc2=bfc2)


# ----------------------- pure-JAX reference (spec) ---------------------------
def naive_cnn_reference(params, x, *, in_dims, in_channels):
    """PyTorch-equivalent reference (NCHW flatten, unpermuted fc weights)."""
    B = x.shape[0]
    H, W = in_dims
    x = x.reshape(B, in_channels, H, W).transpose(0, 2, 3, 1)   # NHWC
    dn = ("NHWC", "HWIO", "NHWC")
    hi = jax.lax.Precision.HIGHEST
    y = jax.lax.conv_general_dilated(x, params["conv1_w"], (1, 1), "SAME",
                                     dimension_numbers=dn, precision=hi)
    y = jax.nn.relu(y + params["conv1_b"])
    y = jax.lax.reduce_window(y, -jnp.inf, jax.lax.max,
                              (1, 2, 2, 1), (1, 2, 2, 1), "VALID")
    y = jax.lax.conv_general_dilated(y, params["conv2_w"], (1, 1), "SAME",
                                     dimension_numbers=dn, precision=hi)
    y = jax.nn.relu(y + params["conv2_b"])
    y = jax.lax.reduce_window(y, -jnp.inf, jax.lax.max,
                              (1, 2, 2, 1), (1, 2, 2, 1), "VALID")
    y = y.transpose(0, 3, 1, 2).reshape(B, -1)                  # NCHW flatten
    y = jax.nn.relu(y @ params["fc1_w"] + params["fc1_b"])
    return y @ params["fc2_w"] + params["fc2_b"]


# --------------------------------- main ---------------------------------------
if __name__ == "__main__":
    in_dims = (16, 16)
    in_channels = 4
    out_dims = 10
    batch = 2

    key = jax.random.PRNGKey(0)
    pkey, xkey = jax.random.split(key)
    params = init_params(pkey, in_dims, in_channels, out_dims)
    prep = prepare_params(params, in_dims, out_dims)   # one-time, off hot path
    x = jax.random.normal(
        xkey, (batch, in_channels, in_dims[0], in_dims[1]), dtype=jnp.float32)

    fwd = jax.jit(functools.partial(
        naive_cnn_forward, in_dims=in_dims, in_channels=in_channels,
        out_dims=out_dims))
    out = fwd(prep, x)
    jax.block_until_ready(out)
    assert out.shape == (batch, out_dims), out.shape

    # Correctness check vs. the PyTorch-equivalent reference (also guards the
    # fc1 NCHW -> NHWC row permutation, per the review's correctness concern).
    ref = naive_cnn_reference(params, x, in_dims=in_dims,
                              in_channels=in_channels)
    err = float(jnp.max(jnp.abs(out - ref)))
    assert jnp.allclose(out, ref, rtol=2e-2, atol=2e-2), f"max abs err {err}"
    print("KERNEL_OK")
</pallas_src>

<mosaic_0001>
module attributes {stable_mosaic.version = 11 : i64} {
  func.func @fused_forward_kernel(%arg0: i32, %arg1: memref<1x256x36xf32, #tpu.memory_space<vmem>>, %arg2: memref<36x32xf32, #tpu.memory_space<vmem>>, %arg3: memref<1x32xf32, #tpu.memory_space<vmem>>, %arg4: memref<288x64xf32, #tpu.memory_space<vmem>>, %arg5: memref<1x64xf32, #tpu.memory_space<vmem>>, %arg6: memref<1024x128xf32, #tpu.memory_space<vmem>>, %arg7: memref<1x128xf32, #tpu.memory_space<vmem>>, %arg8: memref<128x128xf32, #tpu.memory_space<vmem>>, %arg9: memref<1x128xf32, #tpu.memory_space<vmem>>, %arg10: memref<1x1x128xf32, #tpu.memory_space<vmem>>, %arg11: memref<10x10x32xf32, #tpu.memory_space<vmem>>, %arg12: memref<64x288xf32, #tpu.memory_space<vmem>>, %arg13: memref<1x1024xf32, #tpu.memory_space<vmem>>) attributes {dimension_semantics = [#tpu.dimension_semantics<parallel>], iteration_bounds = array<i64: 2>, scalar_prefetch = 0 : i64, scratch_operands = 3 : i64, tpu.core_type = #tpu.core_type<tc>, window_params = [{transform_indices = @transform_0, window_bounds = array<i64: 1, 256, 36>}, {pipeline_mode = #tpu.pipeline_mode<synchronous>, transform_indices = @transform_1, window_bounds = array<i64: 36, 32>}, {pipeline_mode = #tpu.pipeline_mode<synchronous>, transform_indices = @transform_2, window_bounds = array<i64: 1, 32>}, {pipeline_mode = #tpu.pipeline_mode<synchronous>, transform_indices = @transform_3, window_bounds = array<i64: 288, 64>}, {pipeline_mode = #tpu.pipeline_mode<synchronous>, transform_indices = @transform_4, window_bounds = array<i64: 1, 64>}, {pipeline_mode = #tpu.pipeline_mode<synchronous>, transform_indices = @transform_5, window_bounds = array<i64: 1024, 128>}, {pipeline_mode = #tpu.pipeline_mode<synchronous>, transform_indices = @transform_6, window_bounds = array<i64: 1, 128>}, {pipeline_mode = #tpu.pipeline_mode<synchronous>, transform_indices = @transform_7, window_bounds = array<i64: 128, 128>}, {pipeline_mode = #tpu.pipeline_mode<synchronous>, transform_indices = @transform_8, window_bounds = array<i64: 1, 128>}, {transform_indices = @transform_9, window_bounds = array<i64: 1, 1, 128>}]} {
    %c0 = arith.constant 0 : index
    %c0_0 = arith.constant 0 : index
    %c0_1 = arith.constant 0 : index
    %0 = vector.load %arg1[%c0, %c0_0, %c0_1] : memref<1x256x36xf32, #tpu.memory_space<vmem>>, vector<1x256x36xf32>
    %1 = vector.shape_cast %0 : vector<1x256x36xf32> to vector<256x36xf32>
    %c0_2 = arith.constant 0 : index
    %c0_3 = arith.constant 0 : index
    %2 = vector.load %arg2[%c0_2, %c0_3] : memref<36x32xf32, #tpu.memory_space<vmem>>, vector<36x32xf32>
    %cst = arith.constant dense<0.000000e+00> : vector<256x32xf32>
    %3 = tpu.matmul %1, %2, %cst {dimension_numbers = #tpu.dot_dimension_numbers<[1], [0], [0], [1], [0, 0, 1, 1], [], []>} : vector<256x36xf32>, vector<36x32xf32>, vector<256x32xf32> -> vector<256x32xf32>
    %c0_4 = arith.constant 0 : index
    %c0_5 = arith.constant 0 : index
    %4 = vector.load %arg3[%c0_4, %c0_5] : memref<1x32xf32, #tpu.memory_space<vmem>>, vector<1x32xf32>
    %5 = vector.broadcast %4 : vector<1x32xf32> to vector<256x32xf32>
    %6 = arith.addf %3, %5 : vector<256x32xf32>
    %cst_6 = arith.constant 0.000000e+00 : f32
    %7 = vector.broadcast %cst_6 : f32 to vector<256x32xf32>
    %8 = arith.maximumf %6, %7 : vector<256x32xf32>
    %9 = vector.shape_cast %8 : vector<256x32xf32> to vector<8x2x8x2x32xf32>
    %10 = vector.extract_strided_slice %9 {offsets = [0, 0, 0, 0, 0], sizes = [8, 1, 8, 1, 32], strides = [1, 1, 1, 1, 1]} : vector<8x2x8x2x32xf32> to vector<8x1x8x1x32xf32>
    %11 = vector.shape_cast %10 : vector<8x1x8x1x32xf32> to vector<8x8x32xf32>
    %12 = vector.extract_strided_slice %9 {offsets = [0, 0, 0, 1, 0], sizes = [8, 1, 8, 1, 32], strides = [1, 1, 1, 1, 1]} : vector<8x2x8x2x32xf32> to vector<8x1x8x1x32xf32>
    %13 = vector.shape_cast %12 : vector<8x1x8x1x32xf32> to vector<8x8x32xf32>
    %14 = arith.maximumf %11, %13 : vector<8x8x32xf32>
    %15 = vector.extract_strided_slice %9 {offsets = [0, 1, 0, 0, 0], sizes = [8, 1, 8, 1, 32], strides = [1, 1, 1, 1, 1]} : vector<8x2x8x2x32xf32> to vector<8x1x8x1x32xf32>
    %16 = vector.shape_cast %15 : vector<8x1x8x1x32xf32> to vector<8x8x32xf32>
    %17 = vector.extract_strided_slice %9 {offsets = [0, 1, 0, 1, 0], sizes = [8, 1, 8, 1, 32], strides = [1, 1, 1, 1, 1]} : vector<8x2x8x2x32xf32> to vector<8x1x8x1x32xf32>
    %18 = vector.shape_cast %17 : vector<8x1x8x1x32xf32> to vector<8x8x32xf32>
    %19 = arith.maximumf %16, %18 : vector<8x8x32xf32>
    %20 = arith.maximumf %14, %19 : vector<8x8x32xf32>
    %cst_7 = arith.constant 0.000000e+00 : f32
    %21 = vector.broadcast %cst_7 : f32 to vector<10x10x32xf32>
    %c0_8 = arith.constant 0 : index
    %c0_9 = arith.constant 0 : index
    %c0_10 = arith.constant 0 : index
    %22 = vector.load %arg11[%c0_8, %c0_9, %c0_10] : memref<10x10x32xf32, #tpu.memory_space<vmem>>, vector<10x10x32xf32>
    tpu.vector_store %arg11[%c0_8, %c0_9, %c0_10], %21 {strides = array<i32>} : memref<10x10x32xf32, #tpu.memory_space<vmem>>, vector<10x10x32xf32>,
    %c1 = arith.constant 1 : index
    %c1_11 = arith.constant 1 : index
    %c0_12 = arith.constant 0 : index
    %23 = vector.load %arg11[%c1, %c1_11, %c0_12] : memref<10x10x32xf32, #tpu.memory_space<vmem>>, vector<8x8x32xf32>
    tpu.vector_store %arg11[%c1, %c1_11, %c0_12], %20 {strides = array<i32>} : memref<10x10x32xf32, #tpu.memory_space<vmem>>, vector<8x8x32xf32>,
    %c0_13 = arith.constant 0 : index
    %c0_14 = arith.constant 0 : index
    %c0_15 = arith.constant 0 : index
    %24 = vector.load %arg11[%c0_13, %c0_14, %c0_15] : memref<10x10x32xf32, #tpu.memory_space<vmem>>, vector<8x8x32xf32>
    %25 = vector.shape_cast %24 : vector<8x8x32xf32> to vector<64x32xf32>
    %c0_16 = arith.constant 0 : index
    %c0_17 = arith.constant 0 : index
    %26 = vector.load %arg12[%c0_16, %c0_17] : memref<64x288xf32, #tpu.memory_space<vmem>>, vector<64x32xf32>
    tpu.vector_store %arg12[%c0_16, %c0_17], %25 {strides = array<i32>} : memref<64x288xf32, #tpu.memory_space<vmem>>, vector<64x32xf32>,
    %c0_18 = arith.constant 0 : index
    %c1_19 = arith.constant 1 : index
    %c0_20 = arith.constant 0 : index
    %27 = vector.load %arg11[%c0_18, %c1_19, %c0_20] : memref<10x10x32xf32, #tpu.memory_space<vmem>>, vector<8x8x32xf32>
    %28 = vector.shape_cast %27 : vector<8x8x32xf32> to vector<64x32xf32>
    %c0_21 = arith.constant 0 : index
    %c32 = arith.constant 32 : index
    %29 = vector.load %arg12[%c0_21, %c32] : memref<64x288xf32, #tpu.memory_space<vmem>>, vector<64x32xf32>
    tpu.vector_store %arg12[%c0_21, %c32], %28 {strides = array<i32>} : memref<64x288xf32, #tpu.memory_space<vmem>>, vector<64x32xf32>,
    %c0_22 = arith.constant 0 : index
    %c2 = arith.constant 2 : index
    %c0_23 = arith.constant 0 : index
    %30 = vector.load %arg11[%c0_22, %c2, %c0_23] : memref<10x10x32xf32, #tpu.memory_space<vmem>>, vector<8x8x32xf32>
    %31 = vector.shape_cast %30 : vector<8x8x32xf32> to vector<64x32xf32>
    %c0_24 = arith.constant 0 : index
    %c64 = arith.constant 64 : index
    %32 = vector.load %arg12[%c0_24, %c64] : memref<64x288xf32, #tpu.memory_space<vmem>>, vector<64x32xf32>
    tpu.vector_store %arg12[%c0_24, %c64], %31 {strides = array<i32>} : memref<64x288xf32, #tpu.memory_space<vmem>>, vector<64x32xf32>,
    %c1_25 = arith.constant 1 : index
    %c0_26 = arith.constant 0 : index
    %c0_27 = arith.constant 0 : index
    %33 = vector.load %arg11[%c1_25, %c0_26, %c0_27] : memref<10x10x32xf32, #tpu.memory_space<vmem>>, vector<8x8x32xf32>
    %34 = vector.shape_cast %33 : vector<8x8x32xf32> to vector<64x32xf32>
    %c0_28 = arith.constant 0 : index
    %c96 = arith.constant 96 : index
    %35 = vector.load %arg12[%c0_28, %c96] : memref<64x288xf32, #tpu.memory_space<vmem>>, vector<64x32xf32>
    tpu.vector_store %arg12[%c0_28, %c96], %34 {strides = array<i32>} : memref<64x288xf32, #tpu.memory_space<vmem>>, vector<64x32xf32>,
    %c1_29 = arith.constant 1 : index
    %c1_30 = arith.constant 1 : index
    %c0_31 = arith.constant 0 : index
    %36 = vector.load %arg11[%c1_29, %c1_30, %c0_31] : memref<10x10x32xf32, #tpu.memory_space<vmem>>, vector<8x8x32xf32>
    %37 = vector.shape_cast %36 : vector<8x8x32xf32> to vector<64x32xf32>
    %c0_32 = arith.constant 0 : index
    %c128 = arith.constant 128 : index
    %38 = vector.load %arg12[%c0_32, %c128] : memref<64x288xf32, #tpu.memory_space<vmem>>, vector<64x32xf32>
    tpu.vector_store %arg12[%c0_32, %c128], %37 {strides = array<i32>} : memref<64x288xf32, #tpu.memory_space<vmem>>, vector<64x32xf32>,
    %c1_33 = arith.constant 1 : index
    %c2_34 = arith.constant 2 : index
    %c0_35 = arith.constant 0 : index
    %39 = vector.load %arg11[%c1_33, %c2_34, %c0_35] : memref<10x10x32xf32, #tpu.memory_space<vmem>>, vector<8x8x32xf32>
    %40 = vector.shape_cast %39 : vector<8x8x32xf32> to vector<64x32xf32>
    %c0_36 = arith.constant 0 : index
    %c160 = arith.constant 160 : index
    %41 = vector.load %arg12[%c0_36, %c160] : memref<64x288xf32, #tpu.memory_space<vmem>>, vector<64x32xf32>
    tpu.vector_store %arg12[%c0_36, %c160], %40 {strides = array<i32>} : memref<64x288xf32, #tpu.memory_space<vmem>>, vector<64x32xf32>,
    %c2_37 = arith.constant 2 : index
    %c0_38 = arith.constant 0 : index
    %c0_39 = arith.constant 0 : index
    %42 = vector.load %arg11[%c2_37, %c0_38, %c0_39] : memref<10x10x32xf32, #tpu.memory_space<vmem>>, vector<8x8x32xf32>
    %43 = vector.shape_cast %42 : vector<8x8x32xf32> to vector<64x32xf32>
    %c0_40 = arith.constant 0 : index
    %c192 = arith.constant 192 : index
    %44 = vector.load %arg12[%c0_40, %c192] : memref<64x288xf32, #tpu.memory_space<vmem>>, vector<64x32xf32>
    tpu.vector_store %arg12[%c0_40, %c192], %43 {strides = array<i32>} : memref<64x288xf32, #tpu.memory_space<vmem>>, vector<64x32xf32>,
    %c2_41 = arith.constant 2 : index
    %c1_42 = arith.constant 1 : index
    %c0_43 = arith.constant 0 : index
    %45 = vector.load %arg11[%c2_41, %c1_42, %c0_43] : memref<10x10x32xf32, #tpu.memory_space<vmem>>, vector<8x8x32xf32>
    %46 = vector.shape_cast %45 : vector<8x8x32xf32> to vector<64x32xf32>
    %c0_44 = arith.constant 0 : index
    %c224 = arith.constant 224 : index
    %47 = vector.load %arg12[%c0_44, %c224] : memref<64x288xf32, #tpu.memory_space<vmem>>, vector<64x32xf32>
    tpu.vector_store %arg12[%c0_44, %c224], %46 {strides = array<i32>} : memref<64x288xf32, #tpu.memory_space<vmem>>, vector<64x32xf32>,
    %c2_45 = arith.constant 2 : index
    %c2_46 = arith.constant 2 : index
    %c0_47 = arith.constant 0 : index
    %48 = vector.load %arg11[%c2_45, %c2_46, %c0_47] : memref<10x10x32xf32, #tpu.memory_space<vmem>>, vector<8x8x32xf32>
    %49 = vector.shape_cast %48 : vector<8x8x32xf32> to vector<64x32xf32>
    %c0_48 = arith.constant 0 : index
    %c256 = arith.constant 256 : index
    %50 = vector.load %arg12[%c0_48, %c256] : memref<64x288xf32, #tpu.memory_space<vmem>>, vector<64x32xf32>
    tpu.vector_store %arg12[%c0_48, %c256], %49 {strides = array<i32>} : memref<64x288xf32, #tpu.memory_space<vmem>>, vector<64x32xf32>,
    %c0_49 = arith.constant 0 : index
    %c0_50 = arith.constant 0 : index
    %51 = vector.load %arg12[%c0_49, %c0_50] : memref<64x288xf32, #tpu.memory_space<vmem>>, vector<64x288xf32>
    %c0_51 = arith.constant 0 : index
    %c0_52 = arith.constant 0 : index
    %52 = vector.load %arg4[%c0_51, %c0_52] : memref<288x64xf32, #tpu.memory_space<vmem>>, vector<288x64xf32>
    %cst_53 = arith.constant dense<0.000000e+00> : vector<64x64xf32>
    %53 = tpu.matmul %51, %52, %cst_53 {dimension_numbers = #tpu.dot_dimension_numbers<[1], [0], [0], [1], [0, 0, 1, 1], [], []>} : vector<64x288xf32>, vector<288x64xf32>, vector<64x64xf32> -> vector<64x64xf32>
    %c0_54 = arith.constant 0 : index
    %c0_55 = arith.constant 0 : index
    %54 = vector.load %arg5[%c0_54, %c0_55] : memref<1x64xf32, #tpu.memory_space<vmem>>, vector<1x64xf32>
    %55 = vector.broadcast %54 : vector<1x64xf32> to vector<64x64xf32>
    %56 = arith.addf %53, %55 : vector<64x64xf32>
    %cst_56 = arith.constant 0.000000e+00 : f32
    %57 = vector.broadcast %cst_56 : f32 to vector<64x64xf32>
    %58 = arith.maximumf %56, %57 : vector<64x64xf32>
    %59 = vector.shape_cast %58 : vector<64x64xf32> to vector<4x2x4x2x64xf32>
    %60 = vector.extract_strided_slice %59 {offsets = [0, 0, 0, 0, 0], sizes = [4, 1, 4, 1, 64], strides = [1, 1, 1, 1, 1]} : vector<4x2x4x2x64xf32> to vector<4x1x4x1x64xf32>
    %61 = vector.shape_cast %60 : vector<4x1x4x1x64xf32> to vector<4x4x64xf32>
    %62 = vector.extract_strided_slice %59 {offsets = [0, 0, 0, 1, 0], sizes = [4, 1, 4, 1, 64], strides = [1, 1, 1, 1, 1]} : vector<4x2x4x2x64xf32> to vector<4x1x4x1x64xf32>
    %63 = vector.shape_cast %62 : vector<4x1x4x1x64xf32> to vector<4x4x64xf32>
    %64 = arith.maximumf %61, %63 : vector<4x4x64xf32>
    %65 = vector.extract_strided_slice %59 {offsets = [0, 1, 0, 0, 0], sizes = [4, 1, 4, 1, 64], strides = [1, 1, 1, 1, 1]} : vector<4x2x4x2x64xf32> to vector<4x1x4x1x64xf32>
    %66 = vector.shape_cast %65 : vector<4x1x4x1x64xf32> to vector<4x4x64xf32>
    %67 = vector.extract_strided_slice %59 {offsets = [0, 1, 0, 1, 0], sizes = [4, 1, 4, 1, 64], strides = [1, 1, 1, 1, 1]} : vector<4x2x4x2x64xf32> to vector<4x1x4x1x64xf32>
    %68 = vector.shape_cast %67 : vector<4x1x4x1x64xf32> to vector<4x4x64xf32>
    %69 = arith.maximumf %66, %68 : vector<4x4x64xf32>
    %70 = arith.maximumf %64, %69 : vector<4x4x64xf32>
    %71 = vector.shape_cast %70 : vector<4x4x64xf32> to vector<16x64xf32>
    %72 = vector.extract_strided_slice %71 {offsets = [0, 0], sizes = [1, 64], strides = [1, 1]} : vector<16x64xf32> to vector<1x64xf32>
    %c0_57 = arith.constant 0 : index
    %c0_58 = arith.constant 0 : index
    %73 = vector.load %arg13[%c0_57, %c0_58] : memref<1x1024xf32, #tpu.memory_space<vmem>>, vector<1x64xf32>
    tpu.vector_store %arg13[%c0_57, %c0_58], %72 {strides = array<i32>} : memref<1x1024xf32, #tpu.memory_space<vmem>>, vector<1x64xf32>,
    %74 = vector.extract_strided_slice %71 {offsets = [1, 0], sizes = [1, 64], strides = [1, 1]} : vector<16x64xf32> to vector<1x64xf32>
    %c0_59 = arith.constant 0 : index
    %c64_60 = arith.constant 64 : index
    %75 = vector.load %arg13[%c0_59, %c64_60] : memref<1x1024xf32, #tpu.memory_space<vmem>>, vector<1x64xf32>
    tpu.vector_store %arg13[%c0_59, %c64_60], %74 {strides = array<i32>} : memref<1x1024xf32, #tpu.memory_space<vmem>>, vector<1x64xf32>,
    %76 = vector.extract_strided_slice %71 {offsets = [2, 0], sizes = [1, 64], strides = [1, 1]} : vector<16x64xf32> to vector<1x64xf32>
    %c0_61 = arith.constant 0 : index
    %c128_62 = arith.constant 128 : index
    %77 = vector.load %arg13[%c0_61, %c128_62] : memref<1x1024xf32, #tpu.memory_space<vmem>>, vector<1x64xf32>
    tpu.vector_store %arg13[%c0_61, %c128_62], %76 {strides = array<i32>} : memref<1x1024xf32, #tpu.memory_space<vmem>>, vector<1x64xf32>,
    %78 = vector.extract_strided_slice %71 {offsets = [3, 0], sizes = [1, 64], strides = [1, 1]} : vector<16x64xf32> to vector<1x64xf32>
    %c0_63 = arith.constant 0 : index
    %c192_64 = arith.constant 192 : index
    %79 = vector.load %arg13[%c0_63, %c192_64] : memref<1x1024xf32, #tpu.memory_space<vmem>>, vector<1x64xf32>
    tpu.vector_store %arg13[%c0_63, %c192_64], %78 {strides = array<i32>} : memref<1x1024xf32, #tpu.memory_space<vmem>>, vector<1x64xf32>,
    %80 = vector.extract_strided_slice %71 {offsets = [4, 0], sizes = [1, 64], strides = [1, 1]} : vector<16x64xf32> to vector<1x64xf32>
    %c0_65 = arith.constant 0 : index
    %c256_66 = arith.constant 256 : index
    %81 = vector.load %arg13[%c0_65, %c256_66] : memref<1x1024xf32, #tpu.memory_space<vmem>>, vector<1x64xf32>
    tpu.vector_store %arg13[%c0_65, %c256_66], %80 {strides = array<i32>} : memref<1x1024xf32, #tpu.memory_space<vmem>>, vector<1x64xf32>,
    %82 = vector.extract_strided_slice %71 {offsets = [5, 0], sizes = [1, 64], strides = [1, 1]} : vector<16x64xf32> to vector<1x64xf32>
    %c0_67 = arith.constant 0 : index
    %c320 = arith.constant 320 : index
    %83 = vector.load %arg13[%c0_67, %c320] : memref<1x1024xf32, #tpu.memory_space<vmem>>, vector<1x64xf32>
    tpu.vector_store %arg13[%c0_67, %c320], %82 {strides = array<i32>} : memref<1x1024xf32, #tpu.memory_space<vmem>>, vector<1x64xf32>,
    %84 = vector.extract_strided_slice %71 {offsets = [6, 0], sizes = [1, 64], strides = [1, 1]} : vector<16x64xf32> to vector<1x64xf32>
    %c0_68 = arith.constant 0 : index
    %c384 = arith.constant 384 : index
    %85 = vector.load %arg13[%c0_68, %c384] : memref<1x1024xf32, #tpu.memory_space<vmem>>, vector<1x64xf32>
    tpu.vector_store %arg13[%c0_68, %c384], %84 {strides = array<i32>} : memref<1x1024xf32, #tpu.memory_space<vmem>>, vector<1x64xf32>,
    %86 = vector.extract_strided_slice %71 {offsets = [7, 0], sizes = [1, 64], strides = [1, 1]} : vector<16x64xf32> to vector<1x64xf32>
    %c0_69 = arith.constant 0 : index
    %c448 = arith.constant 448 : index
    %87 = vector.load %arg13[%c0_69, %c448] : memref<1x1024xf32, #tpu.memory_space<vmem>>, vector<1x64xf32>
    tpu.vector_store %arg13[%c0_69, %c448], %86 {strides = array<i32>} : memref<1x1024xf32, #tpu.memory_space<vmem>>, vector<1x64xf32>,
    %88 = vector.extract_strided_slice %71 {offsets = [8, 0], sizes = [1, 64], strides = [1, 1]} : vector<16x64xf32> to vector<1x64xf32>
    %c0_70 = arith.constant 0 : index
    %c512 = arith.constant 512 : index
    %89 = vector.load %arg13[%c0_70, %c512] : memref<1x1024xf32, #tpu.memory_space<vmem>>, vector<1x64xf32>
    tpu.vector_store %arg13[%c0_70, %c512], %88 {strides = array<i32>} : memref<1x1024xf32, #tpu.memory_space<vmem>>, vector<1x64xf32>,
    %90 = vector.extract_strided_slice %71 {offsets = [9, 0], sizes = [1, 64], strides = [1, 1]} : vector<16x64xf32> to vector<1x64xf32>
    %c0_71 = arith.constant 0 : index
    %c576 = arith.constant 576 : index
    %91 = vector.load %arg13[%c0_71, %c576] : memref<1x1024xf32, #tpu.memory_space<vmem>>, vector<1x64xf32>
    tpu.vector_store %arg13[%c0_71, %c576], %90 {strides = array<i32>} : memref<1x1024xf32, #tpu.memory_space<vmem>>, vector<1x64xf32>,
    %92 = vector.extract_strided_slice %71 {offsets = [10, 0], sizes = [1, 64], strides = [1, 1]} : vector<16x64xf32> to vector<1x64xf32>
    %c0_72 = arith.constant 0 : index
    %c640 = arith.constant 640 : index
    %93 = vector.load %arg13[%c0_72, %c640] : memref<1x1024xf32, #tpu.memory_space<vmem>>, vector<1x64xf32>
    tpu.vector_store %arg13[%c0_72, %c640], %92 {strides = array<i32>} : memref<1x1024xf32, #tpu.memory_space<vmem>>, vector<1x64xf32>,
    %94 = vector.extract_strided_slice %71 {offsets = [11, 0], sizes = [1, 64], strides = [1, 1]} : vector<16x64xf32> to vector<1x64xf32>
    %c0_73 = arith.constant 0 : index
    %c704 = arith.constant 704 : index
    %95 = vector.load %arg13[%c0_73, %c704] : memref<1x1024xf32, #tpu.memory_space<vmem>>, vector<1x64xf32>
    tpu.vector_store %arg13[%c0_73, %c704], %94 {strides = array<i32>} : memref<1x1024xf32, #tpu.memory_space<vmem>>, vector<1x64xf32>,
    %96 = vector.extract_strided_slice %71 {offsets = [12, 0], sizes = [1, 64], strides = [1, 1]} : vector<16x64xf32> to vector<1x64xf32>
    %c0_74 = arith.constant 0 : index
    %c768 = arith.constant 768 : index
    %97 = vector.load %arg13[%c0_74, %c768] : memref<1x1024xf32, #tpu.memory_space<vmem>>, vector<1x64xf32>
    tpu.vector_store %arg13[%c0_74, %c768], %96 {strides = array<i32>} : memref<1x1024xf32, #tpu.memory_space<vmem>>, vector<1x64xf32>,
    %98 = vector.extract_strided_slice %71 {offsets = [13, 0], sizes = [1, 64], strides = [1, 1]} : vector<16x64xf32> to vector<1x64xf32>
    %c0_75 = arith.constant 0 : index
    %c832 = arith.constant 832 : index
    %99 = vector.load %arg13[%c0_75, %c832] : memref<1x1024xf32, #tpu.memory_space<vmem>>, vector<1x64xf32>
    tpu.vector_store %arg13[%c0_75, %c832], %98 {strides = array<i32>} : memref<1x1024xf32, #tpu.memory_space<vmem>>, vector<1x64xf32>,
    %100 = vector.extract_strided_slice %71 {offsets = [14, 0], sizes = [1, 64], strides = [1, 1]} : vector<16x64xf32> to vector<1x64xf32>
    %c0_76 = arith.constant 0 : index
    %c896 = arith.constant 896 : index
    %101 = vector.load %arg13[%c0_76, %c896] : memref<1x1024xf32, #tpu.memory_space<vmem>>, vector<1x64xf32>
    tpu.vector_store %arg13[%c0_76, %c896], %100 {strides = array<i32>} : memref<1x1024xf32, #tpu.memory_space<vmem>>, vector<1x64xf32>,
    %102 = vector.extract_strided_slice %71 {offsets = [15, 0], sizes = [1, 64], strides = [1, 1]} : vector<16x64xf32> to vector<1x64xf32>
    %c0_77 = arith.constant 0 : index
    %c960 = arith.constant 960 : index
    %103 = vector.load %arg13[%c0_77, %c960] : memref<1x1024xf32, #tpu.memory_space<vmem>>, vector<1x64xf32>
    tpu.vector_store %arg13[%c0_77, %c960], %102 {strides = array<i32>} : memref<1x1024xf32, #tpu.memory_space<vmem>>, vector<1x64xf32>,
    %c0_78 = arith.constant 0 : index
    %c0_79 = arith.constant 0 : index
    %104 = vector.load %arg13[%c0_78, %c0_79] : memref<1x1024xf32, #tpu.memory_space<vmem>>, vector<1x1024xf32>
    %c0_80 = arith.constant 0 : index
    %c0_81 = arith.constant 0 : index
    %105 = vector.load %arg6[%c0_80, %c0_81] : memref<1024x128xf32, #tpu.memory_space<vmem>>, vector<1024x128xf32>
    %cst_82 = arith.constant dense<0.000000e+00> : vector<1x128xf32>
    %106 = tpu.matmul %104, %105, %cst_82 {dimension_numbers = #tpu.dot_dimension_numbers<[1], [0], [0], [1], [0, 0, 1, 1], [], []>} : vector<1x1024xf32>, vector<1024x128xf32>, vector<1x128xf32> -> vector<1x128xf32>
    %c0_83 = arith.constant 0 : index
    %c0_84 = arith.constant 0 : index
    %107 = vector.load %arg7[%c0_83, %c0_84] : memref<1x128xf32, #tpu.memory_space<vmem>>, vector<1x128xf32>
    %108 = arith.addf %106, %107 : vector<1x128xf32>
    %cst_85 = arith.constant 0.000000e+00 : f32
    %109 = vector.broadcast %cst_85 : f32 to vector<1x128xf32>
    %110 = arith.maximumf %108, %109 : vector<1x128xf32>
    %c0_86 = arith.constant 0 : index
    %c0_87 = arith.constant 0 : index
    %111 = vector.load %arg8[%c0_86, %c0_87] : memref<128x128xf32, #tpu.memory_space<vmem>>, vector<128x128xf32>
    %cst_88 = arith.constant dense<0.000000e+00> : vector<1x128xf32>
    %112 = tpu.matmul %110, %111, %cst_88 {dimension_numbers = #tpu.dot_dimension_numbers<[1], [0], [0], [1], [0, 0, 1, 1], [], []>} : vector<1x128xf32>, vector<128x128xf32>, vector<1x128xf32> -> vector<1x128xf32>
    %c0_89 = arith.constant 0 : index
    %c0_90 = arith.constant 0 : index
    %113 = vector.load %arg9[%c0_89, %c0_90] : memref<1x128xf32, #tpu.memory_space<vmem>>, vector<1x128xf32>
    %114 = arith.addf %112, %113 : vector<1x128xf32>
    %c0_91 = arith.constant 0 : index
    %c0_92 = arith.constant 0 : index
    %c0_93 = arith.constant 0 : index
    %115 = vector.load %arg10[%c0_91, %c0_92, %c0_93] : memref<1x1x128xf32, #tpu.memory_space<vmem>>, vector<1x1x128xf32>
    %116 = vector.shape_cast %115 : vector<1x1x128xf32> to vector<1x128xf32>
    %117 = vector.shape_cast %114 : vector<1x128xf32> to vector<1x1x128xf32>
    tpu.vector_store %arg10[%c0_91, %c0_92, %c0_93], %117 {strides = array<i32>} : memref<1x1x128xf32, #tpu.memory_space<vmem>>, vector<1x1x128xf32>,
    return
  }
  func.func @transform_0(%arg0: i32) -> (i32, i32, i32) {
    %c0_i32 = arith.constant 0 : i32
    %c0_i32_0 = arith.constant 0 : i32
    %c0_i32_1 = arith.constant 0 : i32
    return %arg0, %c0_i32, %c0_i32_0 : i32, i32, i32
  }
  func.func @transform_1(%arg0: i32) -> (i32, i32) {
    %c0_i32 = arith.constant 0 : i32
    %c0_i32_0 = arith.constant 0 : i32
    %c0_i32_1 = arith.constant 0 : i32
    return %c0_i32, %c0_i32_0 : i32, i32
  }
  func.func @transform_2(%arg0: i32) -> (i32, i32) {
    %c0_i32 = arith.constant 0 : i32
    %c0_i32_0 = arith.constant 0 : i32
    %c0_i32_1 = arith.constant 0 : i32
    return %c0_i32, %c0_i32_0 : i32, i32
  }
  func.func @transform_3(%arg0: i32) -> (i32, i32) {
    %c0_i32 = arith.constant 0 : i32
    %c0_i32_0 = arith.constant 0 : i32
    %c0_i32_1 = arith.constant 0 : i32
    return %c0_i32, %c0_i32_0 : i32, i32
  }
  func.func @transform_4(%arg0: i32) -> (i32, i32) {
    %c0_i32 = arith.constant 0 : i32
    %c0_i32_0 = arith.constant 0 : i32
    %c0_i32_1 = arith.constant 0 : i32
    return %c0_i32, %c0_i32_0 : i32, i32
  }
  func.func @transform_5(%arg0: i32) -> (i32, i32) {
    %c0_i32 = arith.constant 0 : i32
    %c0_i32_0 = arith.constant 0 : i32
    %c0_i32_1 = arith.constant 0 : i32
    return %c0_i32, %c0_i32_0 : i32, i32
  }
  func.func @transform_6(%arg0: i32) -> (i32, i32) {
    %c0_i32 = arith.constant 0 : i32
    %c0_i32_0 = arith.constant 0 : i32
    %c0_i32_1 = arith.constant 0 : i32
    return %c0_i32, %c0_i32_0 : i32, i32
  }
  func.func @transform_7(%arg0: i32) -> (i32, i32) {
    %c0_i32 = arith.constant 0 : i32
    %c0_i32_0 = arith.constant 0 : i32
    %c0_i32_1 = arith.constant 0 : i32
    return %c0_i32, %c0_i32_0 : i32, i32
  }
  func.func @transform_8(%arg0: i32) -> (i32, i32) {
    %c0_i32 = arith.constant 0 : i32
    %c0_i32_0 = arith.constant 0 : i32
    %c0_i32_1 = arith.constant 0 : i32
    return %c0_i32, %c0_i32_0 : i32, i32
  }
  func.func @transform_9(%arg0: i32) -> (i32, i32, i32) {
    %c0_i32 = arith.constant 0 : i32
    %c0_i32_0 = arith.constant 0 : i32
    %c0_i32_1 = arith.constant 0 : i32
    return %arg0, %c0_i32, %c0_i32_0 : i32, i32, i32
  }
}

</mosaic_0001>

<llo_original>
// kernel: naive_cnn_forward.1
$region0: #{naive_cnn_forward.1}
  #allocation0 [shape = 'u32[]', space=smem, size = 0x4, offset = 0x4, fixed_abs, tag = 'smem constant byte address 0x4 - core index']
  #allocation1 [shape = 'u32[144,128]{1,0:T(1,128)}', space=vmem, size = 0x12000, scoped, tag = 'internal scratch']
  #allocation2 [shape = 'f32[10,10,32]{2,1,0:T(8,128)}', space=vmem, size = 0x14000, scoped, tag = 'scratch operand']
  #allocation3 [shape = 'f32[64,288]{1,0:T(8,128)}', space=vmem, size = 0x18000, scoped, tag = 'scratch operand']
  #allocation4 [shape = 'f32[1,1024]{1,0:T(1,128)}', space=vmem, size = 0x1000, scoped, tag = 'scratch operand']
  %s0 = inlined_call_operand.vmem [shape: f32[2,256,36], index: 0, kind: input, shape index: {}]
  %s1 = inlined_call_operand.vmem [shape: f32[36,32], index: 1, kind: input, shape index: {}]
  %s2 = inlined_call_operand.vmem [shape: f32[1,32], index: 2, kind: input, shape index: {}]
  %s3 = inlined_call_operand.vmem [shape: f32[288,64], index: 3, kind: input, shape index: {}]
  %s4 = inlined_call_operand.vmem [shape: f32[1,64], index: 4, kind: input, shape index: {}]
  %s5 = inlined_call_operand.vmem [shape: f32[1024,128], index: 5, kind: input, shape index: {}]
  %s6 = inlined_call_operand.vmem [shape: f32[1,128], index: 6, kind: input, shape index: {}]
  %s7 = inlined_call_operand.vmem [shape: f32[128,128], index: 7, kind: input, shape index: {}]
  %s8 = inlined_call_operand.vmem [shape: f32[1,128], index: 8, kind: input, shape index: {}]
  %s9 = inlined_call_operand.hbm [shape: f32[2,1,128], index: 9, kind: output, shape index: {}]
  %s10 = sld [smem:[#allocation0]]
  $region69: #{naive_cnn_forward.1} parent=0
    _
  %s12 = ssub.s32 1, %s10
  %s13 = scalar_select 0, %s12, %s10
  $region1: #{naive_cnn_forward.1} parent=0
    #allocation5 [shape = 'u8[1024]{0}', space=vmem, size = 0x400, scoped, tag = 'output window, operand 0']
    #allocation6 [shape = 's32[2]{0}', space=sflag, size = 0x8, scoped, tag = 'scoped memory for naive_cnn_forward.1']
    %14 = vsyncpa [#allocation6], 0
    %s15 = scalar_lea.sflag [#allocation6], 1
    %16 = vsyncpa %s15, 0
    loop: start=0, step=1, limit=4
    $region2: #{naive_cnn_forward.1} parent=1 // loop_pre_header
      _
    $region3: #{naive_cnn_forward.1} parent=1 // loop_header
      %s18 = sphi 0, %s22
      %p19 = scmp.ge.s32.totalorder %s18, 4
      %s28 = sphi 0, %s30
      %s31 = sphi 0, %s28
      %s32 = sphi 0, %s31
      %s48 = sphi 0, %s32
      %s52 = sphi 0, %s52
      %s54 = sphi 0, %s52
      %s55 = sphi 0, %s54
      %s69 = sphi 0, %s55
      %s73 = sphi 0, %s73
      %s75 = sphi 0, %s73
      %s76 = sphi 0, %s75
      %s90 = sphi 0, %s76
      %s94 = sphi 0, %s94
      %s96 = sphi 0, %s94
      %s97 = sphi 0, %s96
      %s111 = sphi 0, %s97
      %s115 = sphi 0, %s115
      %s117 = sphi 0, %s115
      %s118 = sphi 0, %s117
      %s132 = sphi 0, %s118
      %s136 = sphi 0, %s136
      %s138 = sphi 0, %s136
      %s139 = sphi 0, %s138
      %s153 = sphi 0, %s139
      %s157 = sphi 0, %s157
      %s159 = sphi 0, %s157
      %s160 = sphi 0, %s159
      %s174 = sphi 0, %s160
      %s178 = sphi 0, %s178
      %s180 = sphi 0, %s178
      %s181 = sphi 0, %s180
      %s195 = sphi 0, %s181
      %s199 = sphi 0, %s199
      %s201 = sphi 0, %s199
      %s202 = sphi 0, %s201
      %s216 = sphi 0, %s202
      %s222 = sphi 0, %s224
      %s225 = sphi 0, %s222
      %s226 = sphi 0, %s225
      %s242 = sphi 0, %s226
    $region4: #{naive_cnn_forward.1} parent=1 // loop_header_branch
      %21 = sbr.rel (%p19) target = $region8
    $region5: #{naive_cnn_forward.1} parent=1 // loop_body
      %s23 = ssub.s32 %s18, 1
      %s24 = ssub.s32 %s18, 2
      %s25 = sadd.s32 %s18, 1
      %s26 = ssub.s32 %s18, %s25
      %p27 = scmp.eq.s32.totalorder %s26, 0
      %s29 = sadd.s32 %s28, 1
      %s30 = scalar_select %p27, %s28, %s29
      %p33 = pneg %p27
      %p34 = scmp.eq.s32.totalorder %s18, 1
      %p35 = por %p33, %p34
      %p36 = scmp.ne.s32.totalorder %s28, %s31
      %p37 = scmp.eq.s32.totalorder %s18, 0
      %p38 = por %p36, %p37
      %p39 = scmp.ne.s32.totalorder %s28, %s31
      %p40 = scmp.eq.s32.totalorder %s23, 1
      %p41 = por %p39, %p40
      %p42 = scmp.ne.s32.totalorder %s31, %s32
      %p43 = scmp.eq.s32.totalorder %s23, 0
      %p44 = por %p42, %p43
      %p45 = scmp.ne.s32.totalorder %s31, %s32
      %p46 = scmp.eq.s32.totalorder %s24, 1
      %p47 = por %p45, %p46
      %p49 = scmp.ne.s32.totalorder %s32, %s48
      %p50 = scmp.eq.s32.totalorder %s24, 0
      %p51 = por %p49, %p50
      %s53 = sadd.s32 %s52, 1
      %p56 = scmp.eq.s32.totalorder %s18, 1
      %p57 = scmp.ne.s32.totalorder %s52, %s54
      %p58 = scmp.eq.s32.totalorder %s18, 0
      %p59 = por %p57, %p58
      %p60 = scmp.ne.s32.totalorder %s52, %s54
      %p61 = scmp.eq.s32.totalorder %s23, 1
      %p62 = por %p60, %p61
      %p63 = scmp.ne.s32.totalorder %s54, %s55
      %p64 = scmp.eq.s32.totalorder %s23, 0
      %p65 = por %p63, %p64
      %p66 = scmp.ne.s32.totalorder %s54, %s55
      %p67 = scmp.eq.s32.totalorder %s24, 1
      %p68 = por %p66, %p67
      %p70 = scmp.ne.s32.totalorder %s55, %s69
      %p71 = scmp.eq.s32.totalorder %s24, 0
      %p72 = por %p70, %p71
      %s74 = sadd.s32 %s73, 1
      %p77 = scmp.eq.s32.totalorder %s18, 1
      %p78 = scmp.ne.s32.totalorder %s73, %s75
      %p79 = scmp.eq.s32.totalorder %s18, 0
      %p80 = por %p78, %p79
      %p81 = scmp.ne.s32.totalorder %s73, %s75
      %p82 = scmp.eq.s32.totalorder %s23, 1
      %p83 = por %p81, %p82
      %p84 = scmp.ne.s32.totalorder %s75, %s76
      %p85 = scmp.eq.s32.totalorder %s23, 0
      %p86 = por %p84, %p85
      %p87 = scmp.ne.s32.totalorder %s75, %s76
      %p88 = scmp.eq.s32.totalorder %s24, 1
      %p89 = por %p87, %p88
      %p91 = scmp.ne.s32.totalorder %s76, %s90
      %p92 = scmp.eq.s32.totalorder %s24, 0
      %p93 = por %p91, %p92
      %s95 = sadd.s32 %s94, 1
      %p98 = scmp.eq.s32.totalorder %s18, 1
      %p99 = scmp.ne.s32.totalorder %s94, %s96
      %p100 = scmp.eq.s32.totalorder %s18, 0
      %p101 = por %p99, %p100
      %p102 = scmp.ne.s32.totalorder %s94, %s96
      %p103 = scmp.eq.s32.totalorder %s23, 1
      %p104 = por %p102, %p103
      %p105 = scmp.ne.s32.totalorder %s96, %s97
      %p106 = scmp.eq.s32.totalorder %s23, 0
      %p107 = por %p105, %p106
      %p108 = scmp.ne.s32.totalorder %s96, %s97
      %p109 = scmp.eq.s32.totalorder %s24, 1
      %p110 = por %p108, %p109
      %p112 = scmp.ne.s32.totalorder %s97, %s111
      %p113 = scmp.eq.s32.totalorder %s24, 0
      %p114 = por %p112, %p113
      %s116 = sadd.s32 %s115, 1
      %p119 = scmp.eq.s32.totalorder %s18, 1
      %p120 = scmp.ne.s32.totalorder %s115, %s117
      %p121 = scmp.eq.s32.totalorder %s18, 0
      %p122 = por %p120, %p121
      %p123 = scmp.ne.s32.totalorder %s115, %s117
      %p124 = scmp.eq.s32.totalorder %s23, 1
      %p125 = por %p123, %p124
      %p126 = scmp.ne.s32.totalorder %s117, %s118
      %p127 = scmp.eq.s32.totalorder %s23, 0
      %p128 = por %p126, %p127
      %p129 = scmp.ne.s32.totalorder %s117, %s118
      %p130 = scmp.eq.s32.totalorder %s24, 1
      %p131 = por %p129, %p130
      %p133 = scmp.ne.s32.totalorder %s118, %s132
      %p134 = scmp.eq.s32.totalorder %s24, 0
      %p135 = por %p133, %p134
      %s137 = sadd.s32 %s136, 1
      %p140 = scmp.eq.s32.totalorder %s18, 1
      %p141 = scmp.ne.s32.totalorder %s136, %s138
      %p142 = scmp.eq.s32.totalorder %s18, 0
      %p143 = por %p141, %p142
      %p144 = scmp.ne.s32.totalorder %s136, %s138
      %p145 = scmp.eq.s32.totalorder %s23, 1
      %p146 = por %p144, %p145
      %p147 = scmp.ne.s32.totalorder %s138, %s139
      %p148 = scmp.eq.s32.totalorder %s23, 0
      %p149 = por %p147, %p148
      %p150 = scmp.ne.s32.totalorder %s138, %s139
      %p151 = scmp.eq.s32.totalorder %s24, 1
      %p152 = por %p150, %p151
      %p154 = scmp.ne.s32.totalorder %s139, %s153
      %p155 = scmp.eq.s32.totalorder %s24, 0
      %p156 = por %p154, %p155
      %s158 = sadd.s32 %s157, 1
      %p161 = scmp.eq.s32.totalorder %s18, 1
      %p162 = scmp.ne.s32.totalorder %s157, %s159
      %p163 = scmp.eq.s32.totalorder %s18, 0
      %p164 = por %p162, %p163
      %p165 = scmp.ne.s32.totalorder %s157, %s159
      %p166 = scmp.eq.s32.totalorder %s23, 1
      %p167 = por %p165, %p166
      %p168 = scmp.ne.s32.totalorder %s159, %s160
      %p169 = scmp.eq.s32.totalorder %s23, 0
      %p170 = por %p168, %p169
      %p171 = scmp.ne.s32.totalorder %s159, %s160
      %p172 = scmp.eq.s32.totalorder %s24, 1
      %p173 = por %p171, %p172
      %p175 = scmp.ne.s32.totalorder %s160, %s174
      %p176 = scmp.eq.s32.totalorder %s24, 0
      %p177 = por %p175, %p176
      %s179 = sadd.s32 %s178, 1
      %p182 = scmp.eq.s32.totalorder %s18, 1
      %p183 = scmp.ne.s32.totalorder %s178, %s180
      %p184 = scmp.eq.s32.totalorder %s18, 0
      %p185 = por %p183, %p184
      %p186 = scmp.ne.s32.totalorder %s178, %s180
      %p187 = scmp.eq.s32.totalorder %s23, 1
      %p188 = por %p186, %p187
      %p189 = scmp.ne.s32.totalorder %s180, %s181
      %p190 = scmp.eq.s32.totalorder %s23, 0
      %p191 = por %p189, %p190
      %p192 = scmp.ne.s32.totalorder %s180, %s181
      %p193 = scmp.eq.s32.totalorder %s24, 1
      %p194 = por %p192, %p193
      %p196 = scmp.ne.s32.totalorder %s181, %s195
      %p197 = scmp.eq.s32.totalorder %s24, 0
      %p198 = por %p196, %p197
      %s200 = sadd.s32 %s199, 1
      %p203 = scmp.eq.s32.totalorder %s18, 1
      %p204 = scmp.ne.s32.totalorder %s199, %s201
      %p205 = scmp.eq.s32.totalorder %s18, 0
      %p206 = por %p204, %p205
      %p207 = scmp.ne.s32.totalorder %s199, %s201
      %p208 = scmp.eq.s32.totalorder %s23, 1
      %p209 = por %p207, %p208
      %p210 = scmp.ne.s32.totalorder %s201, %s202
      %p211 = scmp.eq.s32.totalorder %s23, 0
      %p212 = por %p210, %p211
      %p213 = scmp.ne.s32.totalorder %s201, %s202
      %p214 = scmp.eq.s32.totalorder %s24, 1
      %p215 = por %p213, %p214
      %p217 = scmp.ne.s32.totalorder %s202, %s216
      %p218 = scmp.eq.s32.totalorder %s24, 0
      %p219 = por %p217, %p218
      %s220 = ssub.s32 %s18, %s25
      %p221 = scmp.eq.s32.totalorder %s220, 0
      %s223 = sadd.s32 %s222, 1
      %s224 = scalar_select %p221, %s222, %s223
      %p227 = pneg %p221
      %p228 = scmp.eq.s32.totalorder %s18, 1
      %p229 = por %p227, %p228
      %p230 = scmp.ne.s32.totalorder %s222, %s225
      %p231 = scmp.eq.s32.totalorder %s18, 0
      %p232 = por %p230, %p231
      %p233 = scmp.ne.s32.totalorder %s222, %s225
      %p234 = scmp.eq.s32.totalorder %s23, 1
      %p235 = por %p233, %p234
      %p236 = scmp.ne.s32.totalorder %s225, %s226
      %p237 = scmp.eq.s32.totalorder %s23, 0
      %p238 = por %p236, %p237
      %p239 = scmp.ne.s32.totalorder %s225, %s226
      %p240 = scmp.eq.s32.totalorder %s24, 1
      %p241 = por %p239, %p240
      %p243 = scmp.ne.s32.totalorder %s226, %s242
      %p244 = scmp.eq.s32.totalorder %s24, 0
      %p245 = por %p243, %p244
      %p246 = scmp.le.s32.totalorder 1, %s18
      %p247 = scmp.lt.s32.totalorder %s18, 3
      %p248 = pnand %p246, %p247
      %p249 = pneg %p248
      // Predicated region
      $region9: #{naive_cnn_forward.1} parent=5 // pred_check
        _
      $region10: #{naive_cnn_forward.1} parent=5 // pred_check_branch
        %251 = sbr.rel (%p248) target = $region12
      $region11: #{naive_cnn_forward.1} parent=5 // pred_region
        %s252 = ssub.s32 %s18, 1
        // Predicated region
        $region13: #{naive_cnn_forward.1} parent=11 // pred_check
          %p253 = pneg %p65
        $region14: #{naive_cnn_forward.1} parent=11 // pred_check_branch
          %255 = sbr.rel (%p253) target = $region16
        $region15: #{naive_cnn_forward.1} parent=11 // pred_region
          _
        $region16: #{naive_cnn_forward.1} parent=11 // pred_fallthru
          _
        // Predicated region
        $region17: #{naive_cnn_forward.1} parent=11 // pred_check
          %p256 = pneg %p86
        $region18: #{naive_cnn_forward.1} parent=11 // pred_check_branch
          %258 = sbr.rel (%p256) target = $region20
        $region19: #{naive_cnn_forward.1} parent=11 // pred_region
          _
        $region20: #{naive_cnn_forward.1} parent=11 // pred_fallthru
          _
        // Predicated region
        $region21: #{naive_cnn_forward.1} parent=11 // pred_check
          %p259 = pneg %p107
        $region22: #{naive_cnn_forward.1} parent=11 // pred_check_branch
          %261 = sbr.rel (%p259) target = $region24
        $region23: #{naive_cnn_forward.1} parent=11 // pred_region
          _
        $region24: #{naive_cnn_forward.1} parent=11 // pred_fallthru
          _
        // Predicated region
        $region25: #{naive_cnn_forward.1} parent=11 // pred_check
          %p262 = pneg %p128
        $region26: #{naive_cnn_forward.1} parent=11 // pred_check_branch
          %264 = sbr.rel (%p262) target = $region28
        $region27: #{naive_cnn_forward.1} parent=11 // pred_region
          _
        $region28: #{naive_cnn_forward.1} parent=11 // pred_fallthru
          _
        // Predicated region
        $region29: #{naive_cnn_forward.1} parent=11 // pred_check
          %p265 = pneg %p149
        $region30: #{naive_cnn_forward.1} parent=11 // pred_check_branch
          %267 = sbr.rel (%p265) target = $region32
        $region31: #{naive_cnn_forward.1} parent=11 // pred_region
          _
        $region32: #{naive_cnn_forward.1} parent=11 // pred_fallthru
          _
        // Predicated region
        $region33: #{naive_cnn_forward.1} parent=11 // pred_check
          %p268 = pneg %p170
        $region34: #{naive_cnn_forward.1} parent=11 // pred_check_branch
          %270 = sbr.rel (%p268) target = $region36
        $region35: #{naive_cnn_forward.1} parent=11 // pred_region
          _
        $region36: #{naive_cnn_forward.1} parent=11 // pred_fallthru
          _
        // Predicated region
        $region37: #{naive_cnn_forward.1} parent=11 // pred_check
          %p271 = pneg %p191
        $region38: #{naive_cnn_forward.1} parent=11 // pred_check_branch
          %273 = sbr.rel (%p271) target = $region40
        $region39: #{naive_cnn_forward.1} parent=11 // pred_region
          _
        $region40: #{naive_cnn_forward.1} parent=11 // pred_fallthru
          _
        // Predicated region
        $region41: #{naive_cnn_forward.1} parent=11 // pred_check
          %p274 = pneg %p212
        $region42: #{naive_cnn_forward.1} parent=11 // pred_check_branch
          %276 = sbr.rel (%p274) target = $region44
        $region43: #{naive_cnn_forward.1} parent=11 // pred_region
          _
        $region44: #{naive_cnn_forward.1} parent=11 // pred_fallthru
          _
      $region12: #{naive_cnn_forward.1} parent=5 // pred_fallthru
        _
      %p277 = scmp.lt.s32.totalorder %s18, 2
      // Predicated region
      $region45: #{naive_cnn_forward.1} parent=5 // pred_check
        %p278 = pneg %p277
      $region46: #{naive_cnn_forward.1} parent=5 // pred_check_branch
        %280 = sbr.rel (%p278) target = $region48
      $region47: #{naive_cnn_forward.1} parent=5 // pred_region
        // Predicated region
        $region49: #{naive_cnn_forward.1} parent=47 // pred_check
          %p281 = pneg %p38
        $region50: #{naive_cnn_forward.1} parent=47 // pred_check_branch
          %283 = sbr.rel (%p281) target = $region52
        $region51: #{naive_cnn_forward.1} parent=47 // pred_region
          %p284 = scmp.lt.s32.totalorder %s18, 1
          %s285 = scalar_select %p284, %s18, 1
          %s286 = smul.addr %s285, 32
          %s287 = smul.addr %s286, 8
          %s288 = scalar_lea.vmem %s0, %s287
        $region52: #{naive_cnn_forward.1} parent=47 // pred_fallthru
          _
      $region48: #{naive_cnn_forward.1} parent=5 // pred_fallthru
        _
      %p289 = scmp.le.s32.totalorder 1, %s18
      %p290 = scmp.lt.s32.totalorder %s18, 3
      %p291 = pnand %p289, %p290
      %p292 = pneg %p291
      // Predicated region
      $region53: #{naive_cnn_forward.1} parent=5 // pred_check
        _
      $region54: #{naive_cnn_forward.1} parent=5 // pred_check_branch
        %294 = sbr.rel (%p291) target = $region56
      $region55: #{naive_cnn_forward.1} parent=5 // pred_region
        %s295 = ssub.s32 %s18, 1
        %p296 = scmp.lt.s32.totalorder %s23, 1
        %s297 = scalar_select %p296, %s23, 1
        %s298 = smul.addr %s297, 32
        %s299 = smul.addr %s298, 8
        %s300 = scalar_lea.vmem %s0, %s299
        %p301 = pneg %p44
        %p302 = pneg %p41
        %p303 = pneg %p65
        %p304 = pneg %p62
        %p305 = pneg %p86
        %p306 = pneg %p83
        %p307 = pneg %p107
        %p308 = pneg %p104
        %p309 = pneg %p128
        %p310 = pneg %p125
        %p311 = pneg %p149
        %p312 = pneg %p146
        %p313 = pneg %p170
        %p314 = pneg %p167
        %p315 = pneg %p191
        %p316 = pneg %p188
        %p317 = pneg %p212
        %p318 = pneg %p209
        %p319 = pneg %p238
        %p320 = pneg %p235
        %s321 = sand.u32 %s225, 1
        %s322 = scalar_lea.sflag [#allocation6], %s321
        %s323 = sand.u32 %s225, 1
        %s324 = scalar_lea.vmem [#allocation5], %s323
        %p325 = scmp.lt.s32.totalorder %s23, 1
        %s326 = scalar_select %p325, %s23, 1
        %s327 = smul.addr %s326, 32
        %s328 = smul.addr %s327, 8
        %s329 = scalar_lea.vmem %s0, %s328
        %v330 = vld [vmem:[%s329] sm:$0xff]
        %v331 = vld [vmem:[%s329 + $0x8] sm:$0xff]
        %v332 = vld [vmem:[%s329 + $0x10] sm:$0xff]
        %v333 = vld [vmem:[%s329 + $0x18] sm:$0xff]
        %v334 = vld [vmem:[%s329 + $0x20] sm:$0xff]
        %v335 = vld [vmem:[%s329 + $0x28] sm:$0xff]
        %v336 = vld [vmem:[%s329 + $0x30] sm:$0xff]
        %v337 = vld [vmem:[%s329 + $0x38] sm:$0xff]
        %v338 = vld [vmem:[%s329 + $0x40] sm:$0xff]
        %v339 = vld [vmem:[%s329 + $0x48] sm:$0xff]
        %v340 = vld [vmem:[%s329 + $0x50] sm:$0xff]
        %v341 = vld [vmem:[%s329 + $0x58] sm:$0xff]
        %v342 = vld [vmem:[%s329 + $0x60] sm:$0xff]
        %v343 = vld [vmem:[%s329 + $0x68] sm:$0xff]
        %v344 = vld [vmem:[%s329 + $0x70] sm:$0xff]
        %v345 = vld [vmem:[%s329 + $0x78] sm:$0xff]
        %v346 = vld [vmem:[%s329 + $0x80] sm:$0xff]
        %v347 = vld [vmem:[%s329 + $0x88] sm:$0xff]
        %v348 = vld [vmem:[%s329 + $0x90] sm:$0xff]
        %v349 = vld [vmem:[%s329 + $0x98] sm:$0xff]
        %v350 = vld [vmem:[%s329 + $0xa0] sm:$0xff]
        %v351 = vld [vmem:[%s329 + $0xa8] sm:$0xff]
        %v352 = vld [vmem:[%s329 + $0xb0] sm:$0xff]
        %v353 = vld [vmem:[%s329 + $0xb8] sm:$0xff]
        %v354 = vld [vmem:[%s329 + $0xc0] sm:$0xff]
        %v355 = vld [vmem:[%s329 + $0xc8] sm:$0xff]
        %v356 = vld [vmem:[%s329 + $0xd0] sm:$0xff]
        %v357 = vld [vmem:[%s329 + $0xd8] sm:$0xff]
        %v358 = vld [vmem:[%s329 + $0xe0] sm:$0xff]
        %v359 = vld [vmem:[%s329 + $0xe8] sm:$0xff]
        %v360 = vld [vmem:[%s329 + $0xf0] sm:$0xff]
        %v361 = vld [vmem:[%s329 + $0xf8] sm:$0xff]
        %v362 = vld [vmem:[%s1] sm:$0xff]
        %v363 = vld [vmem:[%s1 + $0x8] sm:$0xff]
        %v364 = vld [vmem:[%s1 + $0x10] sm:$0xff]
        %v365 = vld [vmem:[%s1 + $0x18] sm:$0xff]
        %v366 = vld [vmem:[%s1 + $0x20] sm:$0xf]
        %v367 = vld [vmem:[%s2] sm:$0x1]
        %v369 = vlaneseq
        %v370 = vshrl.u32 %v369, 7
        %v371 = vsub.s32 0, %v370
        %v372 = vrot.slane %v367, %v371
        %vm374 = vcmask 293888
        %v376 = vsel %vm374, %v330, 0
        %v379 = vsel %vm374, %v331, 0
        %v382 = vsel %vm374, %v332, 0
        %v385 = vsel %vm374, %v333, 0
        %v388 = vsel %vm374, %v334, 0
        %v391 = vsel %vm374, %v335, 0
        %v394 = vsel %vm374, %v336, 0
        %v397 = vsel %vm374, %v337, 0
        %v400 = vsel %vm374, %v338, 0
        %v403 = vsel %vm374, %v339, 0
        %v406 = vsel %vm374, %v340, 0
        %v409 = vsel %vm374, %v341, 0
        %v412 = vsel %vm374, %v342, 0
        %v415 = vsel %vm374, %v343, 0
        %v418 = vsel %vm374, %v344, 0
        %v421 = vsel %vm374, %v345, 0
        %v424 = vsel %vm374, %v346, 0
        %v427 = vsel %vm374, %v347, 0
        %v430 = vsel %vm374, %v348, 0
        %v433 = vsel %vm374, %v349, 0
        %v436 = vsel %vm374, %v350, 0
        %v439 = vsel %vm374, %v351, 0
        %v442 = vsel %vm374, %v352, 0
        %v445 = vsel %vm374, %v353, 0
        %v448 = vsel %vm374, %v354, 0
        %v451 = vsel %vm374, %v355, 0
        %v454 = vsel %vm374, %v356, 0
        %v457 = vsel %vm374, %v357, 0
        %v460 = vsel %vm374, %v358, 0
        %v463 = vsel %vm374, %v359, 0
        %v466 = vsel %vm374, %v360, 0
        %v469 = vsel %vm374, %v361, 0
        %vm471 = vcmask 1043456
        %v473 = vsel %vm471, %v366, 0
        %475 = vmatprep.subr.mxu0 0.0
        %476 = vmatpush1.msra.mxu0 %v362
        %477 = vmatprep.subr.mxu0 0.0
        %478 = vmatpush1.msra.mxu0 %v363
        %479 = vmatprep.subr.mxu0 0.0
        %480 = vmatpush1.msra.mxu0 %v364
        %481 = vmatprep.subr.mxu0 0.0
        %482 = vmatpush1.msra.mxu0 %v365
        %483 = vmatprep.subr.mxu0 0.0
        %484 = vmatpush1.msra.mxu0 %v473
        %485 = vmatprep.subr.mxu0 0.0
        %486 = vmatpush1.msra.mxu0 0.0
        %487 = vmatprep.subr.mxu0 0.0
        %488 = vmatpush1.msra.mxu0 0.0
        %489 = vmatprep.subr.mxu0 0.0
        %490 = vmatpush1.msra.mxu0 0.0
        %491 = vmatprep.subr.mxu0 0.0
        %492 = vmatpush1.msra.mxu0 0.0
        %493 = vmatprep.subr.mxu0 0.0
        %494 = vmatpush1.msra.mxu0 0.0
        %495 = vmatprep.subr.mxu0 0.0
        %496 = vmatpush1.msra.mxu0 0.0
        %497 = vmatprep.subr.mxu0 0.0
        %498 = vmatpush1.msra.mxu0 0.0
        %499 = vmatprep.subr.mxu0 0.0
        %500 = vmatpush1.msra.mxu0 0.0
        %501 = vmatprep.subr.mxu0 0.0
        %502 = vmatpush1.msra.mxu0 0.0
        %503 = vmatprep.subr.mxu0 0.0
        %504 = vmatpush1.msra.mxu0 0.0
        %505 = vmatprep.subr.mxu0 0.0
        %506 = vmatpush1.msra.mxu0 0.0
        %507 = vmatprep.subr.mxu0 0.0
        %508 = vmatpush1.msra.mxu0 0.0
        %509 = vmatprep.subr.mxu0 0.0
        %510 = vmatpush1.msra.mxu0 0.0
        %511 = vmatprep.subr.mxu0 0.0
        %512 = vmatpush1.msra.mxu0 0.0
        %513 = vmatprep.subr.mxu0 0.0
        %514 = vmatpush1.msra.mxu0 0.0
        %515 = vmatprep.subr.mxu0 0.0
        %516 = vmatpush1.msra.mxu0 0.0
        %517 = vmatprep.subr.mxu0 0.0
        %518 = vmatpush1.msra.mxu0 0.0
        %519 = vmatprep.subr.mxu0 0.0
        %520 = vmatpush1.msra.mxu0 0.0
        %521 = vmatprep.subr.mxu0 0.0
        %522 = vmatpush1.msra.mxu0 0.0
        %523 = vmatprep.subr.mxu0 0.0
        %524 = vmatpush1.msra.mxu0 0.0
        %525 = vmatprep.subr.mxu0 0.0
        %526 = vmatpush1.msra.mxu0 0.0
        %527 = vmatprep.subr.mxu0 0.0
        %528 = vmatpush1.msra.mxu0 0.0
        %529 = vmatprep.subr.mxu0 0.0
        %530 = vmatpush1.msra.mxu0 0.0
        %531 = vmatprep.subr.mxu0 0.0
        %532 = vmatpush1.msra.mxu0 0.0
        %533 = vmatprep.subr.mxu0 0.0
        %534 = vmatpush1.msra.mxu0 0.0
        %535 = vmatprep.subr.mxu0 0.0
        %536 = vmatpush1.msra.mxu0 0.0
        %537 = vmatprep.subr.mxu0 0.0
        %538 = vmatpush1.msra.mxu0 0.0
        %539 = vmatprep.mubr.f32.mxu0 0.0
        %540 = vmatmul.mubr.f32.gmra.mrb[0].mxu0 %v376
        %v541 = vpop.f32.mrb[0].mxu0
        %v542 = vadd.f32 %v372, %v541
        %v543 = vpop.f32.mrb[0].mxu0
        %544 = vmatprep.mubr.f32.mxu0 0.0
        %545 = vmatmul.mubr.f32.gmra.mrb[0].mxu0 %v379
        %v546 = vpop.f32.mrb[0].mxu0
        %v547 = vadd.f32 %v372, %v546
        %v548 = vpop.f32.mrb[0].mxu0
        %549 = vmatprep.mubr.f32.mxu0 0.0
        %550 = vmatmul.mubr.f32.gmra.mrb[0].mxu0 %v382
        %v551 = vpop.f32.mrb[0].mxu0
        %v552 = vadd.f32 %v372, %v551
        %v553 = vpop.f32.mrb[0].mxu0
        %554 = vmatprep.mubr.f32.mxu0 0.0
        %555 = vmatmul.mubr.f32.gmra.mrb[0].mxu0 %v385
        %v556 = vpop.f32.mrb[0].mxu0
        %v557 = vadd.f32 %v372, %v556
        %v558 = vpop.f32.mrb[0].mxu0
        %559 = vmatprep.mubr.f32.mxu0 0.0
        %560 = vmatmul.mubr.f32.gmra.mrb[0].mxu0 %v388
        %v561 = vpop.f32.mrb[0].mxu0
        %v562 = vadd.f32 %v372, %v561
        %v563 = vpop.f32.mrb[0].mxu0
        %564 = vmatprep.mubr.f32.mxu0 0.0
        %565 = vmatmul.mubr.f32.gmra.mrb[0].mxu0 %v391
        %v566 = vpop.f32.mrb[0].mxu0
        %v567 = vadd.f32 %v372, %v566
        %v568 = vpop.f32.mrb[0].mxu0
        %569 = vmatprep.mubr.f32.mxu0 0.0
        %570 = vmatmul.mubr.f32.gmra.mrb[0].mxu0 %v394
        %v571 = vpop.f32.mrb[0].mxu0
        %v572 = vadd.f32 %v372, %v571
        %v573 = vpop.f32.mrb[0].mxu0
        %574 = vmatprep.mubr.f32.mxu0 0.0
        %575 = vmatmul.mubr.f32.gmra.mrb[0].mxu0 %v397
        %v576 = vpop.f32.mrb[0].mxu0
        %v577 = vadd.f32 %v372, %v576
        %v578 = vpop.f32.mrb[0].mxu0
        %579 = vmatprep.mubr.f32.mxu0 0.0
        %580 = vmatmul.mubr.f32.gmra.mrb[0].mxu0 %v400
        %v581 = vpop.f32.mrb[0].mxu0
        %v582 = vadd.f32 %v372, %v581
        %v583 = vpop.f32.mrb[0].mxu0
        %584 = vmatprep.mubr.f32.mxu0 0.0
        %585 = vmatmul.mubr.f32.gmra.mrb[0].mxu0 %v403
        %v586 = vpop.f32.mrb[0].mxu0
        %v587 = vadd.f32 %v372, %v586
        %v588 = vpop.f32.mrb[0].mxu0
        %589 = vmatprep.mubr.f32.mxu0 0.0
        %590 = vmatmul.mubr.f32.gmra.mrb[0].mxu0 %v406
        %v591 = vpop.f32.mrb[0].mxu0
        %v592 = vadd.f32 %v372, %v591
        %v593 = vpop.f32.mrb[0].mxu0
        %594 = vmatprep.mubr.f32.mxu0 0.0
        %595 = vmatmul.mubr.f32.gmra.mrb[0].mxu0 %v409
        %v596 = vpop.f32.mrb[0].mxu0
        %v597 = vadd.f32 %v372, %v596
        %v598 = vpop.f32.mrb[0].mxu0
        %599 = vmatprep.mubr.f32.mxu0 0.0
        %600 = vmatmul.mubr.f32.gmra.mrb[0].mxu0 %v412
        %v601 = vpop.f32.mrb[0].mxu0
        %v602 = vadd.f32 %v372, %v601
        %v603 = vpop.f32.mrb[0].mxu0
        %604 = vmatprep.mubr.f32.mxu0 0.0
        %605 = vmatmul.mubr.f32.gmra.mrb[0].mxu0 %v415
        %v606 = vpop.f32.mrb[0].mxu0
        %v607 = vadd.f32 %v372, %v606
        %v608 = vpop.f32.mrb[0].mxu0
        %609 = vmatprep.mubr.f32.mxu0 0.0
        %610 = vmatmul.mubr.f32.gmra.mrb[0].mxu0 %v418
        %v611 = vpop.f32.mrb[0].mxu0
        %v612 = vadd.f32 %v372, %v611
        %v613 = vpop.f32.mrb[0].mxu0
        %614 = vmatprep.mubr.f32.mxu0 0.0
        %615 = vmatmul.mubr.f32.gmra.mrb[0].mxu0 %v421
        %v616 = vpop.f32.mrb[0].mxu0
        %v617 = vadd.f32 %v372, %v616
        %v618 = vpop.f32.mrb[0].mxu0
        %619 = vmatprep.mubr.f32.mxu0 0.0
        %620 = vmatmul.mubr.f32.gmra.mrb[0].mxu0 %v424
        %v621 = vpop.f32.mrb[0].mxu0
        %v622 = vadd.f32 %v372, %v621
        %v623 = vpop.f32.mrb[0].mxu0
        %624 = vmatprep.mubr.f32.mxu0 0.0
        %625 = vmatmul.mubr.f32.gmra.mrb[0].mxu0 %v427
        %v626 = vpop.f32.mrb[0].mxu0
        %v627 = vadd.f32 %v372, %v626
        %v628 = vpop.f32.mrb[0].mxu0
        %629 = vmatprep.mubr.f32.mxu0 0.0
        %630 = vmatmul.mubr.f32.gmra.mrb[0].mxu0 %v430
        %v631 = vpop.f32.mrb[0].mxu0
        %v632 = vadd.f32 %v372, %v631
        %v633 = vpop.f32.mrb[0].mxu0
        %634 = vmatprep.mubr.f32.mxu0 0.0
        %635 = vmatmul.mubr.f32.gmra.mrb[0].mxu0 %v433
        %v636 = vpop.f32.mrb[0].mxu0
        %v637 = vadd.f32 %v372, %v636
        %v638 = vpop.f32.mrb[0].mxu0
        %639 = vmatprep.mubr.f32.mxu0 0.0
        %640 = vmatmul.mubr.f32.gmra.mrb[0].mxu0 %v436
        %v641 = vpop.f32.mrb[0].mxu0
        %v642 = vadd.f32 %v372, %v641
        %v643 = vpop.f32.mrb[0].mxu0
        %644 = vmatprep.mubr.f32.mxu0 0.0
        %645 = vmatmul.mubr.f32.gmra.mrb[0].mxu0 %v439
        %v646 = vpop.f32.mrb[0].mxu0
        %v647 = vadd.f32 %v372, %v646
        %v648 = vpop.f32.mrb[0].mxu0
        %649 = vmatprep.mubr.f32.mxu0 0.0
        %650 = vmatmul.mubr.f32.gmra.mrb[0].mxu0 %v442
        %v651 = vpop.f32.mrb[0].mxu0
        %v652 = vadd.f32 %v372, %v651
        %v653 = vpop.f32.mrb[0].mxu0
        %654 = vmatprep.mubr.f32.mxu0 0.0
        %655 = vmatmul.mubr.f32.gmra.mrb[0].mxu0 %v445
        %v656 = vpop.f32.mrb[0].mxu0
        %v657 = vadd.f32 %v372, %v656
        %v658 = vpop.f32.mrb[0].mxu0
        %659 = vmatprep.mubr.f32.mxu0 0.0
        %660 = vmatmul.mubr.f32.gmra.mrb[0].mxu0 %v448
        %v661 = vpop.f32.mrb[0].mxu0
        %v662 = vadd.f32 %v372, %v661
        %v663 = vpop.f32.mrb[0].mxu0
        %664 = vmatprep.mubr.f32.mxu0 0.0
        %665 = vmatmul.mubr.f32.gmra.mrb[0].mxu0 %v451
        %v666 = vpop.f32.mrb[0].mxu0
        %v667 = vadd.f32 %v372, %v666
        %v668 = vpop.f32.mrb[0].mxu0
        %669 = vmatprep.mubr.f32.mxu0 0.0
        %670 = vmatmul.mubr.f32.gmra.mrb[0].mxu0 %v454
        %v671 = vpop.f32.mrb[0].mxu0
        %v672 = vadd.f32 %v372, %v671
        %v673 = vpop.f32.mrb[0].mxu0
        %674 = vmatprep.mubr.f32.mxu0 0.0
        %675 = vmatmul.mubr.f32.gmra.mrb[0].mxu0 %v457
        %v676 = vpop.f32.mrb[0].mxu0
        %v677 = vadd.f32 %v372, %v676
        %v678 = vpop.f32.mrb[0].mxu0
        %679 = vmatprep.mubr.f32.mxu0 0.0
        %680 = vmatmul.mubr.f32.gmra.mrb[0].mxu0 %v460
        %v681 = vpop.f32.mrb[0].mxu0
        %v682 = vadd.f32 %v372, %v681
        %v683 = vpop.f32.mrb[0].mxu0
        %684 = vmatprep.mubr.f32.mxu0 0.0
        %685 = vmatmul.mubr.f32.gmra.mrb[0].mxu0 %v463
        %v686 = vpop.f32.mrb[0].mxu0
        %v687 = vadd.f32 %v372, %v686
        %v688 = vpop.f32.mrb[0].mxu0
        %689 = vmatprep.mubr.f32.mxu0 0.0
        %690 = vmatmul.mubr.f32.gmra.mrb[0].mxu0 %v466
        %v691 = vpop.f32.mrb[0].mxu0
        %v692 = vadd.f32 %v372, %v691
        %v693 = vpop.f32.mrb[0].mxu0
        %694 = vmatprep.mubr.f32.mxu0 0.0
        %695 = vmatmul.mubr.f32.gmra.mrb[0].mxu0 %v469
        %v696 = vpop.f32.mrb[0].mxu0
        %v697 = vadd.f32 %v372, %v696
        %v698 = vpop.f32.mrb[0].mxu0
        %699 = vdwg.mxu0
        %v700 = vmax.f32 %v542, 0.0
        %v701 = vmax.f32 %v547, 0.0
        %v702 = vmax.f32 %v552, 0.0
        %v703 = vmax.f32 %v557, 0.0
        %v704 = vmax.f32 %v562, 0.0
        %v705 = vmax.f32 %v567, 0.0
        %v706 = vmax.f32 %v572, 0.0
        %v707 = vmax.f32 %v577, 0.0
        %v708 = vmax.f32 %v582, 0.0
        %v709 = vmax.f32 %v587, 0.0
        %v710 = vmax.f32 %v592, 0.0
        %v711 = vmax.f32 %v597, 0.0
        %v712 = vmax.f32 %v602, 0.0
        %v713 = vmax.f32 %v607, 0.0
        %v714 = vmax.f32 %v612, 0.0
        %v715 = vmax.f32 %v617, 0.0
        %v716 = vmax.f32 %v622, 0.0
        %v717 = vmax.f32 %v627, 0.0
        %v718 = vmax.f32 %v632, 0.0
        %v719 = vmax.f32 %v637, 0.0
        %v720 = vmax.f32 %v642, 0.0
        %v721 = vmax.f32 %v647, 0.0
        %v722 = vmax.f32 %v652, 0.0
        %v723 = vmax.f32 %v657, 0.0
        %v724 = vmax.f32 %v662, 0.0
        %v725 = vmax.f32 %v667, 0.0
        %v726 = vmax.f32 %v672, 0.0
        %v727 = vmax.f32 %v677, 0.0
        %v728 = vmax.f32 %v682, 0.0
        %v729 = vmax.f32 %v687, 0.0
        %v730 = vmax.f32 %v692, 0.0
        %v731 = vmax.f32 %v697, 0.0
        %v764 = vcombine.high %v700, %v700
        %v766 = vunpack.c.l.s4 1983009808
        %v767 = vunpack.c.0.s8 %v766
        %v768 = vlaneseq
        %v769 = vshrl.u32 %v768, 7
        %v770 = vsub.s32 %v767, %v769
        %v771 = vrot.slane %v700, %v770
        %v773 = vunpack.c.l.s4 1983009808
        %v774 = vunpack.c.0.s8 %v773
        %v775 = vlaneseq
        %v776 = vshrl.u32 %v775, 7
        %v777 = vsub.s32 %v774, %v776
        %v778 = vrot.slane %v764, %v777
        %v779 = vcombine.high %v771, %v771
        %v780 = vcombine.high %v778, %v778
        %v781 = vcombine.high %v701, %v701
        %v783 = vunpack.c.l.s4 1983009808
        %v784 = vunpack.c.0.s8 %v783
        %v785 = vlaneseq
        %v786 = vshrl.u32 %v785, 7
        %v787 = vsub.s32 %v784, %v786
        %v788 = vrot.slane %v701, %v787
        %v790 = vunpack.c.l.s4 1983009808
        %v791 = vunpack.c.0.s8 %v790
        %v792 = vlaneseq
        %v793 = vshrl.u32 %v792, 7
        %v794 = vsub.s32 %v791, %v793
        %v795 = vrot.slane %v781, %v794
        %v796 = vcombine.high %v788, %v788
        %v797 = vcombine.high %v795, %v795
        %v798 = vcombine.high %v702, %v702
        %v800 = vunpack.c.l.s4 1983009808
        %v801 = vunpack.c.0.s8 %v800
        %v802 = vlaneseq
        %v803 = vshrl.u32 %v802, 7
        %v804 = vsub.s32 %v801, %v803
        %v805 = vrot.slane %v702, %v804
        %v807 = vunpack.c.l.s4 1983009808
        %v808 = vunpack.c.0.s8 %v807
        %v809 = vlaneseq
        %v810 = vshrl.u32 %v809, 7
        %v811 = vsub.s32 %v808, %v810
        %v812 = vrot.slane %v798, %v811
        %v813 = vcombine.high %v805, %v805
        %v814 = vcombine.high %v812, %v812
        %v815 = vcombine.high %v703, %v703
        %v817 = vunpack.c.l.s4 1983009808
        %v818 = vunpack.c.0.s8 %v817
        %v819 = vlaneseq
        %v820 = vshrl.u32 %v819, 7
        %v821 = vsub.s32 %v818, %v820
        %v822 = vrot.slane %v703, %v821
        %v824 = vunpack.c.l.s4 1983009808
        %v825 = vunpack.c.0.s8 %v824
        %v826 = vlaneseq
        %v827 = vshrl.u32 %v826, 7
        %v828 = vsub.s32 %v825, %v827
        %v829 = vrot.slane %v815, %v828
        %v830 = vcombine.high %v822, %v822
        %v831 = vcombine.high %v829, %v829
        %v832 = vcombine.high %v704, %v704
        %v834 = vunpack.c.l.s4 1983009808
        %v835 = vunpack.c.0.s8 %v834
        %v836 = vlaneseq
        %v837 = vshrl.u32 %v836, 7
        %v838 = vsub.s32 %v835, %v837
        %v839 = vrot.slane %v704, %v838
        %v841 = vunpack.c.l.s4 1983009808
        %v842 = vunpack.c.0.s8 %v841
        %v843 = vlaneseq
        %v844 = vshrl.u32 %v843, 7
        %v845 = vsub.s32 %v842, %v844
        %v846 = vrot.slane %v832, %v845
        %v847 = vcombine.high %v839, %v839
        %v848 = vcombine.high %v846, %v846
        %v849 = vcombine.high %v705, %v705
        %v851 = vunpack.c.l.s4 1983009808
        %v852 = vunpack.c.0.s8 %v851
        %v853 = vlaneseq
        %v854 = vshrl.u32 %v853, 7
        %v855 = vsub.s32 %v852, %v854
        %v856 = vrot.slane %v705, %v855
        %v858 = vunpack.c.l.s4 1983009808
        %v859 = vunpack.c.0.s8 %v858
        %v860 = vlaneseq
        %v861 = vshrl.u32 %v860, 7
        %v862 = vsub.s32 %v859, %v861
        %v863 = vrot.slane %v849, %v862
        %v864 = vcombine.high %v856, %v856
        %v865 = vcombine.high %v863, %v863
        %v866 = vcombine.high %v706, %v706
        %v868 = vunpack.c.l.s4 1983009808
        %v869 = vunpack.c.0.s8 %v868
        %v870 = vlaneseq
        %v871 = vshrl.u32 %v870, 7
        %v872 = vsub.s32 %v869, %v871
        %v873 = vrot.slane %v706, %v872
        %v875 = vunpack.c.l.s4 1983009808
        %v876 = vunpack.c.0.s8 %v875
        %v877 = vlaneseq
        %v878 = vshrl.u32 %v877, 7
        %v879 = vsub.s32 %v876, %v878
        %v880 = vrot.slane %v866, %v879
        %v881 = vcombine.high %v873, %v873
        %v882 = vcombine.high %v880, %v880
        %v883 = vcombine.high %v707, %v707
        %v885 = vunpack.c.l.s4 1983009808
        %v886 = vunpack.c.0.s8 %v885
        %v887 = vlaneseq
        %v888 = vshrl.u32 %v887, 7
        %v889 = vsub.s32 %v886, %v888
        %v890 = vrot.slane %v707, %v889
        %v892 = vunpack.c.l.s4 1983009808
        %v893 = vunpack.c.0.s8 %v892
        %v894 = vlaneseq
        %v895 = vshrl.u32 %v894, 7
        %v896 = vsub.s32 %v893, %v895
        %v897 = vrot.slane %v883, %v896
        %v898 = vcombine.high %v890, %v890
        %v899 = vcombine.high %v897, %v897
        %v900 = vcombine.high %v708, %v708
        %v902 = vunpack.c.l.s4 1983009808
        %v903 = vunpack.c.0.s8 %v902
        %v904 = vlaneseq
        %v905 = vshrl.u32 %v904, 7
        %v906 = vsub.s32 %v903, %v905
        %v907 = vrot.slane %v708, %v906
        %v909 = vunpack.c.l.s4 1983009808
        %v910 = vunpack.c.0.s8 %v909
        %v911 = vlaneseq
        %v912 = vshrl.u32 %v911, 7
        %v913 = vsub.s32 %v910, %v912
        %v914 = vrot.slane %v900, %v913
        %v915 = vcombine.high %v907, %v907
        %v916 = vcombine.high %v914, %v914
        %v917 = vcombine.high %v709, %v709
        %v919 = vunpack.c.l.s4 1983009808
        %v920 = vunpack.c.0.s8 %v919
        %v921 = vlaneseq
        %v922 = vshrl.u32 %v921, 7
        %v923 = vsub.s32 %v920, %v922
        %v924 = vrot.slane %v709, %v923
        %v926 = vunpack.c.l.s4 1983009808
        %v927 = vunpack.c.0.s8 %v926
        %v928 = vlaneseq
        %v929 = vshrl.u32 %v928, 7
        %v930 = vsub.s32 %v927, %v929
        %v931 = vrot.slane %v917, %v930
        %v932 = vcombine.high %v924, %v924
        %v933 = vcombine.high %v931, %v931
        %v934 = vcombine.high %v710, %v710
        %v936 = vunpack.c.l.s4 1983009808
        %v937 = vunpack.c.0.s8 %v936
        %v938 = vlaneseq
        %v939 = vshrl.u32 %v938, 7
        %v940 = vsub.s32 %v937, %v939
        %v941 = vrot.slane %v710, %v940
        %v943 = vunpack.c.l.s4 1983009808
        %v944 = vunpack.c.0.s8 %v943
        %v945 = vlaneseq
        %v946 = vshrl.u32 %v945, 7
        %v947 = vsub.s32 %v944, %v946
        %v948 = vrot.slane %v934, %v947
        %v949 = vcombine.high %v941, %v941
        %v950 = vcombine.high %v948, %v948
        %v951 = vcombine.high %v711, %v711
        %v953 = vunpack.c.l.s4 1983009808
        %v954 = vunpack.c.0.s8 %v953
        %v955 = vlaneseq
        %v956 = vshrl.u32 %v955, 7
        %v957 = vsub.s32 %v954, %v956
        %v958 = vrot.slane %v711, %v957
        %v960 = vunpack.c.l.s4 1983009808
        %v961 = vunpack.c.0.s8 %v960
        %v962 = vlaneseq
        %v963 = vshrl.u32 %v962, 7
        %v964 = vsub.s32 %v961, %v963
        %v965 = vrot.slane %v951, %v964
        %v966 = vcombine.high %v958, %v958
        %v967 = vcombine.high %v965, %v965
        %v968 = vcombine.high %v712, %v712
        %v970 = vunpack.c.l.s4 1983009808
        %v971 = vunpack.c.0.s8 %v970
        %v972 = vlaneseq
        %v973 = vshrl.u32 %v972, 7
        %v974 = vsub.s32 %v971, %v973
        %v975 = vrot.slane %v712, %v974
        %v977 = vunpack.c.l.s4 1983009808
        %v978 = vunpack.c.0.s8 %v977
        %v979 = vlaneseq
        %v980 = vshrl.u32 %v979, 7
        %v981 = vsub.s32 %v978, %v980
        %v982 = vrot.slane %v968, %v981
        %v983 = vcombine.high %v975, %v975
        %v984 = vcombine.high %v982, %v982
        %v985 = vcombine.high %v713, %v713
        %v987 = vunpack.c.l.s4 1983009808
        %v988 = vunpack.c.0.s8 %v987
        %v989 = vlaneseq
        %v990 = vshrl.u32 %v989, 7
        %v991 = vsub.s32 %v988, %v990
        %v992 = vrot.slane %v713, %v991
        %v994 = vunpack.c.l.s4 1983009808
        %v995 = vunpack.c.0.s8 %v994
        %v996 = vlaneseq
        %v997 = vshrl.u32 %v996, 7
        %v998 = vsub.s32 %v995, %v997
        %v999 = vrot.slane %v985, %v998
        %v1000 = vcombine.high %v992, %v992
        %v1001 = vcombine.high %v999, %v999
        %v1002 = vcombine.high %v714, %v714
        %v1004 = vunpack.c.l.s4 1983009808
        %v1005 = vunpack.c.0.s8 %v1004
        %v1006 = vlaneseq
        %v1007 = vshrl.u32 %v1006, 7
        %v1008 = vsub.s32 %v1005, %v1007
        %v1009 = vrot.slane %v714, %v1008
        %v1011 = vunpack.c.l.s4 1983009808
        %v1012 = vunpack.c.0.s8 %v1011
        %v1013 = vlaneseq
        %v1014 = vshrl.u32 %v1013, 7
        %v1015 = vsub.s32 %v1012, %v1014
        %v1016 = vrot.slane %v1002, %v1015
        %v1017 = vcombine.high %v1009, %v1009
        %v1018 = vcombine.high %v1016, %v1016
        %v1019 = vcombine.high %v715, %v715
        %v1021 = vunpack.c.l.s4 1983009808
        %v1022 = vunpack.c.0.s8 %v1021
        %v1023 = vlaneseq
        %v1024 = vshrl.u32 %v1023, 7
        %v1025 = vsub.s32 %v1022, %v1024
        %v1026 = vrot.slane %v715, %v1025
        %v1028 = vunpack.c.l.s4 1983009808
        %v1029 = vunpack.c.0.s8 %v1028
        %v1030 = vlaneseq
        %v1031 = vshrl.u32 %v1030, 7
        %v1032 = vsub.s32 %v1029, %v1031
        %v1033 = vrot.slane %v1019, %v1032
        %v1034 = vcombine.high %v1026, %v1026
        %v1035 = vcombine.high %v1033, %v1033
        %v1036 = vcombine.high %v716, %v716
        %v1038 = vunpack.c.l.s4 1983009808
        %v1039 = vunpack.c.0.s8 %v1038
        %v1040 = vlaneseq
        %v1041 = vshrl.u32 %v1040, 7
        %v1042 = vsub.s32 %v1039, %v1041
        %v1043 = vrot.slane %v716, %v1042
        %v1045 = vunpack.c.l.s4 1983009808
        %v1046 = vunpack.c.0.s8 %v1045
        %v1047 = vlaneseq
        %v1048 = vshrl.u32 %v1047, 7
        %v1049 = vsub.s32 %v1046, %v1048
        %v1050 = vrot.slane %v1036, %v1049
        %v1051 = vcombine.high %v1043, %v1043
        %v1052 = vcombine.high %v1050, %v1050
        %v1053 = vcombine.high %v717, %v717
        %v1055 = vunpack.c.l.s4 1983009808
        %v1056 = vunpack.c.0.s8 %v1055
        %v1057 = vlaneseq
        %v1058 = vshrl.u32 %v1057, 7
        %v1059 = vsub.s32 %v1056, %v1058
        %v1060 = vrot.slane %v717, %v1059
        %v1062 = vunpack.c.l.s4 1983009808
        %v1063 = vunpack.c.0.s8 %v1062
        %v1064 = vlaneseq
        %v1065 = vshrl.u32 %v1064, 7
        %v1066 = vsub.s32 %v1063, %v1065
        %v1067 = vrot.slane %v1053, %v1066
        %v1068 = vcombine.high %v1060, %v1060
        %v1069 = vcombine.high %v1067, %v1067
        %v1070 = vcombine.high %v718, %v718
        %v1072 = vunpack.c.l.s4 1983009808
        %v1073 = vunpack.c.0.s8 %v1072
        %v1074 = vlaneseq
        %v1075 = vshrl.u32 %v1074, 7
        %v1076 = vsub.s32 %v1073, %v1075
        %v1077 = vrot.slane %v718, %v1076
        %v1079 = vunpack.c.l.s4 1983009808
        %v1080 = vunpack.c.0.s8 %v1079
        %v1081 = vlaneseq
        %v1082 = vshrl.u32 %v1081, 7
        %v1083 = vsub.s32 %v1080, %v1082
        %v1084 = vrot.slane %v1070, %v1083
        %v1085 = vcombine.high %v1077, %v1077
        %v1086 = vcombine.high %v1084, %v1084
        %v1087 = vcombine.high %v719, %v719
        %v1089 = vunpack.c.l.s4 1983009808
        %v1090 = vunpack.c.0.s8 %v1089
        %v1091 = vlaneseq
        %v1092 = vshrl.u32 %v1091, 7
        %v1093 = vsub.s32 %v1090, %v1092
        %v1094 = vrot.slane %v719, %v1093
        %v1096 = vunpack.c.l.s4 1983009808
        %v1097 = vunpack.c.0.s8 %v1096
        %v1098 = vlaneseq
        %v1099 = vshrl.u32 %v1098, 7
        %v1100 = vsub.s32 %v1097, %v1099
        %v1101 = vrot.slane %v1087, %v1100
        %v1102 = vcombine.high %v1094, %v1094
        %v1103 = vcombine.high %v1101, %v1101
        %v1104 = vcombine.high %v720, %v720
        %v1106 = vunpack.c.l.s4 1983009808
        %v1107 = vunpack.c.0.s8 %v1106
        %v1108 = vlaneseq
        %v1109 = vshrl.u32 %v1108, 7
        %v1110 = vsub.s32 %v1107, %v1109
        %v1111 = vrot.slane %v720, %v1110
        %v1113 = vunpack.c.l.s4 1983009808
        %v1114 = vunpack.c.0.s8 %v1113
        %v1115 = vlaneseq
        %v1116 = vshrl.u32 %v1115, 7
        %v1117 = vsub.s32 %v1114, %v1116
        %v1118 = vrot.slane %v1104, %v1117
        %v1119 = vcombine.high %v1111, %v1111
        %v1120 = vcombine.high %v1118, %v1118
        %v1121 = vcombine.high %v721, %v721
        %v1123 = vunpack.c.l.s4 1983009808
        %v1124 = vunpack.c.0.s8 %v1123
        %v1125 = vlaneseq
        %v1126 = vshrl.u32 %v1125, 7
        %v1127 = vsub.s32 %v1124, %v1126
        %v1128 = vrot.slane %v721, %v1127
        %v1130 = vunpack.c.l.s4 1983009808
        %v1131 = vunpack.c.0.s8 %v1130
        %v1132 = vlaneseq
        %v1133 = vshrl.u32 %v1132, 7
        %v1134 = vsub.s32 %v1131, %v1133
        %v1135 = vrot.slane %v1121, %v1134
        %v1136 = vcombine.high %v1128, %v1128
        %v1137 = vcombine.high %v1135, %v1135
        %v1138 = vcombine.high %v722, %v722
        %v1140 = vunpack.c.l.s4 1983009808
        %v1141 = vunpack.c.0.s8 %v1140
        %v1142 = vlaneseq
        %v1143 = vshrl.u32 %v1142, 7
        %v1144 = vsub.s32 %v1141, %v1143
        %v1145 = vrot.slane %v722, %v1144
        %v1147 = vunpack.c.l.s4 1983009808
        %v1148 = vunpack.c.0.s8 %v1147
        %v1149 = vlaneseq
        %v1150 = vshrl.u32 %v1149, 7
        %v1151 = vsub.s32 %v1148, %v1150
        %v1152 = vrot.slane %v1138, %v1151
        %v1153 = vcombine.high %v1145, %v1145
        %v1154 = vcombine.high %v1152, %v1152
        %v1155 = vcombine.high %v723, %v723
        %v1157 = vunpack.c.l.s4 1983009808
        %v1158 = vunpack.c.0.s8 %v1157
        %v1159 = vlaneseq
        %v1160 = vshrl.u32 %v1159, 7
        %v1161 = vsub.s32 %v1158, %v1160
        %v1162 = vrot.slane %v723, %v1161
        %v1164 = vunpack.c.l.s4 1983009808
        %v1165 = vunpack.c.0.s8 %v1164
        %v1166 = vlaneseq
        %v1167 = vshrl.u32 %v1166, 7
        %v1168 = vsub.s32 %v1165, %v1167
        %v1169 = vrot.slane %v1155, %v1168
        %v1170 = vcombine.high %v1162, %v1162
        %v1171 = vcombine.high %v1169, %v1169
        %v1172 = vcombine.high %v724, %v724
        %v1174 = vunpack.c.l.s4 1983009808
        %v1175 = vunpack.c.0.s8 %v1174
        %v1176 = vlaneseq
        %v1177 = vshrl.u32 %v1176, 7
        %v1178 = vsub.s32 %v1175, %v1177
        %v1179 = vrot.slane %v724, %v1178
        %v1181 = vunpack.c.l.s4 1983009808
        %v1182 = vunpack.c.0.s8 %v1181
        %v1183 = vlaneseq
        %v1184 = vshrl.u32 %v1183, 7
        %v1185 = vsub.s32 %v1182, %v1184
        %v1186 = vrot.slane %v1172, %v1185
        %v1187 = vcombine.high %v1179, %v1179
        %v1188 = vcombine.high %v1186, %v1186
        %v1189 = vcombine.high %v725, %v725
        %v1191 = vunpack.c.l.s4 1983009808
        %v1192 = vunpack.c.0.s8 %v1191
        %v1193 = vlaneseq
        %v1194 = vshrl.u32 %v1193, 7
        %v1195 = vsub.s32 %v1192, %v1194
        %v1196 = vrot.slane %v725, %v1195
        %v1198 = vunpack.c.l.s4 1983009808
        %v1199 = vunpack.c.0.s8 %v1198
        %v1200 = vlaneseq
        %v1201 = vshrl.u32 %v1200, 7
        %v1202 = vsub.s32 %v1199, %v1201
        %v1203 = vrot.slane %v1189, %v1202
        %v1204 = vcombine.high %v1196, %v1196
        %v1205 = vcombine.high %v1203, %v1203
        %v1206 = vcombine.high %v726, %v726
        %v1208 = vunpack.c.l.s4 1983009808
        %v1209 = vunpack.c.0.s8 %v1208
        %v1210 = vlaneseq
        %v1211 = vshrl.u32 %v1210, 7
        %v1212 = vsub.s32 %v1209, %v1211
        %v1213 = vrot.slane %v726, %v1212
        %v1215 = vunpack.c.l.s4 1983009808
        %v1216 = vunpack.c.0.s8 %v1215
        %v1217 = vlaneseq
        %v1218 = vshrl.u32 %v1217, 7
        %v1219 = vsub.s32 %v1216, %v1218
        %v1220 = vrot.slane %v1206, %v1219
        %v1221 = vcombine.high %v1213, %v1213
        %v1222 = vcombine.high %v1220, %v1220
        %v1223 = vcombine.high %v727, %v727
        %v1225 = vunpack.c.l.s4 1983009808
        %v1226 = vunpack.c.0.s8 %v1225
        %v1227 = vlaneseq
        %v1228 = vshrl.u32 %v1227, 7
        %v1229 = vsub.s32 %v1226, %v1228
        %v1230 = vrot.slane %v727, %v1229
        %v1232 = vunpack.c.l.s4 1983009808
        %v1233 = vunpack.c.0.s8 %v1232
        %v1234 = vlaneseq
        %v1235 = vshrl.u32 %v1234, 7
        %v1236 = vsub.s32 %v1233, %v1235
        %v1237 = vrot.slane %v1223, %v1236
        %v1238 = vcombine.high %v1230, %v1230
        %v1239 = vcombine.high %v1237, %v1237
        %v1240 = vcombine.high %v728, %v728
        %v1242 = vunpack.c.l.s4 1983009808
        %v1243 = vunpack.c.0.s8 %v1242
        %v1244 = vlaneseq
        %v1245 = vshrl.u32 %v1244, 7
        %v1246 = vsub.s32 %v1243, %v1245
        %v1247 = vrot.slane %v728, %v1246
        %v1249 = vunpack.c.l.s4 1983009808
        %v1250 = vunpack.c.0.s8 %v1249
        %v1251 = vlaneseq
        %v1252 = vshrl.u32 %v1251, 7
        %v1253 = vsub.s32 %v1250, %v1252
        %v1254 = vrot.slane %v1240, %v1253
        %v1255 = vcombine.high %v1247, %v1247
        %v1256 = vcombine.high %v1254, %v1254
        %v1257 = vcombine.high %v729, %v729
        %v1259 = vunpack.c.l.s4 1983009808
        %v1260 = vunpack.c.0.s8 %v1259
        %v1261 = vlaneseq
        %v1262 = vshrl.u32 %v1261, 7
        %v1263 = vsub.s32 %v1260, %v1262
        %v1264 = vrot.slane %v729, %v1263
        %v1266 = vunpack.c.l.s4 1983009808
        %v1267 = vunpack.c.0.s8 %v1266
        %v1268 = vlaneseq
        %v1269 = vshrl.u32 %v1268, 7
        %v1270 = vsub.s32 %v1267, %v1269
        %v1271 = vrot.slane %v1257, %v1270
        %v1272 = vcombine.high %v1264, %v1264
        %v1273 = vcombine.high %v1271, %v1271
        %v1274 = vcombine.high %v730, %v730
        %v1276 = vunpack.c.l.s4 1983009808
        %v1277 = vunpack.c.0.s8 %v1276
        %v1278 = vlaneseq
        %v1279 = vshrl.u32 %v1278, 7
        %v1280 = vsub.s32 %v1277, %v1279
        %v1281 = vrot.slane %v730, %v1280
        %v1283 = vunpack.c.l.s4 1983009808
        %v1284 = vunpack.c.0.s8 %v1283
        %v1285 = vlaneseq
        %v1286 = vshrl.u32 %v1285, 7
        %v1287 = vsub.s32 %v1284, %v1286
        %v1288 = vrot.slane %v1274, %v1287
        %v1289 = vcombine.high %v1281, %v1281
        %v1290 = vcombine.high %v1288, %v1288
        %v1291 = vcombine.high %v731, %v731
        %v1293 = vunpack.c.l.s4 1983009808
        %v1294 = vunpack.c.0.s8 %v1293
        %v1295 = vlaneseq
        %v1296 = vshrl.u32 %v1295, 7
        %v1297 = vsub.s32 %v1294, %v1296
        %v1298 = vrot.slane %v731, %v1297
        %v1300 = vunpack.c.l.s4 1983009808
        %v1301 = vunpack.c.0.s8 %v1300
        %v1302 = vlaneseq
        %v1303 = vshrl.u32 %v1302, 7
        %v1304 = vsub.s32 %v1301, %v1303
        %v1305 = vrot.slane %v1291, %v1304
        %v1306 = vcombine.high %v1298, %v1298
        %v1307 = vcombine.high %v1305, %v1305
        %v1436 = vrot.slane %v771, 7
        %v1437 = vrot.slane %v1436, 2
        %v1438 = vrot.slane %v779, 7
        %v1439 = vrot.slane %v1438, 2
        %v1440 = vrot.slane %v778, 7
        %v1441 = vrot.slane %v1440, 2
        %v1442 = vrot.slane %v780, 7
        %v1443 = vrot.slane %v1442, 2
        %v1444 = vrot.slane %v788, 7
        %v1445 = vrot.slane %v1444, 2
        %v1446 = vrot.slane %v796, 7
        %v1447 = vrot.slane %v1446, 2
        %v1448 = vrot.slane %v795, 7
        %v1449 = vrot.slane %v1448, 2
        %v1450 = vrot.slane %v797, 7
        %v1451 = vrot.slane %v1450, 2
        %v1452 = vrot.slane %v839, 7
        %v1453 = vrot.slane %v1452, 2
        %v1454 = vrot.slane %v847, 7
        %v1455 = vrot.slane %v1454, 2
        %v1456 = vrot.slane %v846, 7
        %v1457 = vrot.slane %v1456, 2
        %v1458 = vrot.slane %v848, 7
        %v1459 = vrot.slane %v1458, 2
        %v1460 = vrot.slane %v856, 7
        %v1461 = vrot.slane %v1460, 2
        %v1462 = vrot.slane %v864, 7
        %v1463 = vrot.slane %v1462, 2
        %v1464 = vrot.slane %v863, 7
        %v1465 = vrot.slane %v1464, 2
        %v1466 = vrot.slane %v865, 7
        %v1467 = vrot.slane %v1466, 2
        %v1468 = vrot.slane %v907, 7
        %v1469 = vrot.slane %v1468, 2
        %v1470 = vrot.slane %v915, 7
        %v1471 = vrot.slane %v1470, 2
        %v1472 = vrot.slane %v914, 7
        %v1473 = vrot.slane %v1472, 2
        %v1474 = vrot.slane %v916, 7
        %v1475 = vrot.slane %v1474, 2
        %v1476 = vrot.slane %v924, 7
        %v1477 = vrot.slane %v1476, 2
        %v1478 = vrot.slane %v932, 7
        %v1479 = vrot.slane %v1478, 2
        %v1480 = vrot.slane %v931, 7
        %v1481 = vrot.slane %v1480, 2
        %v1482 = vrot.slane %v933, 7
        %v1483 = vrot.slane %v1482, 2
        %v1484 = vrot.slane %v975, 7
        %v1485 = vrot.slane %v1484, 2
        %v1486 = vrot.slane %v983, 7
        %v1487 = vrot.slane %v1486, 2
        %v1488 = vrot.slane %v982, 7
        %v1489 = vrot.slane %v1488, 2
        %v1490 = vrot.slane %v984, 7
        %v1491 = vrot.slane %v1490, 2
        %v1492 = vrot.slane %v992, 7
        %v1493 = vrot.slane %v1492, 2
        %v1494 = vrot.slane %v1000, 7
        %v1495 = vrot.slane %v1494, 2
        %v1496 = vrot.slane %v999, 7
        %v1497 = vrot.slane %v1496, 2
        %v1498 = vrot.slane %v1001, 7
        %v1499 = vrot.slane %v1498, 2
        %v1500 = vrot.slane %v1043, 7
        %v1501 = vrot.slane %v1500, 2
        %v1502 = vrot.slane %v1051, 7
        %v1503 = vrot.slane %v1502, 2
        %v1504 = vrot.slane %v1050, 7
        %v1505 = vrot.slane %v1504, 2
        %v1506 = vrot.slane %v1052, 7
        %v1507 = vrot.slane %v1506, 2
        %v1508 = vrot.slane %v1060, 7
        %v1509 = vrot.slane %v1508, 2
        %v1510 = vrot.slane %v1068, 7
        %v1511 = vrot.slane %v1510, 2
        %v1512 = vrot.slane %v1067, 7
        %v1513 = vrot.slane %v1512, 2
        %v1514 = vrot.slane %v1069, 7
        %v1515 = vrot.slane %v1514, 2
        %v1516 = vrot.slane %v1111, 7
        %v1517 = vrot.slane %v1516, 2
        %v1518 = vrot.slane %v1119, 7
        %v1519 = vrot.slane %v1518, 2
        %v1520 = vrot.slane %v1118, 7
        %v1521 = vrot.slane %v1520, 2
        %v1522 = vrot.slane %v1120, 7
        %v1523 = vrot.slane %v1522, 2
        %v1524 = vrot.slane %v1128, 7
        %v1525 = vrot.slane %v1524, 2
        %v1526 = vrot.slane %v1136, 7
        %v1527 = vrot.slane %v1526, 2
        %v1528 = vrot.slane %v1135, 7
        %v1529 = vrot.slane %v1528, 2
        %v1530 = vrot.slane %v1137, 7
        %v1531 = vrot.slane %v1530, 2
        %v1532 = vrot.slane %v1179, 7
        %v1533 = vrot.slane %v1532, 2
        %v1534 = vrot.slane %v1187, 7
        %v1535 = vrot.slane %v1534, 2
        %v1536 = vrot.slane %v1186, 7
        %v1537 = vrot.slane %v1536, 2
        %v1538 = vrot.slane %v1188, 7
        %v1539 = vrot.slane %v1538, 2
        %v1540 = vrot.slane %v1196, 7
        %v1541 = vrot.slane %v1540, 2
        %v1542 = vrot.slane %v1204, 7
        %v1543 = vrot.slane %v1542, 2
        %v1544 = vrot.slane %v1203, 7
        %v1545 = vrot.slane %v1544, 2
        %v1546 = vrot.slane %v1205, 7
        %v1547 = vrot.slane %v1546, 2
        %v1548 = vrot.slane %v1247, 7
        %v1549 = vrot.slane %v1548, 2
        %v1550 = vrot.slane %v1255, 7
        %v1551 = vrot.slane %v1550, 2
        %v1552 = vrot.slane %v1254, 7
        %v1553 = vrot.slane %v1552, 2
        %v1554 = vrot.slane %v1256, 7
        %v1555 = vrot.slane %v1554, 2
        %v1556 = vrot.slane %v1264, 7
        %v1557 = vrot.slane %v1556, 2
        %v1558 = vrot.slane %v1272, 7
        %v1559 = vrot.slane %v1558, 2
        %v1560 = vrot.slane %v1271, 7
        %v1561 = vrot.slane %v1560, 2
        %v1562 = vrot.slane %v1273, 7
        %v1563 = vrot.slane %v1562, 2
        %v1628 = vmax.f32 %v771, %v1437
        %v1629 = vmax.f32 %v779, %v1439
        %v1630 = vmax.f32 %v778, %v1441
        %v1631 = vmax.f32 %v780, %v1443
        %v1632 = vmax.f32 %v788, %v1445
        %v1633 = vmax.f32 %v796, %v1447
        %v1634 = vmax.f32 %v795, %v1449
        %v1635 = vmax.f32 %v797, %v1451
        %v1636 = vmax.f32 %v839, %v1453
        %v1637 = vmax.f32 %v847, %v1455
        %v1638 = vmax.f32 %v846, %v1457
        %v1639 = vmax.f32 %v848, %v1459
        %v1640 = vmax.f32 %v856, %v1461
        %v1641 = vmax.f32 %v864, %v1463
        %v1642 = vmax.f32 %v863, %v1465
        %v1643 = vmax.f32 %v865, %v1467
        %v1644 = vmax.f32 %v907, %v1469
        %v1645 = vmax.f32 %v915, %v1471
        %v1646 = vmax.f32 %v914, %v1473
        %v1647 = vmax.f32 %v916, %v1475
        %v1648 = vmax.f32 %v924, %v1477
        %v1649 = vmax.f32 %v932, %v1479
        %v1650 = vmax.f32 %v931, %v1481
        %v1651 = vmax.f32 %v933, %v1483
        %v1652 = vmax.f32 %v975, %v1485
        %v1653 = vmax.f32 %v983, %v1487
        %v1654 = vmax.f32 %v982, %v1489
        %v1655 = vmax.f32 %v984, %v1491
        %v1656 = vmax.f32 %v992, %v1493
        %v1657 = vmax.f32 %v1000, %v1495
        %v1658 = vmax.f32 %v999, %v1497
        %v1659 = vmax.f32 %v1001, %v1499
        %v1660 = vmax.f32 %v1043, %v1501
        %v1661 = vmax.f32 %v1051, %v1503
        %v1662 = vmax.f32 %v1050, %v1505
        %v1663 = vmax.f32 %v1052, %v1507
        %v1664 = vmax.f32 %v1060, %v1509
        %v1665 = vmax.f32 %v1068, %v1511
        %v1666 = vmax.f32 %v1067, %v1513
        %v1667 = vmax.f32 %v1069, %v1515
        %v1668 = vmax.f32 %v1111, %v1517
        %v1669 = vmax.f32 %v1119, %v1519
        %v1670 = vmax.f32 %v1118, %v1521
        %v1671 = vmax.f32 %v1120, %v1523
        %v1672 = vmax.f32 %v1128, %v1525
        %v1673 = vmax.f32 %v1136, %v1527
        %v1674 = vmax.f32 %v1135, %v1529
        %v1675 = vmax.f32 %v1137, %v1531
        %v1676 = vmax.f32 %v1179, %v1533
        %v1677 = vmax.f32 %v1187, %v1535
        %v1678 = vmax.f32 %v1186, %v1537
        %v1679 = vmax.f32 %v1188, %v1539
        %v1680 = vmax.f32 %v1196, %v1541
        %v1681 = vmax.f32 %v1204, %v1543
        %v1682 = vmax.f32 %v1203, %v1545
        %v1683 = vmax.f32 %v1205, %v1547
        %v1684 = vmax.f32 %v1247, %v1549
        %v1685 = vmax.f32 %v1255, %v1551
        %v1686 = vmax.f32 %v1254, %v1553
        %v1687 = vmax.f32 %v1256, %v1555
        %v1688 = vmax.f32 %v1264, %v1557
        %v1689 = vmax.f32 %v1272, %v1559
        %v1690 = vmax.f32 %v1271, %v1561
        %v1691 = vmax.f32 %v1273, %v1563
        %v1692 = vrot.slane %v805, 7
        %v1693 = vrot.slane %v1692, 2
        %v1694 = vrot.slane %v813, 7
        %v1695 = vrot.slane %v1694, 2
        %v1696 = vrot.slane %v812, 7
        %v1697 = vrot.slane %v1696, 2
        %v1698 = vrot.slane %v814, 7
        %v1699 = vrot.slane %v1698, 2
        %v1700 = vrot.slane %v822, 7
        %v1701 = vrot.slane %v1700, 2
        %v1702 = vrot.slane %v830, 7
        %v1703 = vrot.slane %v1702, 2
        %v1704 = vrot.slane %v829, 7
        %v1705 = vrot.slane %v1704, 2
        %v1706 = vrot.slane %v831, 7
        %v1707 = vrot.slane %v1706, 2
        %v1708 = vrot.slane %v873, 7
        %v1709 = vrot.slane %v1708, 2
        %v1710 = vrot.slane %v881, 7
        %v1711 = vrot.slane %v1710, 2
        %v1712 = vrot.slane %v880, 7
        %v1713 = vrot.slane %v1712, 2
        %v1714 = vrot.slane %v882, 7
        %v1715 = vrot.slane %v1714, 2
        %v1716 = vrot.slane %v890, 7
        %v1717 = vrot.slane %v1716, 2
        %v1718 = vrot.slane %v898, 7
        %v1719 = vrot.slane %v1718, 2
        %v1720 = vrot.slane %v897, 7
        %v1721 = vrot.slane %v1720, 2
        %v1722 = vrot.slane %v899, 7
        %v1723 = vrot.slane %v1722, 2
        %v1724 = vrot.slane %v941, 7
        %v1725 = vrot.slane %v1724, 2
        %v1726 = vrot.slane %v949, 7
        %v1727 = vrot.slane %v1726, 2
        %v1728 = vrot.slane %v948, 7
        %v1729 = vrot.slane %v1728, 2
        %v1730 = vrot.slane %v950, 7
        %v1731 = vrot.slane %v1730, 2
        %v1732 = vrot.slane %v958, 7
        %v1733 = vrot.slane %v1732, 2
        %v1734 = vrot.slane %v966, 7
        %v1735 = vrot.slane %v1734, 2
        %v1736 = vrot.slane %v965, 7
        %v1737 = vrot.slane %v1736, 2
        %v1738 = vrot.slane %v967, 7
        %v1739 = vrot.slane %v1738, 2
        %v1740 = vrot.slane %v1009, 7
        %v1741 = vrot.slane %v1740, 2
        %v1742 = vrot.slane %v1017, 7
        %v1743 = vrot.slane %v1742, 2
        %v1744 = vrot.slane %v1016, 7
        %v1745 = vrot.slane %v1744, 2
        %v1746 = vrot.slane %v1018, 7
        %v1747 = vrot.slane %v1746, 2
        %v1748 = vrot.slane %v1026, 7
        %v1749 = vrot.slane %v1748, 2
        %v1750 = vrot.slane %v1034, 7
        %v1751 = vrot.slane %v1750, 2
        %v1752 = vrot.slane %v1033, 7
        %v1753 = vrot.slane %v1752, 2
        %v1754 = vrot.slane %v1035, 7
        %v1755 = vrot.slane %v1754, 2
        %v1756 = vrot.slane %v1077, 7
        %v1757 = vrot.slane %v1756, 2
        %v1758 = vrot.slane %v1085, 7
        %v1759 = vrot.slane %v1758, 2
        %v1760 = vrot.slane %v1084, 7
        %v1761 = vrot.slane %v1760, 2
        %v1762 = vrot.slane %v1086, 7
        %v1763 = vrot.slane %v1762, 2
        %v1764 = vrot.slane %v1094, 7
        %v1765 = vrot.slane %v1764, 2
        %v1766 = vrot.slane %v1102, 7
        %v1767 = vrot.slane %v1766, 2
        %v1768 = vrot.slane %v1101, 7
        %v1769 = vrot.slane %v1768, 2
        %v1770 = vrot.slane %v1103, 7
        %v1771 = vrot.slane %v1770, 2
        %v1772 = vrot.slane %v1145, 7
        %v1773 = vrot.slane %v1772, 2
        %v1774 = vrot.slane %v1153, 7
        %v1775 = vrot.slane %v1774, 2
        %v1776 = vrot.slane %v1152, 7
        %v1777 = vrot.slane %v1776, 2
        %v1778 = vrot.slane %v1154, 7
        %v1779 = vrot.slane %v1778, 2
        %v1780 = vrot.slane %v1162, 7
        %v1781 = vrot.slane %v1780, 2
        %v1782 = vrot.slane %v1170, 7
        %v1783 = vrot.slane %v1782, 2
        %v1784 = vrot.slane %v1169, 7
        %v1785 = vrot.slane %v1784, 2
        %v1786 = vrot.slane %v1171, 7
        %v1787 = vrot.slane %v1786, 2
        %v1788 = vrot.slane %v1213, 7
        %v1789 = vrot.slane %v1788, 2
        %v1790 = vrot.slane %v1221, 7
        %v1791 = vrot.slane %v1790, 2
        %v1792 = vrot.slane %v1220, 7
        %v1793 = vrot.slane %v1792, 2
        %v1794 = vrot.slane %v1222, 7
        %v1795 = vrot.slane %v1794, 2
        %v1796 = vrot.slane %v1230, 7
        %v1797 = vrot.slane %v1796, 2
        %v1798 = vrot.slane %v1238, 7
        %v1799 = vrot.slane %v1798, 2
        %v1800 = vrot.slane %v1237, 7
        %v1801 = vrot.slane %v1800, 2
        %v1802 = vrot.slane %v1239, 7
        %v1803 = vrot.slane %v1802, 2
        %v1804 = vrot.slane %v1281, 7
        %v1805 = vrot.slane %v1804, 2
        %v1806 = vrot.slane %v1289, 7
        %v1807 = vrot.slane %v1806, 2
        %v1808 = vrot.slane %v1288, 7
        %v1809 = vrot.slane %v1808, 2
        %v1810 = vrot.slane %v1290, 7
        %v1811 = vrot.slane %v1810, 2
        %v1812 = vrot.slane %v1298, 7
        %v1813 = vrot.slane %v1812, 2
        %v1814 = vrot.slane %v1306, 7
        %v1815 = vrot.slane %v1814, 2
        %v1816 = vrot.slane %v1305, 7
        %v1817 = vrot.slane %v1816, 2
        %v1818 = vrot.slane %v1307, 7
        %v1819 = vrot.slane %v1818, 2
        %v1884 = vmax.f32 %v805, %v1693
        %v1885 = vmax.f32 %v813, %v1695
        %v1886 = vmax.f32 %v812, %v1697
        %v1887 = vmax.f32 %v814, %v1699
        %v1888 = vmax.f32 %v822, %v1701
        %v1889 = vmax.f32 %v830, %v1703
        %v1890 = vmax.f32 %v829, %v1705
        %v1891 = vmax.f32 %v831, %v1707
        %v1892 = vmax.f32 %v873, %v1709
        %v1893 = vmax.f32 %v881, %v1711
        %v1894 = vmax.f32 %v880, %v1713
        %v1895 = vmax.f32 %v882, %v1715
        %v1896 = vmax.f32 %v890, %v1717
        %v1897 = vmax.f32 %v898, %v1719
        %v1898 = vmax.f32 %v897, %v1721
        %v1899 = vmax.f32 %v899, %v1723
        %v1900 = vmax.f32 %v941, %v1725
        %v1901 = vmax.f32 %v949, %v1727
        %v1902 = vmax.f32 %v948, %v1729
        %v1903 = vmax.f32 %v950, %v1731
        %v1904 = vmax.f32 %v958, %v1733
        %v1905 = vmax.f32 %v966, %v1735
        %v1906 = vmax.f32 %v965, %v1737
        %v1907 = vmax.f32 %v967, %v1739
        %v1908 = vmax.f32 %v1009, %v1741
        %v1909 = vmax.f32 %v1017, %v1743
        %v1910 = vmax.f32 %v1016, %v1745
        %v1911 = vmax.f32 %v1018, %v1747
        %v1912 = vmax.f32 %v1026, %v1749
        %v1913 = vmax.f32 %v1034, %v1751
        %v1914 = vmax.f32 %v1033, %v1753
        %v1915 = vmax.f32 %v1035, %v1755
        %v1916 = vmax.f32 %v1077, %v1757
        %v1917 = vmax.f32 %v1085, %v1759
        %v1918 = vmax.f32 %v1084, %v1761
        %v1919 = vmax.f32 %v1086, %v1763
        %v1920 = vmax.f32 %v1094, %v1765
        %v1921 = vmax.f32 %v1102, %v1767
        %v1922 = vmax.f32 %v1101, %v1769
        %v1923 = vmax.f32 %v1103, %v1771
        %v1924 = vmax.f32 %v1145, %v1773
        %v1925 = vmax.f32 %v1153, %v1775
        %v1926 = vmax.f32 %v1152, %v1777
        %v1927 = vmax.f32 %v1154, %v1779
        %v1928 = vmax.f32 %v1162, %v1781
        %v1929 = vmax.f32 %v1170, %v1783
        %v1930 = vmax.f32 %v1169, %v1785
        %v1931 = vmax.f32 %v1171, %v1787
        %v1932 = vmax.f32 %v1213, %v1789
        %v1933 = vmax.f32 %v1221, %v1791
        %v1934 = vmax.f32 %v1220, %v1793
        %v1935 = vmax.f32 %v1222, %v1795
        %v1936 = vmax.f32 %v1230, %v1797
        %v1937 = vmax.f32 %v1238, %v1799
        %v1938 = vmax.f32 %v1237, %v1801
        %v1939 = vmax.f32 %v1239, %v1803
        %v1940 = vmax.f32 %v1281, %v1805
        %v1941 = vmax.f32 %v1289, %v1807
        %v1942 = vmax.f32 %v1288, %v1809
        %v1943 = vmax.f32 %v1290, %v1811
        %v1944 = vmax.f32 %v1298, %v1813
        %v1945 = vmax.f32 %v1306, %v1815
        %v1946 = vmax.f32 %v1305, %v1817
        %v1947 = vmax.f32 %v1307, %v1819
        %v1948 = vmax.f32 %v1628, %v1884
        %v1949 = vmax.f32 %v1629, %v1885
        %v1950 = vmax.f32 %v1630, %v1886
        %v1951 = vmax.f32 %v1631, %v1887
        %v1952 = vmax.f32 %v1632, %v1888
        %v1953 = vmax.f32 %v1633, %v1889
        %v1954 = vmax.f32 %v1634, %v1890
        %v1955 = vmax.f32 %v1635, %v1891
        %v1956 = vmax.f32 %v1636, %v1892
        %v1957 = vmax.f32 %v1637, %v1893
        %v1958 = vmax.f32 %v1638, %v1894
        %v1959 = vmax.f32 %v1639, %v1895
        %v1960 = vmax.f32 %v1640, %v1896
        %v1961 = vmax.f32 %v1641, %v1897
        %v1962 = vmax.f32 %v1642, %v1898
        %v1963 = vmax.f32 %v1643, %v1899
        %v1964 = vmax.f32 %v1644, %v1900
        %v1965 = vmax.f32 %v1645, %v1901
        %v1966 = vmax.f32 %v1646, %v1902
        %v1967 = vmax.f32 %v1647, %v1903
        %v1968 = vmax.f32 %v1648, %v1904
        %v1969 = vmax.f32 %v1649, %v1905
        %v1970 = vmax.f32 %v1650, %v1906
        %v1971 = vmax.f32 %v1651, %v1907
        %v1972 = vmax.f32 %v1652, %v1908
        %v1973 = vmax.f32 %v1653, %v1909
        %v1974 = vmax.f32 %v1654, %v1910
        %v1975 = vmax.f32 %v1655, %v1911
        %v1976 = vmax.f32 %v1656, %v1912
        %v1977 = vmax.f32 %v1657, %v1913
        %v1978 = vmax.f32 %v1658, %v1914
        %v1979 = vmax.f32 %v1659, %v1915
        %v1980 = vmax.f32 %v1660, %v1916
        %v1981 = vmax.f32 %v1661, %v1917
        %v1982 = vmax.f32 %v1662, %v1918
        %v1983 = vmax.f32 %v1663, %v1919
        %v1984 = vmax.f32 %v1664, %v1920
        %v1985 = vmax.f32 %v1665, %v1921
        %v1986 = vmax.f32 %v1666, %v1922
        %v1987 = vmax.f32 %v1667, %v1923
        %v1988 = vmax.f32 %v1668, %v1924
        %v1989 = vmax.f32 %v1669, %v1925
        %v1990 = vmax.f32 %v1670, %v1926
        %v1991 = vmax.f32 %v1671, %v1927
        %v1992 = vmax.f32 %v1672, %v1928
        %v1993 = vmax.f32 %v1673, %v1929
        %v1994 = vmax.f32 %v1674, %v1930
        %v1995 = vmax.f32 %v1675, %v1931
        %v1996 = vmax.f32 %v1676, %v1932
        %v1997 = vmax.f32 %v1677, %v1933
        %v1998 = vmax.f32 %v1678, %v1934
        %v1999 = vmax.f32 %v1679, %v1935
        %v2000 = vmax.f32 %v1680, %v1936
        %v2001 = vmax.f32 %v1681, %v1937
        %v2002 = vmax.f32 %v1682, %v1938
        %v2003 = vmax.f32 %v1683, %v1939
        %v2004 = vmax.f32 %v1684, %v1940
        %v2005 = vmax.f32 %v1685, %v1941
        %v2006 = vmax.f32 %v1686, %v1942
        %v2007 = vmax.f32 %v1687, %v1943
        %v2008 = vmax.f32 %v1688, %v1944
        %v2009 = vmax.f32 %v1689, %v1945
        %v2010 = vmax.f32 %v1690, %v1946
        %v2011 = vmax.f32 %v1691, %v1947
        %vm2012 = vcmask 261120
        %2013 = vst.msk [vmem:[#allocation2] sm:$0xff] %vm2012, 0.0
        %vm2014 = vcmask 254976
        %2015 = vst.msk [vmem:[#allocation2 + $0x8] sm:$0x3] %vm2014, 0.0
        %2016 = vst.msk [vmem:[#allocation2 + $0x10] sm:$0xff] %vm2012, 0.0
        %2017 = vst.msk [vmem:[#allocation2 + $0x18] sm:$0x3] %vm2014, 0.0
        %2018 = vst.msk [vmem:[#allocation2 + $0x20] sm:$0xff] %vm2012, 0.0
        %2019 = vst.msk [vmem:[#allocation2 + $0x28] sm:$0x3] %vm2014, 0.0
        %2020 = vst.msk [vmem:[#allocation2 + $0x30] sm:$0xff] %vm2012, 0.0
        %2021 = vst.msk [vmem:[#allocation2 + $0x38] sm:$0x3] %vm2014, 0.0
        %2022 = vst.msk [vmem:[#allocation2 + $0x40] sm:$0xff] %vm2012, 0.0
        %2023 = vst.msk [vmem:[#allocation2 + $0x48] sm:$0x3] %vm2014, 0.0
        %2024 = vst.msk [vmem:[#allocation2 + $0x50] sm:$0xff] %vm2012, 0.0
        %2025 = vst.msk [vmem:[#allocation2 + $0x58] sm:$0x3] %vm2014, 0.0
        %2026 = vst.msk [vmem:[#allocation2 + $0x60] sm:$0xff] %vm2012, 0.0
        %2027 = vst.msk [vmem:[#allocation2 + $0x68] sm:$0x3] %vm2014, 0.0
        %2028 = vst.msk [vmem:[#allocation2 + $0x70] sm:$0xff] %vm2012, 0.0
        %2029 = vst.msk [vmem:[#allocation2 + $0x78] sm:$0x3] %vm2014, 0.0
        %2030 = vst.msk [vmem:[#allocation2 + $0x80] sm:$0xff] %vm2012, 0.0
        %2031 = vst.msk [vmem:[#allocation2 + $0x88] sm:$0x3] %vm2014, 0.0
        %2032 = vst.msk [vmem:[#allocation2 + $0x90] sm:$0xff] %vm2012, 0.0
        %2033 = vst.msk [vmem:[#allocation2 + $0x98] sm:$0x3] %vm2014, 0.0
        %v2098 = vlaneseq
        %v2099 = vshrl.u32 %v2098, 7
        %v2100 = vsub.s32 0, %v2099
        %v2101 = vrot.slane %v1948, %v2100
        %v2102 = vlaneseq
        %v2103 = vshrl.u32 %v2102, 7
        %v2104 = vsub.s32 0, %v2103
        %v2105 = vrot.slane %v1949, %v2104
        %v2106 = vlaneseq
        %v2107 = vshrl.u32 %v2106, 7
        %v2108 = vsub.s32 0, %v2107
        %v2109 = vrot.slane %v1950, %v2108
        %v2110 = vlaneseq
        %v2111 = vshrl.u32 %v2110, 7
        %v2112 = vsub.s32 0, %v2111
        %v2113 = vrot.slane %v1951, %v2112
        %v2114 = vlaneseq
        %v2115 = vshrl.u32 %v2114, 7
        %v2116 = vsub.s32 0, %v2115
        %v2117 = vrot.slane %v1952, %v2116
        %v2118 = vlaneseq
        %v2119 = vshrl.u32 %v2118, 7
        %v2120 = vsub.s32 0, %v2119
        %v2121 = vrot.slane %v1953, %v2120
        %v2122 = vlaneseq
        %v2123 = vshrl.u32 %v2122, 7
        %v2124 = vsub.s32 0, %v2123
        %v2125 = vrot.slane %v1954, %v2124
        %v2126 = vlaneseq
        %v2127 = vshrl.u32 %v2126, 7
        %v2128 = vsub.s32 0, %v2127
        %v2129 = vrot.slane %v1955, %v2128
        %v2130 = vlaneseq
        %v2131 = vshrl.u32 %v2130, 7
        %v2132 = vsub.s32 0, %v2131
        %v2133 = vrot.slane %v1956, %v2132
        %v2134 = vlaneseq
        %v2135 = vshrl.u32 %v2134, 7
        %v2136 = vsub.s32 0, %v2135
        %v2137 = vrot.slane %v1957, %v2136
        %v2138 = vlaneseq
        %v2139 = vshrl.u32 %v2138, 7
        %v2140 = vsub.s32 0, %v2139
        %v2141 = vrot.slane %v1958, %v2140
        %v2142 = vlaneseq
        %v2143 = vshrl.u32 %v2142, 7
        %v2144 = vsub.s32 0, %v2143
        %v2145 = vrot.slane %v1959, %v2144
        %v2146 = vlaneseq
        %v2147 = vshrl.u32 %v2146, 7
        %v2148 = vsub.s32 0, %v2147
        %v2149 = vrot.slane %v1960, %v2148
        %v2150 = vlaneseq
        %v2151 = vshrl.u32 %v2150, 7
        %v2152 = vsub.s32 0, %v2151
        %v2153 = vrot.slane %v1961, %v2152
        %v2154 = vlaneseq
        %v2155 = vshrl.u32 %v2154, 7
        %v2156 = vsub.s32 0, %v2155
        %v2157 = vrot.slane %v1962, %v2156
        %v2158 = vlaneseq
        %v2159 = vshrl.u32 %v2158, 7
        %v2160 = vsub.s32 0, %v2159
        %v2161 = vrot.slane %v1963, %v2160
        %v2162 = vlaneseq
        %v2163 = vshrl.u32 %v2162, 7
        %v2164 = vsub.s32 0, %v2163
        %v2165 = vrot.slane %v1964, %v2164
        %v2166 = vlaneseq
        %v2167 = vshrl.u32 %v2166, 7
        %v2168 = vsub.s32 0, %v2167
        %v2169 = vrot.slane %v1965, %v2168
        %v2170 = vlaneseq
        %v2171 = vshrl.u32 %v2170, 7
        %v2172 = vsub.s32 0, %v2171
        %v2173 = vrot.slane %v1966, %v2172
        %v2174 = vlaneseq
        %v2175 = vshrl.u32 %v2174, 7
        %v2176 = vsub.s32 0, %v2175
        %v2177 = vrot.slane %v1967, %v2176
        %v2178 = vlaneseq
        %v2179 = vshrl.u32 %v2178, 7
        %v2180 = vsub.s32 0, %v2179
        %v2181 = vrot.slane %v1968, %v2180
        %v2182 = vlaneseq
        %v2183 = vshrl.u32 %v2182, 7
        %v2184 = vsub.s32 0, %v2183
        %v2185 = vrot.slane %v1969, %v2184
        %v2186 = vlaneseq
        %v2187 = vshrl.u32 %v2186, 7
        %v2188 = vsub.s32 0, %v2187
        %v2189 = vrot.slane %v1970, %v2188
        %v2190 = vlaneseq
        %v2191 = vshrl.u32 %v2190, 7
        %v2192 = vsub.s32 0, %v2191
        %v2193 = vrot.slane %v1971, %v2192
        %v2194 = vlaneseq
        %v2195 = vshrl.u32 %v2194, 7
        %v2196 = vsub.s32 0, %v2195
        %v2197 = vrot.slane %v1972, %v2196
        %v2198 = vlaneseq
        %v2199 = vshrl.u32 %v2198, 7
        %v2200 = vsub.s32 0, %v2199
        %v2201 = vrot.slane %v1973, %v2200
        %v2202 = vlaneseq
        %v2203 = vshrl.u32 %v2202, 7
        %v2204 = vsub.s32 0, %v2203
        %v2205 = vrot.slane %v1974, %v2204
        %v2206 = vlaneseq
        %v2207 = vshrl.u32 %v2206, 7
        %v2208 = vsub.s32 0, %v2207
        %v2209 = vrot.slane %v1975, %v2208
        %v2210 = vlaneseq
        %v2211 = vshrl.u32 %v2210, 7
        %v2212 = vsub.s32 0, %v2211
        %v2213 = vrot.slane %v1976, %v2212
        %v2214 = vlaneseq
        %v2215 = vshrl.u32 %v2214, 7
        %v2216 = vsub.s32 0, %v2215
        %v2217 = vrot.slane %v1977, %v2216
        %v2218 = vlaneseq
        %v2219 = vshrl.u32 %v2218, 7
        %v2220 = vsub.s32 0, %v2219
        %v2221 = vrot.slane %v1978, %v2220
        %v2222 = vlaneseq
        %v2223 = vshrl.u32 %v2222, 7
        %v2224 = vsub.s32 0, %v2223
        %v2225 = vrot.slane %v1979, %v2224
        %v2226 = vlaneseq
        %v2227 = vshrl.u32 %v2226, 7
        %v2228 = vsub.s32 0, %v2227
        %v2229 = vrot.slane %v1980, %v2228
        %v2230 = vlaneseq
        %v2231 = vshrl.u32 %v2230, 7
        %v2232 = vsub.s32 0, %v2231
        %v2233 = vrot.slane %v1981, %v2232
        %v2234 = vlaneseq
        %v2235 = vshrl.u32 %v2234, 7
        %v2236 = vsub.s32 0, %v2235
        %v2237 = vrot.slane %v1982, %v2236
        %v2238 = vlaneseq
        %v2239 = vshrl.u32 %v2238, 7
        %v2240 = vsub.s32 0, %v2239
        %v2241 = vrot.slane %v1983, %v2240
        %v2242 = vlaneseq
        %v2243 = vshrl.u32 %v2242, 7
        %v2244 = vsub.s32 0, %v2243
        %v2245 = vrot.slane %v1984, %v2244
        %v2246 = vlaneseq
        %v2247 = vshrl.u32 %v2246, 7
        %v2248 = vsub.s32 0, %v2247
        %v2249 = vrot.slane %v1985, %v2248
        %v2250 = vlaneseq
        %v2251 = vshrl.u32 %v2250, 7
        %v2252 = vsub.s32 0, %v2251
        %v2253 = vrot.slane %v1986, %v2252
        %v2254 = vlaneseq
        %v2255 = vshrl.u32 %v2254, 7
        %v2256 = vsub.s32 0, %v2255
        %v2257 = vrot.slane %v1987, %v2256
        %v2258 = vlaneseq
        %v2259 = vshrl.u32 %v2258, 7
        %v2260 = vsub.s32 0, %v2259
        %v2261 = vrot.slane %v1988, %v2260
        %v2262 = vlaneseq
        %v2263 = vshrl.u32 %v2262, 7
        %v2264 = vsub.s32 0, %v2263
        %v2265 = vrot.slane %v1989, %v2264
        %v2266 = vlaneseq
        %v2267 = vshrl.u32 %v2266, 7
        %v2268 = vsub.s32 0, %v2267
        %v2269 = vrot.slane %v1990, %v2268
        %v2270 = vlaneseq
        %v2271 = vshrl.u32 %v2270, 7
        %v2272 = vsub.s32 0, %v2271
        %v2273 = vrot.slane %v1991, %v2272
        %v2274 = vlaneseq
        %v2275 = vshrl.u32 %v2274, 7
        %v2276 = vsub.s32 0, %v2275
        %v2277 = vrot.slane %v1992, %v2276
        %v2278 = vlaneseq
        %v2279 = vshrl.u32 %v2278, 7
        %v2280 = vsub.s32 0, %v2279
        %v2281 = vrot.slane %v1993, %v2280
        %v2282 = vlaneseq
        %v2283 = vshrl.u32 %v2282, 7
        %v2284 = vsub.s32 0, %v2283
        %v2285 = vrot.slane %v1994, %v2284
        %v2286 = vlaneseq
        %v2287 = vshrl.u32 %v2286, 7
        %v2288 = vsub.s32 0, %v2287
        %v2289 = vrot.slane %v1995, %v2288
        %v2290 = vlaneseq
        %v2291 = vshrl.u32 %v2290, 7
        %v2292 = vsub.s32 0, %v2291
        %v2293 = vrot.slane %v1996, %v2292
        %v2294 = vlaneseq
        %v2295 = vshrl.u32 %v2294, 7
        %v2296 = vsub.s32 0, %v2295
        %v2297 = vrot.slane %v1997, %v2296
        %v2298 = vlaneseq
        %v2299 = vshrl.u32 %v2298, 7
        %v2300 = vsub.s32 0, %v2299
        %v2301 = vrot.slane %v1998, %v2300
        %v2302 = vlaneseq
        %v2303 = vshrl.u32 %v2302, 7
        %v2304 = vsub.s32 0, %v2303
        %v2305 = vrot.slane %v1999, %v2304
        %v2306 = vlaneseq
        %v2307 = vshrl.u32 %v2306, 7
        %v2308 = vsub.s32 0, %v2307
        %v2309 = vrot.slane %v2000, %v2308
        %v2310 = vlaneseq
        %v2311 = vshrl.u32 %v2310, 7
        %v2312 = vsub.s32 0, %v2311
        %v2313 = vrot.slane %v2001, %v2312
        %v2314 = vlaneseq
        %v2315 = vshrl.u32 %v2314, 7
        %v2316 = vsub.s32 0, %v2315
        %v2317 = vrot.slane %v2002, %v2316
        %v2318 = vlaneseq
        %v2319 = vshrl.u32 %v2318, 7
        %v2320 = vsub.s32 0, %v2319
        %v2321 = vrot.slane %v2003, %v2320
        %v2322 = vlaneseq
        %v2323 = vshrl.u32 %v2322, 7
        %v2324 = vsub.s32 0, %v2323
        %v2325 = vrot.slane %v2004, %v2324
        %v2326 = vlaneseq
        %v2327 = vshrl.u32 %v2326, 7
        %v2328 = vsub.s32 0, %v2327
        %v2329 = vrot.slane %v2005, %v2328
        %v2330 = vlaneseq
        %v2331 = vshrl.u32 %v2330, 7
        %v2332 = vsub.s32 0, %v2331
        %v2333 = vrot.slane %v2006, %v2332
        %v2334 = vlaneseq
        %v2335 = vshrl.u32 %v2334, 7
        %v2336 = vsub.s32 0, %v2335
        %v2337 = vrot.slane %v2007, %v2336
        %v2338 = vlaneseq
        %v2339 = vshrl.u32 %v2338, 7
        %v2340 = vsub.s32 0, %v2339
        %v2341 = vrot.slane %v2008, %v2340
        %v2342 = vlaneseq
        %v2343 = vshrl.u32 %v2342, 7
        %v2344 = vsub.s32 0, %v2343
        %v2345 = vrot.slane %v2009, %v2344
        %v2346 = vlaneseq
        %v2347 = vshrl.u32 %v2346, 7
        %v2348 = vsub.s32 0, %v2347
        %v2349 = vrot.slane %v2010, %v2348
        %v2350 = vlaneseq
        %v2351 = vshrl.u32 %v2350, 7
        %v2352 = vsub.s32 0, %v2351
        %v2353 = vrot.slane %v2011, %v2352
        %vm2354 = vcmask 1041409
        %v2355 = vsel %vm2354, %v2105, %v2101
        %vm2356 = vcmask 1042434
        %v2357 = vsel %vm2356, %v2109, %v2355
        %vm2358 = vcmask 1043459
        %v2359 = vsel %vm2358, %v2113, %v2357
        %vm2360 = vcmask 1044484
        %v2361 = vsel %vm2360, %v2117, %v2359
        %vm2362 = vcmask 1045509
        %v2363 = vsel %vm2362, %v2121, %v2361
        %vm2364 = vcmask 1046534
        %v2365 = vsel %vm2364, %v2125, %v2363
        %vm2366 = vcmask 1047559
        %v2367 = vsel %vm2366, %v2129, %v2365
        %v2368 = vsel %vm2354, %v2137, %v2133
        %v2369 = vsel %vm2356, %v2141, %v2368
        %v2370 = vsel %vm2358, %v2145, %v2369
        %v2371 = vsel %vm2360, %v2149, %v2370
        %v2372 = vsel %vm2362, %v2153, %v2371
        %v2373 = vsel %vm2364, %v2157, %v2372
        %v2374 = vsel %vm2366, %v2161, %v2373
        %v2375 = vsel %vm2354, %v2169, %v2165
        %v2376 = vsel %vm2356, %v2173, %v2375
        %v2377 = vsel %vm2358, %v2177, %v2376
        %v2378 = vsel %vm2360, %v2181, %v2377
        %v2379 = vsel %vm2362, %v2185, %v2378
        %v2380 = vsel %vm2364, %v2189, %v2379
        %v2381 = vsel %vm2366, %v2193, %v2380
        %v2382 = vsel %vm2354, %v2201, %v2197
        %v2383 = vsel %vm2356, %v2205, %v2382
        %v2384 = vsel %vm2358, %v2209, %v2383
        %v2385 = vsel %vm2360, %v2213, %v2384
        %v2386 = vsel %vm2362, %v2217, %v2385
        %v2387 = vsel %vm2364, %v2221, %v2386
        %v2388 = vsel %vm2366, %v2225, %v2387
        %v2389 = vsel %vm2354, %v2233, %v2229
        %v2390 = vsel %vm2356, %v2237, %v2389
        %v2391 = vsel %vm2358, %v2241, %v2390
        %v2392 = vsel %vm2360, %v2245, %v2391
        %v2393 = vsel %vm2362, %v2249, %v2392
        %v2394 = vsel %vm2364, %v2253, %v2393
        %v2395 = vsel %vm2366, %v2257, %v2394
        %v2396 = vsel %vm2354, %v2265, %v2261
        %v2397 = vsel %vm2356, %v2269, %v2396
        %v2398 = vsel %vm2358, %v2273, %v2397
        %v2399 = vsel %vm2360, %v2277, %v2398
        %v2400 = vsel %vm2362, %v2281, %v2399
        %v2401 = vsel %vm2364, %v2285, %v2400
        %v2402 = vsel %vm2366, %v2289, %v2401
        %v2403 = vsel %vm2354, %v2297, %v2293
        %v2404 = vsel %vm2356, %v2301, %v2403
        %v2405 = vsel %vm2358, %v2305, %v2404
        %v2406 = vsel %vm2360, %v2309, %v2405
        %v2407 = vsel %vm2362, %v2313, %v2406
        %v2408 = vsel %vm2364, %v2317, %v2407
        %v2409 = vsel %vm2366, %v2321, %v2408
        %v2410 = vsel %vm2354, %v2329, %v2325
        %v2411 = vsel %vm2356, %v2333, %v2410
        %v2412 = vsel %vm2358, %v2337, %v2411
        %v2413 = vsel %vm2360, %v2341, %v2412
        %v2414 = vsel %vm2362, %v2345, %v2413
        %v2415 = vsel %vm2364, %v2349, %v2414
        %v2416 = vsel %vm2366, %v2353, %v2415
        %s2425 = scalar_lea.vmem [#allocation2], 16
        %2426 = vst.msk [vmem:[%s2425 + $0x1] sm:$0xff] %vm2012, %v2367
        %2427 = vst.msk [vmem:[%s2425 + $0x11] sm:$0xff] %vm2012, %v2374
        %2428 = vst.msk [vmem:[%s2425 + $0x21] sm:$0xff] %vm2012, %v2381
        %2429 = vst.msk [vmem:[%s2425 + $0x31] sm:$0xff] %vm2012, %v2388
        %2430 = vst.msk [vmem:[%s2425 + $0x41] sm:$0xff] %vm2012, %v2395
        %2431 = vst.msk [vmem:[%s2425 + $0x51] sm:$0xff] %vm2012, %v2402
        %2432 = vst.msk [vmem:[%s2425 + $0x61] sm:$0xff] %vm2012, %v2409
        %2433 = vst.msk [vmem:[%s2425 + $0x71] sm:$0xff] %vm2012, %v2416
        %v2434 = vld [vmem:[#allocation2] sm:$0xff]
        %v2435 = vld [vmem:[#allocation2 + $0x10] sm:$0xff]
        %v2436 = vld [vmem:[#allocation2 + $0x20] sm:$0xff]
        %v2437 = vld [vmem:[#allocation2 + $0x30] sm:$0xff]
        %v2438 = vld [vmem:[#allocation2 + $0x40] sm:$0xff]
        %v2439 = vld [vmem:[#allocation2 + $0x50] sm:$0xff]
        %v2440 = vld [vmem:[#allocation2 + $0x60] sm:$0xff]
        %v2441 = vld [vmem:[#allocation2 + $0x70] sm:$0xff]
        %2442 = vst.msk [vmem:[#allocation3] sm:$0xff] %vm2012, %v2434
        %2443 = vst.msk [vmem:[#allocation3 + $0x18] sm:$0xff] %vm2012, %v2435
        %2444 = vst.msk [vmem:[#allocation3 + $0x30] sm:$0xff] %vm2012, %v2436
        %2445 = vst.msk [vmem:[#allocation3 + $0x48] sm:$0xff] %vm2012, %v2437
        %2446 = vst.msk [vmem:[#allocation3 + $0x60] sm:$0xff] %vm2012, %v2438
        %2447 = vst.msk [vmem:[#allocation3 + $0x78] sm:$0xff] %vm2012, %v2439
        %2448 = vst.msk [vmem:[#allocation3 + $0x90] sm:$0xff] %vm2012, %v2440
        %2449 = vst.msk [vmem:[#allocation3 + $0xa8] sm:$0xff] %vm2012, %v2441
        %v2450 = vld [vmem:[#allocation2 + $0x1] sm:$0xff]
        %v2451 = vld [vmem:[#allocation2 + $0x11] sm:$0xff]
        %v2452 = vld [vmem:[#allocation2 + $0x21] sm:$0xff]
        %v2453 = vld [vmem:[#allocation2 + $0x31] sm:$0xff]
        %v2454 = vld [vmem:[#allocation2 + $0x41] sm:$0xff]
        %v2455 = vld [vmem:[#allocation2 + $0x51] sm:$0xff]
        %v2456 = vld [vmem:[#allocation2 + $0x61] sm:$0xff]
        %v2457 = vld [vmem:[#allocation2 + $0x71] sm:$0xff]
        %2466 = vrot.lane.b32.xlu0 %v2450, 32
        %v2467 = vpop.permute.xlu0 %2466
        %2468 = vrot.lane.b32.xlu0 %v2451, 32
        %v2469 = vpop.permute.xlu0 %2468
        %2470 = vrot.lane.b32.xlu0 %v2452, 32
        %v2471 = vpop.permute.xlu0 %2470
        %2472 = vrot.lane.b32.xlu0 %v2453, 32
        %v2473 = vpop.permute.xlu0 %2472
        %2474 = vrot.lane.b32.xlu0 %v2454, 32
        %v2475 = vpop.permute.xlu0 %2474
        %2476 = vrot.lane.b32.xlu0 %v2455, 32
        %v2477 = vpop.permute.xlu0 %2476
        %2478 = vrot.lane.b32.xlu0 %v2456, 32
        %v2479 = vpop.permute.xlu0 %2478
        %2480 = vrot.lane.b32.xlu0 %v2457, 32
        %v2481 = vpop.permute.xlu0 %2480
        %vm2490 = vcmask 523520
        %2491 = vst.msk [vmem:[#allocation3] sm:$0xff] %vm2490, %v2467
        %2492 = vst.msk [vmem:[#allocation3 + $0x18] sm:$0xff] %vm2490, %v2469
        %2493 = vst.msk [vmem:[#allocation3 + $0x30] sm:$0xff] %vm2490, %v2471
        %2494 = vst.msk [vmem:[#allocation3 + $0x48] sm:$0xff] %vm2490, %v2473
        %2495 = vst.msk [vmem:[#allocation3 + $0x60] sm:$0xff] %vm2490, %v2475
        %2496 = vst.msk [vmem:[#allocation3 + $0x78] sm:$0xff] %vm2490, %v2477
        %2497 = vst.msk [vmem:[#allocation3 + $0x90] sm:$0xff] %vm2490, %v2479
        %2498 = vst.msk [vmem:[#allocation3 + $0xa8] sm:$0xff] %vm2490, %v2481
        %v2499 = vld [vmem:[#allocation2 + $0x2] sm:$0xff]
        %v2500 = vld [vmem:[#allocation2 + $0x12] sm:$0xff]
        %v2501 = vld [vmem:[#allocation2 + $0x22] sm:$0xff]
        %v2502 = vld [vmem:[#allocation2 + $0x32] sm:$0xff]
        %v2503 = vld [vmem:[#allocation2 + $0x42] sm:$0xff]
        %v2504 = vld [vmem:[#allocation2 + $0x52] sm:$0xff]
        %v2505 = vld [vmem:[#allocation2 + $0x62] sm:$0xff]
        %v2506 = vld [vmem:[#allocation2 + $0x72] sm:$0xff]
        %2515 = vrot.lane.b32.xlu0 %v2499, 64
        %v2516 = vpop.permute.xlu0 %2515
        %2517 = vrot.lane.b32.xlu0 %v2500, 64
        %v2518 = vpop.permute.xlu0 %2517
        %2519 = vrot.lane.b32.xlu0 %v2501, 64
        %v2520 = vpop.permute.xlu0 %2519
        %2521 = vrot.lane.b32.xlu0 %v2502, 64
        %v2522 = vpop.permute.xlu0 %2521
        %2523 = vrot.lane.b32.xlu0 %v2503, 64
        %v2524 = vpop.permute.xlu0 %2523
        %2525 = vrot.lane.b32.xlu0 %v2504, 64
        %v2526 = vpop.permute.xlu0 %2525
        %2527 = vrot.lane.b32.xlu0 %v2505, 64
        %v2528 = vpop.permute.xlu0 %2527
        %2529 = vrot.lane.b32.xlu0 %v2506, 64
        %v2530 = vpop.permute.xlu0 %2529
        %vm2539 = vcmask 785920
        %2540 = vst.msk [vmem:[#allocation3] sm:$0xff] %vm2539, %v2516
        %2541 = vst.msk [vmem:[#allocation3 + $0x18] sm:$0xff] %vm2539, %v2518
        %2542 = vst.msk [vmem:[#allocation3 + $0x30] sm:$0xff] %vm2539, %v2520
        %2543 = vst.msk [vmem:[#allocation3 + $0x48] sm:$0xff] %vm2539, %v2522
        %2544 = vst.msk [vmem:[#allocation3 + $0x60] sm:$0xff] %vm2539, %v2524
        %2545 = vst.msk [vmem:[#allocation3 + $0x78] sm:$0xff] %vm2539, %v2526
        %2546 = vst.msk [vmem:[#allocation3 + $0x90] sm:$0xff] %vm2539, %v2528
        %2547 = vst.msk [vmem:[#allocation3 + $0xa8] sm:$0xff] %vm2539, %v2530
        %v2548 = vld [vmem:[%s2425] sm:$0xff]
        %v2549 = vld [vmem:[%s2425 + $0x10] sm:$0xff]
        %v2550 = vld [vmem:[%s2425 + $0x20] sm:$0xff]
        %v2551 = vld [vmem:[%s2425 + $0x30] sm:$0xff]
        %v2552 = vld [vmem:[%s2425 + $0x40] sm:$0xff]
        %v2553 = vld [vmem:[%s2425 + $0x50] sm:$0xff]
        %v2554 = vld [vmem:[%s2425 + $0x60] sm:$0xff]
        %v2555 = vld [vmem:[%s2425 + $0x70] sm:$0xff]
        %2564 = vrot.lane.b32.xlu0 %v2548, 96
        %v2565 = vpop.permute.xlu0 %2564
        %2566 = vrot.lane.b32.xlu0 %v2549, 96
        %v2567 = vpop.permute.xlu0 %2566
        %2568 = vrot.lane.b32.xlu0 %v2550, 96
        %v2569 = vpop.permute.xlu0 %2568
        %2570 = vrot.lane.b32.xlu0 %v2551, 96
        %v2571 = vpop.permute.xlu0 %2570
        %2572 = vrot.lane.b32.xlu0 %v2552, 96
        %v2573 = vpop.permute.xlu0 %2572
        %2574 = vrot.lane.b32.xlu0 %v2553, 96
        %v2575 = vpop.permute.xlu0 %2574
        %2576 = vrot.lane.b32.xlu0 %v2554, 96
        %v2577 = vpop.permute.xlu0 %2576
        %2578 = vrot.lane.b32.xlu0 %v2555, 96
        %v2579 = vpop.permute.xlu0 %2578
        %vm2588 = vcmask 1048320
        %2589 = vst.msk [vmem:[#allocation3] sm:$0xff] %vm2588, %v2565
        %2590 = vst.msk [vmem:[#allocation3 + $0x18] sm:$0xff] %vm2588, %v2567
        %2591 = vst.msk [vmem:[#allocation3 + $0x30] sm:$0xff] %vm2588, %v2569
        %2592 = vst.msk [vmem:[#allocation3 + $0x48] sm:$0xff] %vm2588, %v2571
        %2593 = vst.msk [vmem:[#allocation3 + $0x60] sm:$0xff] %vm2588, %v2573
        %2594 = vst.msk [vmem:[#allocation3 + $0x78] sm:$0xff] %vm2588, %v2575
        %2595 = vst.msk [vmem:[#allocation3 + $0x90] sm:$0xff] %vm2588, %v2577
        %2596 = vst.msk [vmem:[#allocation3 + $0xa8] sm:$0xff] %vm2588, %v2579
        %v2597 = vld [vmem:[%s2425 + $0x1] sm:$0xff]
        %v2598 = vld [vmem:[%s2425 + $0x11] sm:$0xff]
        %v2599 = vld [vmem:[%s2425 + $0x21] sm:$0xff]
        %v2600 = vld [vmem:[%s2425 + $0x31] sm:$0xff]
        %v2601 = vld [vmem:[%s2425 + $0x41] sm:$0xff]
        %v2602 = vld [vmem:[%s2425 + $0x51] sm:$0xff]
        %v2603 = vld [vmem:[%s2425 + $0x61] sm:$0xff]
        %v2604 = vld [vmem:[%s2425 + $0x71] sm:$0xff]
        %2605 = vst.msk [vmem:[#allocation3 + $0x8] sm:$0xff] %vm2012, %v2597
        %2606 = vst.msk [vmem:[#allocation3 + $0x20] sm:$0xff] %vm2012, %v2598
        %2607 = vst.msk [vmem:[#allocation3 + $0x38] sm:$0xff] %vm2012, %v2599
        %2608 = vst.msk [vmem:[#allocation3 + $0x50] sm:$0xff] %vm2012, %v2600
        %2609 = vst.msk [vmem:[#allocation3 + $0x68] sm:$0xff] %vm2012, %v2601
        %2610 = vst.msk [vmem:[#allocation3 + $0x80] sm:$0xff] %vm2012, %v2602
        %2611 = vst.msk [vmem:[#allocation3 + $0x98] sm:$0xff] %vm2012, %v2603
        %2612 = vst.msk [vmem:[#allocation3 + $0xb0] sm:$0xff] %vm2012, %v2604
        %v2613 = vld [vmem:[%s2425 + $0x2] sm:$0xff]
        %v2614 = vld [vmem:[%s2425 + $0x12] sm:$0xff]
        %v2615 = vld [vmem:[%s2425 + $0x22] sm:$0xff]
        %v2616 = vld [vmem:[%s2425 + $0x32] sm:$0xff]
        %v2617 = vld [vmem:[%s2425 + $0x42] sm:$0xff]
        %v2618 = vld [vmem:[%s2425 + $0x52] sm:$0xff]
        %v2619 = vld [vmem:[%s2425 + $0x62] sm:$0xff]
        %v2620 = vld [vmem:[%s2425 + $0x72] sm:$0xff]
        %2629 = vrot.lane.b32.xlu0 %v2613, 32
        %v2630 = vpop.permute.xlu0 %2629
        %2631 = vrot.lane.b32.xlu0 %v2614, 32
        %v2632 = vpop.permute.xlu0 %2631
        %2633 = vrot.lane.b32.xlu0 %v2615, 32
        %v2634 = vpop.permute.xlu0 %2633
        %2635 = vrot.lane.b32.xlu0 %v2616, 32
        %v2636 = vpop.permute.xlu0 %2635
        %2637 = vrot.lane.b32.xlu0 %v2617, 32
        %v2638 = vpop.permute.xlu0 %2637
        %2639 = vrot.lane.b32.xlu0 %v2618, 32
        %v2640 = vpop.permute.xlu0 %2639
        %2641 = vrot.lane.b32.xlu0 %v2619, 32
        %v2642 = vpop.permute.xlu0 %2641
        %2643 = vrot.lane.b32.xlu0 %v2620, 32
        %v2644 = vpop.permute.xlu0 %2643
        %2653 = vst.msk [vmem:[#allocation3 + $0x8] sm:$0xff] %vm2490, %v2630
        %2654 = vst.msk [vmem:[#allocation3 + $0x20] sm:$0xff] %vm2490, %v2632
        %2655 = vst.msk [vmem:[#allocation3 + $0x38] sm:$0xff] %vm2490, %v2634
        %2656 = vst.msk [vmem:[#allocation3 + $0x50] sm:$0xff] %vm2490, %v2636
        %2657 = vst.msk [vmem:[#allocation3 + $0x68] sm:$0xff] %vm2490, %v2638
        %2658 = vst.msk [vmem:[#allocation3 + $0x80] sm:$0xff] %vm2490, %v2640
        %2659 = vst.msk [vmem:[#allocation3 + $0x98] sm:$0xff] %vm2490, %v2642
        %2660 = vst.msk [vmem:[#allocation3 + $0xb0] sm:$0xff] %vm2490, %v2644
        %s2661 = scalar_lea.vmem [#allocation2], 32
        %v2662 = vld [vmem:[%s2661] sm:$0xff]
        %v2663 = vld [vmem:[%s2661 + $0x10] sm:$0xff]
        %v2664 = vld [vmem:[%s2661 + $0x20] sm:$0xff]
        %v2665 = vld [vmem:[%s2661 + $0x30] sm:$0xff]
        %v2666 = vld [vmem:[%s2661 + $0x40] sm:$0xff]
        %v2667 = vld [vmem:[%s2661 + $0x50] sm:$0xff]
        %v2668 = vld [vmem:[%s2661 + $0x60] sm:$0xff]
        %v2669 = vld [vmem:[%s2661 + $0x70] sm:$0xff]
        %2678 = vrot.lane.b32.xlu0 %v2662, 64
        %v2679 = vpop.permute.xlu0 %2678
        %2680 = vrot.lane.b32.xlu0 %v2663, 64
        %v2681 = vpop.permute.xlu0 %2680
        %2682 = vrot.lane.b32.xlu0 %v2664, 64
        %v2683 = vpop.permute.xlu0 %2682
        %2684 = vrot.lane.b32.xlu0 %v2665, 64
        %v2685 = vpop.permute.xlu0 %2684
        %2686 = vrot.lane.b32.xlu0 %v2666, 64
        %v2687 = vpop.permute.xlu0 %2686
        %2688 = vrot.lane.b32.xlu0 %v2667, 64
        %v2689 = vpop.permute.xlu0 %2688
        %2690 = vrot.lane.b32.xlu0 %v2668, 64
        %v2691 = vpop.permute.xlu0 %2690
        %2692 = vrot.lane.b32.xlu0 %v2669, 64
        %v2693 = vpop.permute.xlu0 %2692
        %2702 = vst.msk [vmem:[#allocation3 + $0x8] sm:$0xff] %vm2539, %v2679
        %2703 = vst.msk [vmem:[#allocation3 + $0x20] sm:$0xff] %vm2539, %v2681
        %2704 = vst.msk [vmem:[#allocation3 + $0x38] sm:$0xff] %vm2539, %v2683
        %2705 = vst.msk [vmem:[#allocation3 + $0x50] sm:$0xff] %vm2539, %v2685
        %2706 = vst.msk [vmem:[#allocation3 + $0x68] sm:$0xff] %vm2539, %v2687
        %2707 = vst.msk [vmem:[#allocation3 + $0x80] sm:$0xff] %vm2539, %v2689
        %2708 = vst.msk [vmem:[#allocation3 + $0x98] sm:$0xff] %vm2539, %v2691
        %2709 = vst.msk [vmem:[#allocation3 + $0xb0] sm:$0xff] %vm2539, %v2693
        %v2710 = vld [vmem:[%s2661 + $0x1] sm:$0xff]
        %v2711 = vld [vmem:[%s2661 + $0x11] sm:$0xff]
        %v2712 = vld [vmem:[%s2661 + $0x21] sm:$0xff]
        %v2713 = vld [vmem:[%s2661 + $0x31] sm:$0xff]
        %v2714 = vld [vmem:[%s2661 + $0x41] sm:$0xff]
        %v2715 = vld [vmem:[%s2661 + $0x51] sm:$0xff]
        %v2716 = vld [vmem:[%s2661 + $0x61] sm:$0xff]
        %v2717 = vld [vmem:[%s2661 + $0x71] sm:$0xff]
        %2726 = vrot.lane.b32.xlu0 %v2710, 96
        %v2727 = vpop.permute.xlu0 %2726
        %2728 = vrot.lane.b32.xlu0 %v2711, 96
        %v2729 = vpop.permute.xlu0 %2728
        %2730 = vrot.lane.b32.xlu0 %v2712, 96
        %v2731 = vpop.permute.xlu0 %2730
        %2732 = vrot.lane.b32.xlu0 %v2713, 96
        %v2733 = vpop.permute.xlu0 %2732
        %2734 = vrot.lane.b32.xlu0 %v2714, 96
        %v2735 = vpop.permute.xlu0 %2734
        %2736 = vrot.lane.b32.xlu0 %v2715, 96
        %v2737 = vpop.permute.xlu0 %2736
        %2738 = vrot.lane.b32.xlu0 %v2716, 96
        %v2739 = vpop.permute.xlu0 %2738
        %2740 = vrot.lane.b32.xlu0 %v2717, 96
        %v2741 = vpop.permute.xlu0 %2740
        %2750 = vst.msk [vmem:[#allocation3 + $0x8] sm:$0xff] %vm2588, %v2727
        %2751 = vst.msk [vmem:[#allocation3 + $0x20] sm:$0xff] %vm2588, %v2729
        %2752 = vst.msk [vmem:[#allocation3 + $0x38] sm:$0xff] %vm2588, %v2731
        %2753 = vst.msk [vmem:[#allocation3 + $0x50] sm:$0xff] %vm2588, %v2733
        %2754 = vst.msk [vmem:[#allocation3 + $0x68] sm:$0xff] %vm2588, %v2735
        %2755 = vst.msk [vmem:[#allocation3 + $0x80] sm:$0xff] %vm2588, %v2737
        %2756 = vst.msk [vmem:[#allocation3 + $0x98] sm:$0xff] %vm2588, %v2739
        %2757 = vst.msk [vmem:[#allocation3 + $0xb0] sm:$0xff] %vm2588, %v2741
        %v2758 = vld [vmem:[%s2661 + $0x2] sm:$0xff]
        %v2759 = vld [vmem:[%s2661 + $0x12] sm:$0xff]
        %v2760 = vld [vmem:[%s2661 + $0x22] sm:$0xff]
        %v2761 = vld [vmem:[%s2661 + $0x32] sm:$0xff]
        %v2762 = vld [vmem:[%s2661 + $0x42] sm:$0xff]
        %v2763 = vld [vmem:[%s2661 + $0x52] sm:$0xff]
        %v2764 = vld [vmem:[%s2661 + $0x62] sm:$0xff]
        %v2765 = vld [vmem:[%s2661 + $0x72] sm:$0xff]
        %2766 = vst.msk [vmem:[#allocation3 + $0x10] sm:$0xff] %vm2012, %v2758
        %2767 = vst.msk [vmem:[#allocation3 + $0x28] sm:$0xff] %vm2012, %v2759
        %2768 = vst.msk [vmem:[#allocation3 + $0x40] sm:$0xff] %vm2012, %v2760
        %2769 = vst.msk [vmem:[#allocation3 + $0x58] sm:$0xff] %vm2012, %v2761
        %2770 = vst.msk [vmem:[#allocation3 + $0x70] sm:$0xff] %vm2012, %v2762
        %2771 = vst.msk [vmem:[#allocation3 + $0x88] sm:$0xff] %vm2012, %v2763
        %2772 = vst.msk [vmem:[#allocation3 + $0xa0] sm:$0xff] %vm2012, %v2764
        %2773 = vst.msk [vmem:[#allocation3 + $0xb8] sm:$0xff] %vm2012, %v2765
        %v2774 = vld [vmem:[#allocation3] sm:$0xff]
        %v2775 = vld [vmem:[#allocation3 + $0x8] sm:$0xff]
        %v2776 = vld [vmem:[#allocation3 + $0x10] sm:$0xff]
        %v2777 = vld [vmem:[#allocation3 + $0x18] sm:$0xff]
        %v2778 = vld [vmem:[#allocation3 + $0x20] sm:$0xff]
        %v2779 = vld [vmem:[#allocation3 + $0x28] sm:$0xff]
        %v2780 = vld [vmem:[#allocation3 + $0x30] sm:$0xff]
        %v2781 = vld [vmem:[#allocation3 + $0x38] sm:$0xff]
        %v2782 = vld [vmem:[#allocation3 + $0x40] sm:$0xff]
        %v2783 = vld [vmem:[#allocation3 + $0x48] sm:$0xff]
        %v2784 = vld [vmem:[#allocation3 + $0x50] sm:$0xff]
        %v2785 = vld [vmem:[#allocation3 + $0x58] sm:$0xff]
        %v2786 = vld [vmem:[#allocation3 + $0x60] sm:$0xff]
        %v2787 = vld [vmem:[#allocation3 + $0x68] sm:$0xff]
        %v2788 = vld [vmem:[#allocation3 + $0x70] sm:$0xff]
        %v2789 = vld [vmem:[#allocation3 + $0x78] sm:$0xff]
        %v2790 = vld [vmem:[#allocation3 + $0x80] sm:$0xff]
        %v2791 = vld [vmem:[#allocation3 + $0x88] sm:$0xff]
        %v2792 = vld [vmem:[#allocation3 + $0x90] sm:$0xff]
        %v2793 = vld [vmem:[#allocation3 + $0x98] sm:$0xff]
        %v2794 = vld [vmem:[#allocation3 + $0xa0] sm:$0xff]
        %v2795 = vld [vmem:[#allocation3 + $0xa8] sm:$0xff]
        %v2796 = vld [vmem:[#allocation3 + $0xb0] sm:$0xff]
        %v2797 = vld [vmem:[#allocation3 + $0xb8] sm:$0xff]
        %v2798 = vld [vmem:[%s3] sm:$0xff]
        %v2799 = vld [vmem:[%s3 + $0x8] sm:$0xff]
        %v2800 = vld [vmem:[%s3 + $0x10] sm:$0xff]
        %v2801 = vld [vmem:[%s3 + $0x18] sm:$0xff]
        %v2802 = vld [vmem:[%s3 + $0x20] sm:$0xff]
        %v2803 = vld [vmem:[%s3 + $0x28] sm:$0xff]
        %v2804 = vld [vmem:[%s3 + $0x30] sm:$0xff]
        %v2805 = vld [vmem:[%s3 + $0x38] sm:$0xff]
        %v2806 = vld [vmem:[%s3 + $0x40] sm:$0xff]
        %v2807 = vld [vmem:[%s3 + $0x48] sm:$0xff]
        %v2808 = vld [vmem:[%s3 + $0x50] sm:$0xff]
        %v2809 = vld [vmem:[%s3 + $0x58] sm:$0xff]
        %v2810 = vld [vmem:[%s3 + $0x60] sm:$0xff]
        %v2811 = vld [vmem:[%s3 + $0x68] sm:$0xff]
        %v2812 = vld [vmem:[%s3 + $0x70] sm:$0xff]
        %v2813 = vld [vmem:[%s3 + $0x78] sm:$0xff]
        %v2814 = vld [vmem:[%s3 + $0x80] sm:$0xff]
        %v2815 = vld [vmem:[%s3 + $0x88] sm:$0xff]
        %v2816 = vld [vmem:[%s3 + $0x90] sm:$0xff]
        %v2817 = vld [vmem:[%s3 + $0x98] sm:$0xff]
        %v2818 = vld [vmem:[%s3 + $0xa0] sm:$0xff]
        %v2819 = vld [vmem:[%s3 + $0xa8] sm:$0xff]
        %v2820 = vld [vmem:[%s3 + $0xb0] sm:$0xff]
        %v2821 = vld [vmem:[%s3 + $0xb8] sm:$0xff]
        %v2822 = vld [vmem:[%s3 + $0xc0] sm:$0xff]
        %v2823 = vld [vmem:[%s3 + $0xc8] sm:$0xff]
        %v2824 = vld [vmem:[%s3 + $0xd0] sm:$0xff]
        %v2825 = vld [vmem:[%s3 + $0xd8] sm:$0xff]
        %v2826 = vld [vmem:[%s3 + $0xe0] sm:$0xff]
        %v2827 = vld [vmem:[%s3 + $0xe8] sm:$0xff]
        %v2828 = vld [vmem:[%s3 + $0xf0] sm:$0xff]
        %v2829 = vld [vmem:[%s3 + $0xf8] sm:$0xff]
        %v2830 = vld [vmem:[%s3 + $0x100] sm:$0xff]
        %v2831 = vld [vmem:[%s3 + $0x108] sm:$0xff]
        %v2832 = vld [vmem:[%s3 + $0x110] sm:$0xff]
        %v2833 = vld [vmem:[%s3 + $0x118] sm:$0xff]
        %v2834 = vld [vmem:[%s4] sm:$0x1]
        %v2836 = vlaneseq
        %v2837 = vshrl.u32 %v2836, 7
        %v2838 = vsub.s32 0, %v2837
        %v2839 = vrot.slane %v2834, %v2838
        %v2842 = vsel %vm2012, %v2776, 0
        %v2845 = vsel %vm2012, %v2779, 0
        %v2848 = vsel %vm2012, %v2782, 0
        %v2851 = vsel %vm2012, %v2785, 0
        %v2854 = vsel %vm2012, %v2788, 0
        %v2857 = vsel %vm2012, %v2791, 0
        %v2860 = vsel %vm2012, %v2794, 0
        %v2863 = vsel %vm2012, %v2797, 0
        %2865 = vmatprep.subr.mxu0 0.0
        %2866 = vmatpush1.msra.mxu0 %v2798
        %2867 = vmatprep.subr.mxu0 0.0
        %2868 = vmatpush1.msra.mxu0 %v2799
        %2869 = vmatprep.subr.mxu0 0.0
        %2870 = vmatpush1.msra.mxu0 %v2800
        %2871 = vmatprep.subr.mxu0 0.0
        %2872 = vmatpush1.msra.mxu0 %v2801
        %2873 = vmatprep.subr.mxu0 0.0
        %2874 = vmatpush1.msra.mxu0 %v2802
        %2875 = vmatprep.subr.mxu0 0.0
        %2876 = vmatpush1.msra.mxu0 %v2803
        %2877 = vmatprep.subr.mxu0 0.0
        %2878 = vmatpush1.msra.mxu0 %v2804
        %2879 = vmatprep.subr.mxu0 0.0
        %2880 = vmatpush1.msra.mxu0 %v2805
        %2881 = vmatprep.subr.mxu0 0.0
        %2882 = vmatpush1.msra.mxu0 %v2806
        %2883 = vmatprep.subr.mxu0 0.0
        %2884 = vmatpush1.msra.mxu0 %v2807
        %2885 = vmatprep.subr.mxu0 0.0
        %2886 = vmatpush1.msra.mxu0 %v2808
        %2887 = vmatprep.subr.mxu0 0.0
        %2888 = vmatpush1.msra.mxu0 %v2809
        %2889 = vmatprep.subr.mxu0 0.0
        %2890 = vmatpush1.msra.mxu0 %v2810
        %2891 = vmatprep.subr.mxu0 0.0
        %2892 = vmatpush1.msra.mxu0 %v2811
        %2893 = vmatprep.subr.mxu0 0.0
        %2894 = vmatpush1.msra.mxu0 %v2812
        %2895 = vmatprep.subr.mxu0 0.0
        %2896 = vmatpush1.msra.mxu0 %v2813
        %2897 = vmatprep.subr.mxu0 0.0
        %2898 = vmatpush1.msra.mxu0 %v2814
        %2899 = vmatprep.subr.mxu0 0.0
        %2900 = vmatpush1.msra.mxu0 %v2815
        %2901 = vmatprep.subr.mxu0 0.0
        %2902 = vmatpush1.msra.mxu0 %v2816
        %2903 = vmatprep.subr.mxu0 0.0
        %2904 = vmatpush1.msra.mxu0 %v2817
        %2905 = vmatprep.subr.mxu0 0.0
        %2906 = vmatpush1.msra.mxu0 %v2818
        %2907 = vmatprep.subr.mxu0 0.0
        %2908 = vmatpush1.msra.mxu0 %v2819
        %2909 = vmatprep.subr.mxu0 0.0
        %2910 = vmatpush1.msra.mxu0 %v2820
        %2911 = vmatprep.subr.mxu0 0.0
        %2912 = vmatpush1.msra.mxu0 %v2821
        %2913 = vmatprep.subr.mxu0 0.0
        %2914 = vmatpush1.msra.mxu0 %v2822
        %2915 = vmatprep.subr.mxu0 0.0
        %2916 = vmatpush1.msra.mxu0 %v2823
        %2917 = vmatprep.subr.mxu0 0.0
        %2918 = vmatpush1.msra.mxu0 %v2824
        %2919 = vmatprep.subr.mxu0 0.0
        %2920 = vmatpush1.msra.mxu0 %v2825
        %2921 = vmatprep.subr.mxu0 0.0
        %2922 = vmatpush1.msra.mxu0 %v2826
        %2923 = vmatprep.subr.mxu0 0.0
        %2924 = vmatpush1.msra.mxu0 %v2827
        %2925 = vmatprep.subr.mxu0 0.0
        %2926 = vmatpush1.msra.mxu0 %v2828
        %2927 = vmatprep.subr.mxu0 0.0
        %2928 = vmatpush1.msra.mxu0 %v2829
        %2929 = vmatprep.mubr.f32.mxu0 %v2775
        %2930 = vmatmul.mubr.f32.gmra.mrb[0].mxu0 %v2774
        %v2931 = vpop.f32.mrb[0].mxu0
        %v2932 = vadd.f32 %v2839, %v2931
        %v2933 = vpop.f32.mrb[0].mxu0
        %2934 = vmatprep.mubr.f32.mxu0 %v2778
        %2935 = vmatmul.mubr.f32.gmra.mrb[0].mxu0 %v2777
        %v2936 = vpop.f32.mrb[0].mxu0
        %v2937 = vadd.f32 %v2839, %v2936
        %v2938 = vpop.f32.mrb[0].mxu0
        %2939 = vmatprep.mubr.f32.mxu0 %v2781
        %2940 = vmatmul.mubr.f32.gmra.mrb[0].mxu0 %v2780
        %v2941 = vpop.f32.mrb[0].mxu0
        %v2942 = vadd.f32 %v2839, %v2941
        %v2943 = vpop.f32.mrb[0].mxu0
        %2944 = vmatprep.mubr.f32.mxu0 %v2784
        %2945 = vmatmul.mubr.f32.gmra.mrb[0].mxu0 %v2783
        %v2946 = vpop.f32.mrb[0].mxu0
        %v2947 = vadd.f32 %v2839, %v2946
        %v2948 = vpop.f32.mrb[0].mxu0
        %2949 = vmatprep.mubr.f32.mxu0 %v2787
        %2950 = vmatmul.mubr.f32.gmra.mrb[0].mxu0 %v2786
        %v2951 = vpop.f32.mrb[0].mxu0
        %v2952 = vadd.f32 %v2839, %v2951
        %v2953 = vpop.f32.mrb[0].mxu0
        %2954 = vmatprep.mubr.f32.mxu0 %v2790
        %2955 = vmatmul.mubr.f32.gmra.mrb[0].mxu0 %v2789
        %v2956 = vpop.f32.mrb[0].mxu0
        %v2957 = vadd.f32 %v2839, %v2956
        %v2958 = vpop.f32.mrb[0].mxu0
        %2959 = vmatprep.mubr.f32.mxu0 %v2793
        %2960 = vmatmul.mubr.f32.gmra.mrb[0].mxu0 %v2792
        %v2961 = vpop.f32.mrb[0].mxu0
        %v2962 = vadd.f32 %v2839, %v2961
        %v2963 = vpop.f32.mrb[0].mxu0
        %2964 = vmatprep.mubr.f32.mxu0 %v2796
        %2965 = vmatmul.mubr.f32.gmra.mrb[0].mxu0 %v2795
        %v2966 = vpop.f32.mrb[0].mxu0
        %v2967 = vadd.f32 %v2839, %v2966
        %v2968 = vpop.f32.mrb[0].mxu0
        %2969 = vdwg.mxu0
        %2970 = vmatprep.subr.mxu0 0.0
        %2971 = vmatpush1.msra.mxu0 %v2830
        %2972 = vmatprep.subr.mxu0 0.0
        %2973 = vmatpush1.msra.mxu0 %v2831
        %2974 = vmatprep.subr.mxu0 0.0
        %2975 = vmatpush1.msra.mxu0 %v2832
        %2976 = vmatprep.subr.mxu0 0.0
        %2977 = vmatpush1.msra.mxu0 %v2833
        %2978 = vmatprep.subr.mxu0 0.0
        %2979 = vmatpush1.msra.mxu0 0.0
        %2980 = vmatprep.subr.mxu0 0.0
        %2981 = vmatpush1.msra.mxu0 0.0
        %2982 = vmatprep.subr.mxu0 0.0
        %2983 = vmatpush1.msra.mxu0 0.0
        %2984 = vmatprep.subr.mxu0 0.0
        %2985 = vmatpush1.msra.mxu0 0.0
        %2986 = vmatprep.subr.mxu0 0.0
        %2987 = vmatpush1.msra.mxu0 0.0
        %2988 = vmatprep.subr.mxu0 0.0
        %2989 = vmatpush1.msra.mxu0 0.0
        %2990 = vmatprep.subr.mxu0 0.0
        %2991 = vmatpush1.msra.mxu0 0.0
        %2992 = vmatprep.subr.mxu0 0.0
        %2993 = vmatpush1.msra.mxu0 0.0
        %2994 = vmatprep.subr.mxu0 0.0
        %2995 = vmatpush1.msra.mxu0 0.0
        %2996 = vmatprep.subr.mxu0 0.0
        %2997 = vmatpush1.msra.mxu0 0.0
        %2998 = vmatprep.subr.mxu0 0.0
        %2999 = vmatpush1.msra.mxu0 0.0
        %3000 = vmatprep.subr.mxu0 0.0
        %3001 = vmatpush1.msra.mxu0 0.0
        %3002 = vmatprep.subr.mxu0 0.0
        %3003 = vmatpush1.msra.mxu0 0.0
        %3004 = vmatprep.subr.mxu0 0.0
        %3005 = vmatpush1.msra.mxu0 0.0
        %3006 = vmatprep.subr.mxu0 0.0
        %3007 = vmatpush1.msra.mxu0 0.0
        %3008 = vmatprep.subr.mxu0 0.0
        %3009 = vmatpush1.msra.mxu0 0.0
        %3010 = vmatprep.subr.mxu0 0.0
        %3011 = vmatpush1.msra.mxu0 0.0
        %3012 = vmatprep.subr.mxu0 0.0
        %3013 = vmatpush1.msra.mxu0 0.0
        %3014 = vmatprep.subr.mxu0 0.0
        %3015 = vmatpush1.msra.mxu0 0.0
        %3016 = vmatprep.subr.mxu0 0.0
        %3017 = vmatpush1.msra.mxu0 0.0
        %3018 = vmatprep.subr.mxu0 0.0
        %3019 = vmatpush1.msra.mxu0 0.0
        %3020 = vmatprep.subr.mxu0 0.0
        %3021 = vmatpush1.msra.mxu0 0.0
        %3022 = vmatprep.subr.mxu0 0.0
        %3023 = vmatpush1.msra.mxu0 0.0
        %3024 = vmatprep.subr.mxu0 0.0
        %3025 = vmatpush1.msra.mxu0 0.0
        %3026 = vmatprep.subr.mxu0 0.0
        %3027 = vmatpush1.msra.mxu0 0.0
        %3028 = vmatprep.subr.mxu0 0.0
        %3029 = vmatpush1.msra.mxu0 0.0
        %3030 = vmatprep.subr.mxu0 0.0
        %3031 = vmatpush1.msra.mxu0 0.0
        %3032 = vmatprep.subr.mxu0 0.0
        %3033 = vmatpush1.msra.mxu0 0.0
        %3034 = vmatprep.mubr.f32.mxu0 0.0
        %3035 = vmatmul.mubr.f32.gmra.mrb[0].mxu0 %v2842
        %v3036 = vpop.f32.mrb[0].mxu0
        %v3037 = vadd.f32 %v2932, %v3036
        %v3038 = vpop.f32.mrb[0].mxu0
        %3039 = vmatprep.mubr.f32.mxu0 0.0
        %3040 = vmatmul.mubr.f32.gmra.mrb[0].mxu0 %v2845
        %v3041 = vpop.f32.mrb[0].mxu0
        %v3042 = vadd.f32 %v2937, %v3041
        %v3043 = vpop.f32.mrb[0].mxu0
        %3044 = vmatprep.mubr.f32.mxu0 0.0
        %3045 = vmatmul.mubr.f32.gmra.mrb[0].mxu0 %v2848
        %v3046 = vpop.f32.mrb[0].mxu0
        %v3047 = vadd.f32 %v2942, %v3046
        %v3048 = vpop.f32.mrb[0].mxu0
        %3049 = vmatprep.mubr.f32.mxu0 0.0
        %3050 = vmatmul.mubr.f32.gmra.mrb[0].mxu0 %v2851
        %v3051 = vpop.f32.mrb[0].mxu0
        %v3052 = vadd.f32 %v2947, %v3051
        %v3053 = vpop.f32.mrb[0].mxu0
        %3054 = vmatprep.mubr.f32.mxu0 0.0
        %3055 = vmatmul.mubr.f32.gmra.mrb[0].mxu0 %v2854
        %v3056 = vpop.f32.mrb[0].mxu0
        %v3057 = vadd.f32 %v2952, %v3056
        %v3058 = vpop.f32.mrb[0].mxu0
        %3059 = vmatprep.mubr.f32.mxu0 0.0
        %3060 = vmatmul.mubr.f32.gmra.mrb[0].mxu0 %v2857
        %v3061 = vpop.f32.mrb[0].mxu0
        %v3062 = vadd.f32 %v2957, %v3061
        %v3063 = vpop.f32.mrb[0].mxu0
        %3064 = vmatprep.mubr.f32.mxu0 0.0
        %3065 = vmatmul.mubr.f32.gmra.mrb[0].mxu0 %v2860
        %v3066 = vpop.f32.mrb[0].mxu0
        %v3067 = vadd.f32 %v2962, %v3066
        %v3068 = vpop.f32.mrb[0].mxu0
        %3069 = vmatprep.mubr.f32.mxu0 0.0
        %3070 = vmatmul.mubr.f32.gmra.mrb[0].mxu0 %v2863
        %v3071 = vpop.f32.mrb[0].mxu0
        %v3072 = vadd.f32 %v2967, %v3071
        %v3073 = vpop.f32.mrb[0].mxu0
        %3074 = vdwg.mxu0
        %v3075 = vmax.f32 %v3037, 0.0
        %v3076 = vmax.f32 %v3042, 0.0
        %v3077 = vmax.f32 %v3047, 0.0
        %v3078 = vmax.f32 %v3052, 0.0
        %v3079 = vmax.f32 %v3057, 0.0
        %v3080 = vmax.f32 %v3062, 0.0
        %v3081 = vmax.f32 %v3067, 0.0
        %v3082 = vmax.f32 %v3072, 0.0
        %v3091 = vcombine.high %v3075, %v3075
        %v3093 = vunpack.c.l.s4 1983009808
        %v3094 = vunpack.c.0.s8 %v3093
        %v3095 = vlaneseq
        %v3096 = vshrl.u32 %v3095, 7
        %v3097 = vsub.s32 %v3094, %v3096
        %v3098 = vrot.slane %v3075, %v3097
        %v3100 = vunpack.c.l.s4 1983009808
        %v3101 = vunpack.c.0.s8 %v3100
        %v3102 = vlaneseq
        %v3103 = vshrl.u32 %v3102, 7
        %v3104 = vsub.s32 %v3101, %v3103
        %v3105 = vrot.slane %v3091, %v3104
        %v3106 = vcombine.high %v3098, %v3098
        %v3107 = vcombine.high %v3105, %v3105
        %v3108 = vcombine.high %v3076, %v3076
        %v3110 = vunpack.c.l.s4 1983009808
        %v3111 = vunpack.c.0.s8 %v3110
        %v3112 = vlaneseq
        %v3113 = vshrl.u32 %v3112, 7
        %v3114 = vsub.s32 %v3111, %v3113
        %v3115 = vrot.slane %v3076, %v3114
        %v3117 = vunpack.c.l.s4 1983009808
        %v3118 = vunpack.c.0.s8 %v3117
        %v3119 = vlaneseq
        %v3120 = vshrl.u32 %v3119, 7
        %v3121 = vsub.s32 %v3118, %v3120
        %v3122 = vrot.slane %v3108, %v3121
        %v3123 = vcombine.high %v3115, %v3115
        %v3124 = vcombine.high %v3122, %v3122
        %v3125 = vcombine.high %v3077, %v3077
        %v3127 = vunpack.c.l.s4 1983009808
        %v3128 = vunpack.c.0.s8 %v3127
        %v3129 = vlaneseq
        %v3130 = vshrl.u32 %v3129, 7
        %v3131 = vsub.s32 %v3128, %v3130
        %v3132 = vrot.slane %v3077, %v3131
        %v3134 = vunpack.c.l.s4 1983009808
        %v3135 = vunpack.c.0.s8 %v3134
        %v3136 = vlaneseq
        %v3137 = vshrl.u32 %v3136, 7
        %v3138 = vsub.s32 %v3135, %v3137
        %v3139 = vrot.slane %v3125, %v3138
        %v3140 = vcombine.high %v3132, %v3132
        %v3141 = vcombine.high %v3139, %v3139
        %v3142 = vcombine.high %v3078, %v3078
        %v3144 = vunpack.c.l.s4 1983009808
        %v3145 = vunpack.c.0.s8 %v3144
        %v3146 = vlaneseq
        %v3147 = vshrl.u32 %v3146, 7
        %v3148 = vsub.s32 %v3145, %v3147
        %v3149 = vrot.slane %v3078, %v3148
        %v3151 = vunpack.c.l.s4 1983009808
        %v3152 = vunpack.c.0.s8 %v3151
        %v3153 = vlaneseq
        %v3154 = vshrl.u32 %v3153, 7
        %v3155 = vsub.s32 %v3152, %v3154
        %v3156 = vrot.slane %v3142, %v3155
        %v3157 = vcombine.high %v3149, %v3149
        %v3158 = vcombine.high %v3156, %v3156
        %v3159 = vcombine.high %v3079, %v3079
        %v3161 = vunpack.c.l.s4 1983009808
        %v3162 = vunpack.c.0.s8 %v3161
        %v3163 = vlaneseq
        %v3164 = vshrl.u32 %v3163, 7
        %v3165 = vsub.s32 %v3162, %v3164
        %v3166 = vrot.slane %v3079, %v3165
        %v3168 = vunpack.c.l.s4 1983009808
        %v3169 = vunpack.c.0.s8 %v3168
        %v3170 = vlaneseq
        %v3171 = vshrl.u32 %v3170, 7
        %v3172 = vsub.s32 %v3169, %v3171
        %v3173 = vrot.slane %v3159, %v3172
        %v3174 = vcombine.high %v3166, %v3166
        %v3175 = vcombine.high %v3173, %v3173
        %v3176 = vcombine.high %v3080, %v3080
        %v3178 = vunpack.c.l.s4 1983009808
        %v3179 = vunpack.c.0.s8 %v3178
        %v3180 = vlaneseq
        %v3181 = vshrl.u32 %v3180, 7
        %v3182 = vsub.s32 %v3179, %v3181
        %v3183 = vrot.slane %v3080, %v3182
        %v3185 = vunpack.c.l.s4 1983009808
        %v3186 = vunpack.c.0.s8 %v3185
        %v3187 = vlaneseq
        %v3188 = vshrl.u32 %v3187, 7
        %v3189 = vsub.s32 %v3186, %v3188
        %v3190 = vrot.slane %v3176, %v3189
        %v3191 = vcombine.high %v3183, %v3183
        %v3192 = vcombine.high %v3190, %v3190
        %v3193 = vcombine.high %v3081, %v3081
        %v3195 = vunpack.c.l.s4 1983009808
        %v3196 = vunpack.c.0.s8 %v3195
        %v3197 = vlaneseq
        %v3198 = vshrl.u32 %v3197, 7
        %v3199 = vsub.s32 %v3196, %v3198
        %v3200 = vrot.slane %v3081, %v3199
        %v3202 = vunpack.c.l.s4 1983009808
        %v3203 = vunpack.c.0.s8 %v3202
        %v3204 = vlaneseq
        %v3205 = vshrl.u32 %v3204, 7
        %v3206 = vsub.s32 %v3203, %v3205
        %v3207 = vrot.slane %v3193, %v3206
        %v3208 = vcombine.high %v3200, %v3200
        %v3209 = vcombine.high %v3207, %v3207
        %v3210 = vcombine.high %v3082, %v3082
        %v3212 = vunpack.c.l.s4 1983009808
        %v3213 = vunpack.c.0.s8 %v3212
        %v3214 = vlaneseq
        %v3215 = vshrl.u32 %v3214, 7
        %v3216 = vsub.s32 %v3213, %v3215
        %v3217 = vrot.slane %v3082, %v3216
        %v3219 = vunpack.c.l.s4 1983009808
        %v3220 = vunpack.c.0.s8 %v3219
        %v3221 = vlaneseq
        %v3222 = vshrl.u32 %v3221, 7
        %v3223 = vsub.s32 %v3220, %v3222
        %v3224 = vrot.slane %v3210, %v3223
        %v3225 = vcombine.high %v3217, %v3217
        %v3226 = vcombine.high %v3224, %v3224
        %v3259 = vrot.slane %v3098, 7
        %v3260 = vrot.slane %v3259, 2
        %v3261 = vrot.slane %v3106, 7
        %v3262 = vrot.slane %v3261, 2
        %v3263 = vrot.slane %v3105, 7
        %v3264 = vrot.slane %v3263, 2
        %v3265 = vrot.slane %v3107, 7
        %v3266 = vrot.slane %v3265, 2
        %v3267 = vrot.slane %v3132, 7
        %v3268 = vrot.slane %v3267, 2
        %v3269 = vrot.slane %v3140, 7
        %v3270 = vrot.slane %v3269, 2
        %v3271 = vrot.slane %v3139, 7
        %v3272 = vrot.slane %v3271, 2
        %v3273 = vrot.slane %v3141, 7
        %v3274 = vrot.slane %v3273, 2
        %v3275 = vrot.slane %v3166, 7
        %v3276 = vrot.slane %v3275, 2
        %v3277 = vrot.slane %v3174, 7
        %v3278 = vrot.slane %v3277, 2
        %v3279 = vrot.slane %v3173, 7
        %v3280 = vrot.slane %v3279, 2
        %v3281 = vrot.slane %v3175, 7
        %v3282 = vrot.slane %v3281, 2
        %v3283 = vrot.slane %v3200, 7
        %v3284 = vrot.slane %v3283, 2
        %v3285 = vrot.slane %v3208, 7
        %v3286 = vrot.slane %v3285, 2
        %v3287 = vrot.slane %v3207, 7
        %v3288 = vrot.slane %v3287, 2
        %v3289 = vrot.slane %v3209, 7
        %v3290 = vrot.slane %v3289, 2
        %v3307 = vmax.f32 %v3098, %v3260
        %v3308 = vmax.f32 %v3106, %v3262
        %v3309 = vmax.f32 %v3105, %v3264
        %v3310 = vmax.f32 %v3107, %v3266
        %v3311 = vmax.f32 %v3132, %v3268
        %v3312 = vmax.f32 %v3140, %v3270
        %v3313 = vmax.f32 %v3139, %v3272
        %v3314 = vmax.f32 %v3141, %v3274
        %v3315 = vmax.f32 %v3166, %v3276
        %v3316 = vmax.f32 %v3174, %v3278
        %v3317 = vmax.f32 %v3173, %v3280
        %v3318 = vmax.f32 %v3175, %v3282
        %v3319 = vmax.f32 %v3200, %v3284
        %v3320 = vmax.f32 %v3208, %v3286
        %v3321 = vmax.f32 %v3207, %v3288
        %v3322 = vmax.f32 %v3209, %v3290
        %v3323 = vrot.slane %v3115, 7
        %v3324 = vrot.slane %v3323, 2
        %v3325 = vrot.slane %v3123, 7
        %v3326 = vrot.slane %v3325, 2
        %v3327 = vrot.slane %v3122, 7
        %v3328 = vrot.slane %v3327, 2
        %v3329 = vrot.slane %v3124, 7
        %v3330 = vrot.slane %v3329, 2
        %v3331 = vrot.slane %v3149, 7
        %v3332 = vrot.slane %v3331, 2
        %v3333 = vrot.slane %v3157, 7
        %v3334 = vrot.slane %v3333, 2
        %v3335 = vrot.slane %v3156, 7
        %v3336 = vrot.slane %v3335, 2
        %v3337 = vrot.slane %v3158, 7
        %v3338 = vrot.slane %v3337, 2
        %v3339 = vrot.slane %v3183, 7
        %v3340 = vrot.slane %v3339, 2
        %v3341 = vrot.slane %v3191, 7
        %v3342 = vrot.slane %v3341, 2
        %v3343 = vrot.slane %v3190, 7
        %v3344 = vrot.slane %v3343, 2
        %v3345 = vrot.slane %v3192, 7
        %v3346 = vrot.slane %v3345, 2
        %v3347 = vrot.slane %v3217, 7
        %v3348 = vrot.slane %v3347, 2
        %v3349 = vrot.slane %v3225, 7
        %v3350 = vrot.slane %v3349, 2
        %v3351 = vrot.slane %v3224, 7
        %v3352 = vrot.slane %v3351, 2
        %v3353 = vrot.slane %v3226, 7
        %v3354 = vrot.slane %v3353, 2
        %v3371 = vmax.f32 %v3115, %v3324
        %v3372 = vmax.f32 %v3123, %v3326
        %v3373 = vmax.f32 %v3122, %v3328
        %v3374 = vmax.f32 %v3124, %v3330
        %v3375 = vmax.f32 %v3149, %v3332
        %v3376 = vmax.f32 %v3157, %v3334
        %v3377 = vmax.f32 %v3156, %v3336
        %v3378 = vmax.f32 %v3158, %v3338
        %v3379 = vmax.f32 %v3183, %v3340
        %v3380 = vmax.f32 %v3191, %v3342
        %v3381 = vmax.f32 %v3190, %v3344
        %v3382 = vmax.f32 %v3192, %v3346
        %v3383 = vmax.f32 %v3217, %v3348
        %v3384 = vmax.f32 %v3225, %v3350
        %v3385 = vmax.f32 %v3224, %v3352
        %v3386 = vmax.f32 %v3226, %v3354
        %v3387 = vmax.f32 %v3307, %v3371
        %v3388 = vmax.f32 %v3308, %v3372
        %v3389 = vmax.f32 %v3309, %v3373
        %v3390 = vmax.f32 %v3310, %v3374
        %v3391 = vmax.f32 %v3311, %v3375
        %v3392 = vmax.f32 %v3312, %v3376
        %v3393 = vmax.f32 %v3313, %v3377
        %v3394 = vmax.f32 %v3314, %v3378
        %v3395 = vmax.f32 %v3315, %v3379
        %v3396 = vmax.f32 %v3316, %v3380
        %v3397 = vmax.f32 %v3317, %v3381
        %v3398 = vmax.f32 %v3318, %v3382
        %v3399 = vmax.f32 %v3319, %v3383
        %v3400 = vmax.f32 %v3320, %v3384
        %v3401 = vmax.f32 %v3321, %v3385
        %v3402 = vmax.f32 %v3322, %v3386
        %v3403 = vlaneseq
        %vm3404 = vcmp.ge.s32.totalorder %v3403, 0
        %vm3405 = vcmp.lt.s32.totalorder %v3403, 64
        %vm3406 = vmand %vm3404, %vm3405
        %3407 = vst.msk [vmem:[#allocation4] sm:$0x1] %vm3406, %v3387
        %v3410 = vunpack.c.l.s4 1966171168
        %v3411 = vunpack.c.0.s8 %v3410
        %v3412 = vlaneseq
        %v3413 = vshrl.u32 %v3412, 7
        %v3414 = vsub.s32 %v3411, %v3413
        %v3415 = vrot.slane %v3388, %v3414
        %3416 = vrot.lane.b32.xlu0 %v3415, 64
        %v3417 = vpop.permute.xlu0 %3416
        %vm3419 = vcmp.ge.s32.totalorder %v3403, 64
        %vm3420 = vcmp.lt.s32.totalorder %v3403, 128
        %vm3421 = vmand %vm3419, %vm3420
        %3422 = vst.msk [vmem:[#allocation4] sm:$0x1] %vm3421, %v3417
        %3423 = vst.msk [vmem:[#allocation4 + $0x1] sm:$0x1] %vm3406, %v3389
        %v3426 = vunpack.c.l.s4 1966171168
        %v3427 = vunpack.c.0.s8 %v3426
        %v3428 = vlaneseq
        %v3429 = vshrl.u32 %v3428, 7
        %v3430 = vsub.s32 %v3427, %v3429
        %v3431 = vrot.slane %v3390, %v3430
        %3432 = vrot.lane.b32.xlu0 %v3431, 64
        %v3433 = vpop.permute.xlu0 %3432
        %3435 = vst.msk [vmem:[#allocation4 + $0x1] sm:$0x1] %vm3421, %v3433
        %3436 = vst.msk [vmem:[#allocation4 + $0x2] sm:$0x1] %vm3406, %v3391
        %v3439 = vunpack.c.l.s4 1966171168
        %v3440 = vunpack.c.0.s8 %v3439
        %v3441 = vlaneseq
        %v3442 = vshrl.u32 %v3441, 7
        %v3443 = vsub.s32 %v3440, %v3442
        %v3444 = vrot.slane %v3392, %v3443
        %3445 = vrot.lane.b32.xlu0 %v3444, 64
        %v3446 = vpop.permute.xlu0 %3445
        %3448 = vst.msk [vmem:[#allocation4 + $0x2] sm:$0x1] %vm3421, %v3446
        %3449 = vst.msk [vmem:[#allocation4 + $0x3] sm:$0x1] %vm3406, %v3393
        %v3452 = vunpack.c.l.s4 1966171168
        %v3453 = vunpack.c.0.s8 %v3452
        %v3454 = vlaneseq
        %v3455 = vshrl.u32 %v3454, 7
        %v3456 = vsub.s32 %v3453, %v3455
        %v3457 = vrot.slane %v3394, %v3456
        %3458 = vrot.lane.b32.xlu0 %v3457, 64
        %v3459 = vpop.permute.xlu0 %3458
        %3461 = vst.msk [vmem:[#allocation4 + $0x3] sm:$0x1] %vm3421, %v3459
        %3462 = vst.msk [vmem:[#allocation4 + $0x4] sm:$0x1] %vm3406, %v3395
        %v3465 = vunpack.c.l.s4 1966171168
        %v3466 = vunpack.c.0.s8 %v3465
        %v3467 = vlaneseq
        %v3468 = vshrl.u32 %v3467, 7
        %v3469 = vsub.s32 %v3466, %v3468
        %v3470 = vrot.slane %v3396, %v3469
        %3471 = vrot.lane.b32.xlu0 %v3470, 64
        %v3472 = vpop.permute.xlu0 %3471
        %3474 = vst.msk [vmem:[#allocation4 + $0x4] sm:$0x1] %vm3421, %v3472
        %3475 = vst.msk [vmem:[#allocation4 + $0x5] sm:$0x1] %vm3406, %v3397
        %v3478 = vunpack.c.l.s4 1966171168
        %v3479 = vunpack.c.0.s8 %v3478
        %v3480 = vlaneseq
        %v3481 = vshrl.u32 %v3480, 7
        %v3482 = vsub.s32 %v3479, %v3481
        %v3483 = vrot.slane %v3398, %v3482
        %3484 = vrot.lane.b32.xlu0 %v3483, 64
        %v3485 = vpop.permute.xlu0 %3484
        %3487 = vst.msk [vmem:[#allocation4 + $0x5] sm:$0x1] %vm3421, %v3485
        %3488 = vst.msk [vmem:[#allocation4 + $0x6] sm:$0x1] %vm3406, %v3399
        %v3491 = vunpack.c.l.s4 1966171168
        %v3492 = vunpack.c.0.s8 %v3491
        %v3493 = vlaneseq
        %v3494 = vshrl.u32 %v3493, 7
        %v3495 = vsub.s32 %v3492, %v3494
        %v3496 = vrot.slane %v3400, %v3495
        %3497 = vrot.lane.b32.xlu0 %v3496, 64
        %v3498 = vpop.permute.xlu0 %3497
        %3500 = vst.msk [vmem:[#allocation4 + $0x6] sm:$0x1] %vm3421, %v3498
        %3501 = vst.msk [vmem:[#allocation4 + $0x7] sm:$0x1] %vm3406, %v3401
        %v3504 = vunpack.c.l.s4 1966171168
        %v3505 = vunpack.c.0.s8 %v3504
        %v3506 = vlaneseq
        %v3507 = vshrl.u32 %v3506, 7
        %v3508 = vsub.s32 %v3505, %v3507
        %v3509 = vrot.slane %v3402, %v3508
        %3510 = vrot.lane.b32.xlu0 %v3509, 64
        %v3511 = vpop.permute.xlu0 %3510
        %3513 = vst.msk [vmem:[#allocation4 + $0x7] sm:$0x1] %vm3421, %v3511
        %v3514 = vld [vmem:[#allocation4] sm:$0xff]
        %v3515 = vld [vmem:[%s5] sm:$0xff]
        %v3516 = vld [vmem:[%s5 + $0x8] sm:$0xff]
        %v3517 = vld [vmem:[%s5 + $0x10] sm:$0xff]
        %v3518 = vld [vmem:[%s5 + $0x18] sm:$0xff]
        %v3519 = vld [vmem:[%s5 + $0x20] sm:$0xff]
        %v3520 = vld [vmem:[%s5 + $0x28] sm:$0xff]
        %v3521 = vld [vmem:[%s5 + $0x30] sm:$0xff]
        %v3522 = vld [vmem:[%s5 + $0x38] sm:$0xff]
        %v3523 = vld [vmem:[%s5 + $0x40] sm:$0xff]
        %v3524 = vld [vmem:[%s5 + $0x48] sm:$0xff]
        %v3525 = vld [vmem:[%s5 + $0x50] sm:$0xff]
        %v3526 = vld [vmem:[%s5 + $0x58] sm:$0xff]
        %v3527 = vld [vmem:[%s5 + $0x60] sm:$0xff]
        %v3528 = vld [vmem:[%s5 + $0x68] sm:$0xff]
        %v3529 = vld [vmem:[%s5 + $0x70] sm:$0xff]
        %v3530 = vld [vmem:[%s5 + $0x78] sm:$0xff]
        %v3531 = vld [vmem:[%s5 + $0x80] sm:$0xff]
        %v3532 = vld [vmem:[%s5 + $0x88] sm:$0xff]
        %v3533 = vld [vmem:[%s5 + $0x90] sm:$0xff]
        %v3534 = vld [vmem:[%s5 + $0x98] sm:$0xff]
        %v3535 = vld [vmem:[%s5 + $0xa0] sm:$0xff]
        %v3536 = vld [vmem:[%s5 + $0xa8] sm:$0xff]
        %v3537 = vld [vmem:[%s5 + $0xb0] sm:$0xff]
        %v3538 = vld [vmem:[%s5 + $0xb8] sm:$0xff]
        %v3539 = vld [vmem:[%s5 + $0xc0] sm:$0xff]
        %v3540 = vld [vmem:[%s5 + $0xc8] sm:$0xff]
        %v3541 = vld [vmem:[%s5 + $0xd0] sm:$0xff]
        %v3542 = vld [vmem:[%s5 + $0xd8] sm:$0xff]
        %v3543 = vld [vmem:[%s5 + $0xe0] sm:$0xff]
        %v3544 = vld [vmem:[%s5 + $0xe8] sm:$0xff]
        %v3545 = vld [vmem:[%s5 + $0xf0] sm:$0xff]
        %v3546 = vld [vmem:[%s5 + $0xf8] sm:$0xff]
        %v3547 = vld [vmem:[%s5 + $0x100] sm:$0xff]
        %v3548 = vld [vmem:[%s5 + $0x108] sm:$0xff]
        %v3549 = vld [vmem:[%s5 + $0x110] sm:$0xff]
        %v3550 = vld [vmem:[%s5 + $0x118] sm:$0xff]
        %v3551 = vld [vmem:[%s5 + $0x120] sm:$0xff]
        %v3552 = vld [vmem:[%s5 + $0x128] sm:$0xff]
        %v3553 = vld [vmem:[%s5 + $0x130] sm:$0xff]
        %v3554 = vld [vmem:[%s5 + $0x138] sm:$0xff]
        %v3555 = vld [vmem:[%s5 + $0x140] sm:$0xff]
        %v3556 = vld [vmem:[%s5 + $0x148] sm:$0xff]
        %v3557 = vld [vmem:[%s5 + $0x150] sm:$0xff]
        %v3558 = vld [vmem:[%s5 + $0x158] sm:$0xff]
        %v3559 = vld [vmem:[%s5 + $0x160] sm:$0xff]
        %v3560 = vld [vmem:[%s5 + $0x168] sm:$0xff]
        %v3561 = vld [vmem:[%s5 + $0x170] sm:$0xff]
        %v3562 = vld [vmem:[%s5 + $0x178] sm:$0xff]
        %v3563 = vld [vmem:[%s5 + $0x180] sm:$0xff]
        %v3564 = vld [vmem:[%s5 + $0x188] sm:$0xff]
        %v3565 = vld [vmem:[%s5 + $0x190] sm:$0xff]
        %v3566 = vld [vmem:[%s5 + $0x198] sm:$0xff]
        %v3567 = vld [vmem:[%s5 + $0x1a0] sm:$0xff]
        %v3568 = vld [vmem:[%s5 + $0x1a8] sm:$0xff]
        %v3569 = vld [vmem:[%s5 + $0x1b0] sm:$0xff]
        %v3570 = vld [vmem:[%s5 + $0x1b8] sm:$0xff]
        %v3571 = vld [vmem:[%s5 + $0x1c0] sm:$0xff]
        %v3572 = vld [vmem:[%s5 + $0x1c8] sm:$0xff]
        %v3573 = vld [vmem:[%s5 + $0x1d0] sm:$0xff]
        %v3574 = vld [vmem:[%s5 + $0x1d8] sm:$0xff]
        %v3575 = vld [vmem:[%s5 + $0x1e0] sm:$0xff]
        %v3576 = vld [vmem:[%s5 + $0x1e8] sm:$0xff]
        %v3577 = vld [vmem:[%s5 + $0x1f0] sm:$0xff]
        %v3578 = vld [vmem:[%s5 + $0x1f8] sm:$0xff]
        %v3579 = vld [vmem:[%s5 + $0x200] sm:$0xff]
        %v3580 = vld [vmem:[%s5 + $0x208] sm:$0xff]
        %v3581 = vld [vmem:[%s5 + $0x210] sm:$0xff]
        %v3582 = vld [vmem:[%s5 + $0x218] sm:$0xff]
        %v3583 = vld [vmem:[%s5 + $0x220] sm:$0xff]
        %v3584 = vld [vmem:[%s5 + $0x228] sm:$0xff]
        %v3585 = vld [vmem:[%s5 + $0x230] sm:$0xff]
        %v3586 = vld [vmem:[%s5 + $0x238] sm:$0xff]
        %v3587 = vld [vmem:[%s5 + $0x240] sm:$0xff]
        %v3588 = vld [vmem:[%s5 + $0x248] sm:$0xff]
        %v3589 = vld [vmem:[%s5 + $0x250] sm:$0xff]
        %v3590 = vld [vmem:[%s5 + $0x258] sm:$0xff]
        %v3591 = vld [vmem:[%s5 + $0x260] sm:$0xff]
        %v3592 = vld [vmem:[%s5 + $0x268] sm:$0xff]
        %v3593 = vld [vmem:[%s5 + $0x270] sm:$0xff]
        %v3594 = vld [vmem:[%s5 + $0x278] sm:$0xff]
        %v3595 = vld [vmem:[%s5 + $0x280] sm:$0xff]
        %v3596 = vld [vmem:[%s5 + $0x288] sm:$0xff]
        %v3597 = vld [vmem:[%s5 + $0x290] sm:$0xff]
        %v3598 = vld [vmem:[%s5 + $0x298] sm:$0xff]
        %v3599 = vld [vmem:[%s5 + $0x2a0] sm:$0xff]
        %v3600 = vld [vmem:[%s5 + $0x2a8] sm:$0xff]
        %v3601 = vld [vmem:[%s5 + $0x2b0] sm:$0xff]
        %v3602 = vld [vmem:[%s5 + $0x2b8] sm:$0xff]
        %v3603 = vld [vmem:[%s5 + $0x2c0] sm:$0xff]
        %v3604 = vld [vmem:[%s5 + $0x2c8] sm:$0xff]
        %v3605 = vld [vmem:[%s5 + $0x2d0] sm:$0xff]
        %v3606 = vld [vmem:[%s5 + $0x2d8] sm:$0xff]
        %v3607 = vld [vmem:[%s5 + $0x2e0] sm:$0xff]
        %v3608 = vld [vmem:[%s5 + $0x2e8] sm:$0xff]
        %v3609 = vld [vmem:[%s5 + $0x2f0] sm:$0xff]
        %v3610 = vld [vmem:[%s5 + $0x2f8] sm:$0xff]
        %v3611 = vld [vmem:[%s5 + $0x300] sm:$0xff]
        %v3612 = vld [vmem:[%s5 + $0x308] sm:$0xff]
        %v3613 = vld [vmem:[%s5 + $0x310] sm:$0xff]
        %v3614 = vld [vmem:[%s5 + $0x318] sm:$0xff]
        %v3615 = vld [vmem:[%s5 + $0x320] sm:$0xff]
        %v3616 = vld [vmem:[%s5 + $0x328] sm:$0xff]
        %v3617 = vld [vmem:[%s5 + $0x330] sm:$0xff]
        %v3618 = vld [vmem:[%s5 + $0x338] sm:$0xff]
        %v3619 = vld [vmem:[%s5 + $0x340] sm:$0xff]
        %v3620 = vld [vmem:[%s5 + $0x348] sm:$0xff]
        %v3621 = vld [vmem:[%s5 + $0x350] sm:$0xff]
        %v3622 = vld [vmem:[%s5 + $0x358] sm:$0xff]
        %v3623 = vld [vmem:[%s5 + $0x360] sm:$0xff]
        %v3624 = vld [vmem:[%s5 + $0x368] sm:$0xff]
        %v3625 = vld [vmem:[%s5 + $0x370] sm:$0xff]
        %v3626 = vld [vmem:[%s5 + $0x378] sm:$0xff]
        %v3627 = vld [vmem:[%s5 + $0x380] sm:$0xff]
        %v3628 = vld [vmem:[%s5 + $0x388] sm:$0xff]
        %v3629 = vld [vmem:[%s5 + $0x390] sm:$0xff]
        %v3630 = vld [vmem:[%s5 + $0x398] sm:$0xff]
        %v3631 = vld [vmem:[%s5 + $0x3a0] sm:$0xff]
        %v3632 = vld [vmem:[%s5 + $0x3a8] sm:$0xff]
        %v3633 = vld [vmem:[%s5 + $0x3b0] sm:$0xff]
        %v3634 = vld [vmem:[%s5 + $0x3b8] sm:$0xff]
        %v3635 = vld [vmem:[%s5 + $0x3c0] sm:$0xff]
        %v3636 = vld [vmem:[%s5 + $0x3c8] sm:$0xff]
        %v3637 = vld [vmem:[%s5 + $0x3d0] sm:$0xff]
        %v3638 = vld [vmem:[%s5 + $0x3d8] sm:$0xff]
        %v3639 = vld [vmem:[%s5 + $0x3e0] sm:$0xff]
        %v3640 = vld [vmem:[%s5 + $0x3e8] sm:$0xff]
        %v3641 = vld [vmem:[%s5 + $0x3f0] sm:$0xff]
        %v3642 = vld [vmem:[%s5 + $0x3f8] sm:$0xff]
        %v3643 = vld [vmem:[%s6] sm:$0x1]
        %v3645 = vlaneseq
        %v3646 = vshrl.u32 %v3645, 7
        %v3647 = vsub.s32 0, %v3646
        %v3648 = vrot.slane %v3514, %v3647
        %v3649 = vlaneseq
        %v3650 = vshrl.u32 %v3649, 7
        %v3651 = vsub.s32 1, %v3650
        %v3652 = vrot.slane %v3514, %v3651
        %v3653 = vlaneseq
        %v3654 = vshrl.u32 %v3653, 7
        %v3655 = vsub.s32 2, %v3654
        %v3656 = vrot.slane %v3514, %v3655
        %v3657 = vlaneseq
        %v3658 = vshrl.u32 %v3657, 7
        %v3659 = vsub.s32 3, %v3658
        %v3660 = vrot.slane %v3514, %v3659
        %v3661 = vlaneseq
        %v3662 = vshrl.u32 %v3661, 7
        %v3663 = vsub.s32 4, %v3662
        %v3664 = vrot.slane %v3514, %v3663
        %v3665 = vlaneseq
        %v3666 = vshrl.u32 %v3665, 7
        %v3667 = vsub.s32 5, %v3666
        %v3668 = vrot.slane %v3514, %v3667
        %v3669 = vlaneseq
        %v3670 = vshrl.u32 %v3669, 7
        %v3671 = vsub.s32 6, %v3670
        %v3672 = vrot.slane %v3514, %v3671
        %v3673 = vlaneseq
        %v3674 = vshrl.u32 %v3673, 7
        %v3675 = vsub.s32 7, %v3674
        %v3676 = vrot.slane %v3514, %v3675
        %3685 = vmatprep.subr.mxu0 0.0
        %3686 = vmatpush1.msra.mxu0 %v3515
        %3687 = vmatprep.subr.mxu0 0.0
        %3688 = vmatpush1.msra.mxu0 %v3516
        %3689 = vmatprep.subr.mxu0 0.0
        %3690 = vmatpush1.msra.mxu0 %v3517
        %3691 = vmatprep.subr.mxu0 0.0
        %3692 = vmatpush1.msra.mxu0 %v3518
        %3693 = vmatprep.subr.mxu0 0.0
        %3694 = vmatpush1.msra.mxu0 %v3519
        %3695 = vmatprep.subr.mxu0 0.0
        %3696 = vmatpush1.msra.mxu0 %v3520
        %3697 = vmatprep.subr.mxu0 0.0
        %3698 = vmatpush1.msra.mxu0 %v3521
        %3699 = vmatprep.subr.mxu0 0.0
        %3700 = vmatpush1.msra.mxu0 %v3522
        %3701 = vmatprep.subr.mxu0 0.0
        %3702 = vmatpush1.msra.mxu0 %v3523
        %3703 = vmatprep.subr.mxu0 0.0
        %3704 = vmatpush1.msra.mxu0 %v3524
        %3705 = vmatprep.subr.mxu0 0.0
        %3706 = vmatpush1.msra.mxu0 %v3525
        %3707 = vmatprep.subr.mxu0 0.0
        %3708 = vmatpush1.msra.mxu0 %v3526
        %3709 = vmatprep.subr.mxu0 0.0
        %3710 = vmatpush1.msra.mxu0 %v3527
        %3711 = vmatprep.subr.mxu0 0.0
        %3712 = vmatpush1.msra.mxu0 %v3528
        %3713 = vmatprep.subr.mxu0 0.0
        %3714 = vmatpush1.msra.mxu0 %v3529
        %3715 = vmatprep.subr.mxu0 0.0
        %3716 = vmatpush1.msra.mxu0 %v3530
        %3717 = vmatprep.subr.mxu0 0.0
        %3718 = vmatpush1.msra.mxu0 %v3531
        %3719 = vmatprep.subr.mxu0 0.0
        %3720 = vmatpush1.msra.mxu0 %v3532
        %3721 = vmatprep.subr.mxu0 0.0
        %3722 = vmatpush1.msra.mxu0 %v3533
        %3723 = vmatprep.subr.mxu0 0.0
        %3724 = vmatpush1.msra.mxu0 %v3534
        %3725 = vmatprep.subr.mxu0 0.0
        %3726 = vmatpush1.msra.mxu0 %v3535
        %3727 = vmatprep.subr.mxu0 0.0
        %3728 = vmatpush1.msra.mxu0 %v3536
        %3729 = vmatprep.subr.mxu0 0.0
        %3730 = vmatpush1.msra.mxu0 %v3537
        %3731 = vmatprep.subr.mxu0 0.0
        %3732 = vmatpush1.msra.mxu0 %v3538
        %3733 = vmatprep.subr.mxu0 0.0
        %3734 = vmatpush1.msra.mxu0 %v3539
        %3735 = vmatprep.subr.mxu0 0.0
        %3736 = vmatpush1.msra.mxu0 %v3540
        %3737 = vmatprep.subr.mxu0 0.0
        %3738 = vmatpush1.msra.mxu0 %v3541
        %3739 = vmatprep.subr.mxu0 0.0
        %3740 = vmatpush1.msra.mxu0 %v3542
        %3741 = vmatprep.subr.mxu0 0.0
        %3742 = vmatpush1.msra.mxu0 %v3543
        %3743 = vmatprep.subr.mxu0 0.0
        %3744 = vmatpush1.msra.mxu0 %v3544
        %3745 = vmatprep.subr.mxu0 0.0
        %3746 = vmatpush1.msra.mxu0 %v3545
        %3747 = vmatprep.subr.mxu0 0.0
        %3748 = vmatpush1.msra.mxu0 %v3546
        %3749 = vmatprep.mubr.f32.mxu0 %v3652
        %3750 = vmatmul.mubr.f32.gmra.mrb[0].mxu0 %v3648
        %v3751 = vpop.f32.mrb[0].mxu0
        %v3752 = vadd.f32 %v3643, %v3751
        %v3753 = vpop.f32.mrb[0].mxu0
        %3754 = vdwg.mxu0
        %3755 = vmatprep.subr.mxu0 0.0
        %3756 = vmatpush1.msra.mxu0 %v3547
        %3757 = vmatprep.subr.mxu0 0.0
        %3758 = vmatpush1.msra.mxu0 %v3548
        %3759 = vmatprep.subr.mxu0 0.0
        %3760 = vmatpush1.msra.mxu0 %v3549
        %3761 = vmatprep.subr.mxu0 0.0
        %3762 = vmatpush1.msra.mxu0 %v3550
        %3763 = vmatprep.subr.mxu0 0.0
        %3764 = vmatpush1.msra.mxu0 %v3551
        %3765 = vmatprep.subr.mxu0 0.0
        %3766 = vmatpush1.msra.mxu0 %v3552
        %3767 = vmatprep.subr.mxu0 0.0
        %3768 = vmatpush1.msra.mxu0 %v3553
        %3769 = vmatprep.subr.mxu0 0.0
        %3770 = vmatpush1.msra.mxu0 %v3554
        %3771 = vmatprep.subr.mxu0 0.0
        %3772 = vmatpush1.msra.mxu0 %v3555
        %3773 = vmatprep.subr.mxu0 0.0
        %3774 = vmatpush1.msra.mxu0 %v3556
        %3775 = vmatprep.subr.mxu0 0.0
        %3776 = vmatpush1.msra.mxu0 %v3557
        %3777 = vmatprep.subr.mxu0 0.0
        %3778 = vmatpush1.msra.mxu0 %v3558
        %3779 = vmatprep.subr.mxu0 0.0
        %3780 = vmatpush1.msra.mxu0 %v3559
        %3781 = vmatprep.subr.mxu0 0.0
        %3782 = vmatpush1.msra.mxu0 %v3560
        %3783 = vmatprep.subr.mxu0 0.0
        %3784 = vmatpush1.msra.mxu0 %v3561
        %3785 = vmatprep.subr.mxu0 0.0
        %3786 = vmatpush1.msra.mxu0 %v3562
        %3787 = vmatprep.subr.mxu0 0.0
        %3788 = vmatpush1.msra.mxu0 %v3563
        %3789 = vmatprep.subr.mxu0 0.0
        %3790 = vmatpush1.msra.mxu0 %v3564
        %3791 = vmatprep.subr.mxu0 0.0
        %3792 = vmatpush1.msra.mxu0 %v3565
        %3793 = vmatprep.subr.mxu0 0.0
        %3794 = vmatpush1.msra.mxu0 %v3566
        %3795 = vmatprep.subr.mxu0 0.0
        %3796 = vmatpush1.msra.mxu0 %v3567
        %3797 = vmatprep.subr.mxu0 0.0
        %3798 = vmatpush1.msra.mxu0 %v3568
        %3799 = vmatprep.subr.mxu0 0.0
        %3800 = vmatpush1.msra.mxu0 %v3569
        %3801 = vmatprep.subr.mxu0 0.0
        %3802 = vmatpush1.msra.mxu0 %v3570
        %3803 = vmatprep.subr.mxu0 0.0
        %3804 = vmatpush1.msra.mxu0 %v3571
        %3805 = vmatprep.subr.mxu0 0.0
        %3806 = vmatpush1.msra.mxu0 %v3572
        %3807 = vmatprep.subr.mxu0 0.0
        %3808 = vmatpush1.msra.mxu0 %v3573
        %3809 = vmatprep.subr.mxu0 0.0
        %3810 = vmatpush1.msra.mxu0 %v3574
        %3811 = vmatprep.subr.mxu0 0.0
        %3812 = vmatpush1.msra.mxu0 %v3575
        %3813 = vmatprep.subr.mxu0 0.0
        %3814 = vmatpush1.msra.mxu0 %v3576
        %3815 = vmatprep.subr.mxu0 0.0
        %3816 = vmatpush1.msra.mxu0 %v3577
        %3817 = vmatprep.subr.mxu0 0.0
        %3818 = vmatpush1.msra.mxu0 %v3578
        %3819 = vmatprep.mubr.f32.mxu0 %v3660
        %3820 = vmatmul.mubr.f32.gmra.mrb[0].mxu0 %v3656
        %v3821 = vpop.f32.mrb[0].mxu0
        %v3822 = vadd.f32 %v3752, %v3821
        %v3823 = vpop.f32.mrb[0].mxu0
        %3824 = vdwg.mxu0
        %3825 = vmatprep.subr.mxu0 0.0
        %3826 = vmatpush1.msra.mxu0 %v3579
        %3827 = vmatprep.subr.mxu0 0.0
        %3828 = vmatpush1.msra.mxu0 %v3580
        %3829 = vmatprep.subr.mxu0 0.0
        %3830 = vmatpush1.msra.mxu0 %v3581
        %3831 = vmatprep.subr.mxu0 0.0
        %3832 = vmatpush1.msra.mxu0 %v3582
        %3833 = vmatprep.subr.mxu0 0.0
        %3834 = vmatpush1.msra.mxu0 %v3583
        %3835 = vmatprep.subr.mxu0 0.0
        %3836 = vmatpush1.msra.mxu0 %v3584
        %3837 = vmatprep.subr.mxu0 0.0
        %3838 = vmatpush1.msra.mxu0 %v3585
        %3839 = vmatprep.subr.mxu0 0.0
        %3840 = vmatpush1.msra.mxu0 %v3586
        %3841 = vmatprep.subr.mxu0 0.0
        %3842 = vmatpush1.msra.mxu0 %v3587
        %3843 = vmatprep.subr.mxu0 0.0
        %3844 = vmatpush1.msra.mxu0 %v3588
        %3845 = vmatprep.subr.mxu0 0.0
        %3846 = vmatpush1.msra.mxu0 %v3589
        %3847 = vmatprep.subr.mxu0 0.0
        %3848 = vmatpush1.msra.mxu0 %v3590
        %3849 = vmatprep.subr.mxu0 0.0
        %3850 = vmatpush1.msra.mxu0 %v3591
        %3851 = vmatprep.subr.mxu0 0.0
        %3852 = vmatpush1.msra.mxu0 %v3592
        %3853 = vmatprep.subr.mxu0 0.0
        %3854 = vmatpush1.msra.mxu0 %v3593
        %3855 = vmatprep.subr.mxu0 0.0
        %3856 = vmatpush1.msra.mxu0 %v3594
        %3857 = vmatprep.subr.mxu0 0.0
        %3858 = vmatpush1.msra.mxu0 %v3595
        %3859 = vmatprep.subr.mxu0 0.0
        %3860 = vmatpush1.msra.mxu0 %v3596
        %3861 = vmatprep.subr.mxu0 0.0
        %3862 = vmatpush1.msra.mxu0 %v3597
        %3863 = vmatprep.subr.mxu0 0.0
        %3864 = vmatpush1.msra.mxu0 %v3598
        %3865 = vmatprep.subr.mxu0 0.0
        %3866 = vmatpush1.msra.mxu0 %v3599
        %3867 = vmatprep.subr.mxu0 0.0
        %3868 = vmatpush1.msra.mxu0 %v3600
        %3869 = vmatprep.subr.mxu0 0.0
        %3870 = vmatpush1.msra.mxu0 %v3601
        %3871 = vmatprep.subr.mxu0 0.0
        %3872 = vmatpush1.msra.mxu0 %v3602
        %3873 = vmatprep.subr.mxu0 0.0
        %3874 = vmatpush1.msra.mxu0 %v3603
        %3875 = vmatprep.subr.mxu0 0.0
        %3876 = vmatpush1.msra.mxu0 %v3604
        %3877 = vmatprep.subr.mxu0 0.0
        %3878 = vmatpush1.msra.mxu0 %v3605
        %3879 = vmatprep.subr.mxu0 0.0
        %3880 = vmatpush1.msra.mxu0 %v3606
        %3881 = vmatprep.subr.mxu0 0.0
        %3882 = vmatpush1.msra.mxu0 %v3607
        %3883 = vmatprep.subr.mxu0 0.0
        %3884 = vmatpush1.msra.mxu0 %v3608
        %3885 = vmatprep.subr.mxu0 0.0
        %3886 = vmatpush1.msra.mxu0 %v3609
        %3887 = vmatprep.subr.mxu0 0.0
        %3888 = vmatpush1.msra.mxu0 %v3610
        %3889 = vmatprep.mubr.f32.mxu0 %v3668
        %3890 = vmatmul.mubr.f32.gmra.mrb[0].mxu0 %v3664
        %v3891 = vpop.f32.mrb[0].mxu0
        %v3892 = vadd.f32 %v3822, %v3891
        %v3893 = vpop.f32.mrb[0].mxu0
        %3894 = vdwg.mxu0
        %3895 = vmatprep.subr.mxu0 0.0
        %3896 = vmatpush1.msra.mxu0 %v3611
        %3897 = vmatprep.subr.mxu0 0.0
        %3898 = vmatpush1.msra.mxu0 %v3612
        %3899 = vmatprep.subr.mxu0 0.0
        %3900 = vmatpush1.msra.mxu0 %v3613
        %3901 = vmatprep.subr.mxu0 0.0
        %3902 = vmatpush1.msra.mxu0 %v3614
        %3903 = vmatprep.subr.mxu0 0.0
        %3904 = vmatpush1.msra.mxu0 %v3615
        %3905 = vmatprep.subr.mxu0 0.0
        %3906 = vmatpush1.msra.mxu0 %v3616
        %3907 = vmatprep.subr.mxu0 0.0
        %3908 = vmatpush1.msra.mxu0 %v3617
        %3909 = vmatprep.subr.mxu0 0.0
        %3910 = vmatpush1.msra.mxu0 %v3618
        %3911 = vmatprep.subr.mxu0 0.0
        %3912 = vmatpush1.msra.mxu0 %v3619
        %3913 = vmatprep.subr.mxu0 0.0
        %3914 = vmatpush1.msra.mxu0 %v3620
        %3915 = vmatprep.subr.mxu0 0.0
        %3916 = vmatpush1.msra.mxu0 %v3621
        %3917 = vmatprep.subr.mxu0 0.0
        %3918 = vmatpush1.msra.mxu0 %v3622
        %3919 = vmatprep.subr.mxu0 0.0
        %3920 = vmatpush1.msra.mxu0 %v3623
        %3921 = vmatprep.subr.mxu0 0.0
        %3922 = vmatpush1.msra.mxu0 %v3624
        %3923 = vmatprep.subr.mxu0 0.0
        %3924 = vmatpush1.msra.mxu0 %v3625
        %3925 = vmatprep.subr.mxu0 0.0
        %3926 = vmatpush1.msra.mxu0 %v3626
        %3927 = vmatprep.subr.mxu0 0.0
        %3928 = vmatpush1.msra.mxu0 %v3627
        %3929 = vmatprep.subr.mxu0 0.0
        %3930 = vmatpush1.msra.mxu0 %v3628
        %3931 = vmatprep.subr.mxu0 0.0
        %3932 = vmatpush1.msra.mxu0 %v3629
        %3933 = vmatprep.subr.mxu0 0.0
        %3934 = vmatpush1.msra.mxu0 %v3630
        %3935 = vmatprep.subr.mxu0 0.0
        %3936 = vmatpush1.msra.mxu0 %v3631
        %3937 = vmatprep.subr.mxu0 0.0
        %3938 = vmatpush1.msra.mxu0 %v3632
        %3939 = vmatprep.subr.mxu0 0.0
        %3940 = vmatpush1.msra.mxu0 %v3633
        %3941 = vmatprep.subr.mxu0 0.0
        %3942 = vmatpush1.msra.mxu0 %v3634
        %3943 = vmatprep.subr.mxu0 0.0
        %3944 = vmatpush1.msra.mxu0 %v3635
        %3945 = vmatprep.subr.mxu0 0.0
        %3946 = vmatpush1.msra.mxu0 %v3636
        %3947 = vmatprep.subr.mxu0 0.0
        %3948 = vmatpush1.msra.mxu0 %v3637
        %3949 = vmatprep.subr.mxu0 0.0
        %3950 = vmatpush1.msra.mxu0 %v3638
        %3951 = vmatprep.subr.mxu0 0.0
        %3952 = vmatpush1.msra.mxu0 %v3639
        %3953 = vmatprep.subr.mxu0 0.0
        %3954 = vmatpush1.msra.mxu0 %v3640
        %3955 = vmatprep.subr.mxu0 0.0
        %3956 = vmatpush1.msra.mxu0 %v3641
        %3957 = vmatprep.subr.mxu0 0.0
        %3958 = vmatpush1.msra.mxu0 %v3642
        %3959 = vmatprep.mubr.f32.mxu0 %v3676
        %3960 = vmatmul.mubr.f32.gmra.mrb[0].mxu0 %v3672
        %v3961 = vpop.f32.mrb[0].mxu0
        %v3962 = vadd.f32 %v3892, %v3961
        %v3963 = vpop.f32.mrb[0].mxu0
        %3964 = vdwg.mxu0
        %v3965 = vmax.f32 %v3962, 0.0
        %v3966 = vld [vmem:[%s7] sm:$0xff]
        %v3967 = vld [vmem:[%s7 + $0x8] sm:$0xff]
        %v3968 = vld [vmem:[%s7 + $0x10] sm:$0xff]
        %v3969 = vld [vmem:[%s7 + $0x18] sm:$0xff]
        %v3970 = vld [vmem:[%s7 + $0x20] sm:$0xff]
        %v3971 = vld [vmem:[%s7 + $0x28] sm:$0xff]
        %v3972 = vld [vmem:[%s7 + $0x30] sm:$0xff]
        %v3973 = vld [vmem:[%s7 + $0x38] sm:$0xff]
        %v3974 = vld [vmem:[%s7 + $0x40] sm:$0xff]
        %v3975 = vld [vmem:[%s7 + $0x48] sm:$0xff]
        %v3976 = vld [vmem:[%s7 + $0x50] sm:$0xff]
        %v3977 = vld [vmem:[%s7 + $0x58] sm:$0xff]
        %v3978 = vld [vmem:[%s7 + $0x60] sm:$0xff]
        %v3979 = vld [vmem:[%s7 + $0x68] sm:$0xff]
        %v3980 = vld [vmem:[%s7 + $0x70] sm:$0xff]
        %v3981 = vld [vmem:[%s7 + $0x78] sm:$0xff]
        %v3982 = vld [vmem:[%s8] sm:$0x1]
        %3983 = vmatprep.subr.mxu0 0.0
        %3984 = vmatpush1.msra.mxu0 %v3966
        %3985 = vmatprep.subr.mxu0 0.0
        %3986 = vmatpush1.msra.mxu0 %v3967
        %3987 = vmatprep.subr.mxu0 0.0
        %3988 = vmatpush1.msra.mxu0 %v3968
        %3989 = vmatprep.subr.mxu0 0.0
        %3990 = vmatpush1.msra.mxu0 %v3969
        %3991 = vmatprep.subr.mxu0 0.0
        %3992 = vmatpush1.msra.mxu0 %v3970
        %3993 = vmatprep.subr.mxu0 0.0
        %3994 = vmatpush1.msra.mxu0 %v3971
        %3995 = vmatprep.subr.mxu0 0.0
        %3996 = vmatpush1.msra.mxu0 %v3972
        %3997 = vmatprep.subr.mxu0 0.0
        %3998 = vmatpush1.msra.mxu0 %v3973
        %3999 = vmatprep.subr.mxu0 0.0
        %4000 = vmatpush1.msra.mxu0 %v3974
        %4001 = vmatprep.subr.mxu0 0.0
        %4002 = vmatpush1.msra.mxu0 %v3975
        %4003 = vmatprep.subr.mxu0 0.0
        %4004 = vmatpush1.msra.mxu0 %v3976
        %4005 = vmatprep.subr.mxu0 0.0
        %4006 = vmatpush1.msra.mxu0 %v3977
        %4007 = vmatprep.subr.mxu0 0.0
        %4008 = vmatpush1.msra.mxu0 %v3978
        %4009 = vmatprep.subr.mxu0 0.0
        %4010 = vmatpush1.msra.mxu0 %v3979
        %4011 = vmatprep.subr.mxu0 0.0
        %4012 = vmatpush1.msra.mxu0 %v3980
        %4013 = vmatprep.subr.mxu0 0.0
        %4014 = vmatpush1.msra.mxu0 %v3981
        %4015 = vmatprep.subr.mxu0 0.0
        %4016 = vmatpush1.msra.mxu0 0.0
        %4017 = vmatprep.subr.mxu0 0.0
        %4018 = vmatpush1.msra.mxu0 0.0
        %4019 = vmatprep.subr.mxu0 0.0
        %4020 = vmatpush1.msra.mxu0 0.0
        %4021 = vmatprep.subr.mxu0 0.0
        %4022 = vmatpush1.msra.mxu0 0.0
        %4023 = vmatprep.subr.mxu0 0.0
        %4024 = vmatpush1.msra.mxu0 0.0
        %4025 = vmatprep.subr.mxu0 0.0
        %4026 = vmatpush1.msra.mxu0 0.0
        %4027 = vmatprep.subr.mxu0 0.0
        %4028 = vmatpush1.msra.mxu0 0.0
        %4029 = vmatprep.subr.mxu0 0.0
        %4030 = vmatpush1.msra.mxu0 0.0
        %4031 = vmatprep.subr.mxu0 0.0
        %4032 = vmatpush1.msra.mxu0 0.0
        %4033 = vmatprep.subr.mxu0 0.0
        %4034 = vmatpush1.msra.mxu0 0.0
        %4035 = vmatprep.subr.mxu0 0.0
        %4036 = vmatpush1.msra.mxu0 0.0
        %4037 = vmatprep.subr.mxu0 0.0
        %4038 = vmatpush1.msra.mxu0 0.0
        %4039 = vmatprep.subr.mxu0 0.0
        %4040 = vmatpush1.msra.mxu0 0.0
        %4041 = vmatprep.subr.mxu0 0.0
        %4042 = vmatpush1.msra.mxu0 0.0
        %4043 = vmatprep.subr.mxu0 0.0
        %4044 = vmatpush1.msra.mxu0 0.0
        %4045 = vmatprep.subr.mxu0 0.0
        %4046 = vmatpush1.msra.mxu0 0.0
        %4047 = vmatprep.mubr.f32.mxu0 0.0
        %4048 = vmatmul.mubr.f32.gmra.mrb[0].mxu0 %v3965
        %v4049 = vpop.f32.mrb[0].mxu0
        %v4050 = vadd.f32 %v3982, %v4049
        %v4051 = vpop.f32.mrb[0].mxu0
        %4052 = vdwg.mxu0
        %4053 = vst [vmem:[%s324] sm:$0x1] %v4050
        %s4054 = sand.u32 %s225, 1
        %s4055 = scalar_lea.sflag [#allocation6], %s4054
        %s4056 = sand.u32 %s225, 1
        %s4057 = scalar_lea.vmem [#allocation5], %s4056
        // Predicated region
        $region57: #{naive_cnn_forward.1} parent=55 // pred_check
          %p4058 = pneg %p235
        $region58: #{naive_cnn_forward.1} parent=55 // pred_check_branch
          %4060 = sbr.rel (%p4058) target = $region60
        $region59: #{naive_cnn_forward.1} parent=55 // pred_region
          %s4062 = ssub.s32 16, 16
          %4063 = vsyncadd %s4055, %s4062
          %s4064 = smul.addr %s23, 16
          %s4065 = scalar_lea.hbm %s9, %s4064
          %s4067 = sshll.u32 %s4057, 4
          %s4068 = int_to_ptr.vmem [resolvable:$true] %s4067
          %4070 = dma.vmem_to_hbm [thread:$0]  %s4068, 16, %s4065, %s4055
        $region60: #{naive_cnn_forward.1} parent=55 // pred_fallthru
          _
      $region56: #{naive_cnn_forward.1} parent=5 // pred_fallthru
        _
      %p4071 = scmp.le.s32.totalorder 2, %s18
      // Predicated region
      $region61: #{naive_cnn_forward.1} parent=5 // pred_check
        %p4072 = pneg %p4071
      $region62: #{naive_cnn_forward.1} parent=5 // pred_check_branch
        %4074 = sbr.rel (%p4072) target = $region64
      $region63: #{naive_cnn_forward.1} parent=5 // pred_region
        %s4075 = ssub.s32 %s18, 2
        // Predicated region
        $region65: #{naive_cnn_forward.1} parent=63 // pred_check
          %p4076 = pneg %p241
        $region66: #{naive_cnn_forward.1} parent=63 // pred_check_branch
          %4078 = sbr.rel (%p4076) target = $region68
        $region67: #{naive_cnn_forward.1} parent=63 // pred_region
          %s4079 = sand.u32 %s226, 1
          %s4080 = scalar_lea.sflag [#allocation6], %s4079
          %s4081 = sand.u32 %s226, 1
          %s4082 = scalar_lea.vmem [#allocation5], %s4081
          %4083 = dma.done %s4080, 16
        $region68: #{naive_cnn_forward.1} parent=63 // pred_fallthru
          _
      $region64: #{naive_cnn_forward.1} parent=5 // pred_fallthru
        _
    $region6: #{naive_cnn_forward.1} parent=1 // loop_footer
      %s22 = sadd.s32 1, %s18
    $region7: #{naive_cnn_forward.1} parent=1 // loop_footer_branch
      %17 = sbr.rel target = $region3
    $region8: #{naive_cnn_forward.1} parent=1 // loop_exit
      _
    %4084 = vsyncpa [#allocation6], 1
    %s4085 = scalar_lea.sflag [#allocation6], 1
    %4086 = vsyncpa %s4085, 1

</llo_original>
